<compile_context>
chip_gen: v6e
topology: v6e:2x2x1
jax: 0.10.0
libtpu: 0.0.40
codegen_flags: <defaults>
</compile_context>

<pallas_src>
import functools
import math

import jax
import jax.numpy as jnp
from jax import lax
from jax.experimental import pallas as pl
from jax.experimental.pallas import tpu as pltpu


# ----------------------------- fused kernel --------------------------------

def _encoder_layer_kernel(x_ref, wqkv_ref, bqkv_ref, wo_ref, bo_ref,
                          w1_ref, b1_ref, w2_ref, b2_ref, o_ref,
                          qkv_scr, attn_scr, *, n_heads):
    """Fused Encoder layer for one batch element (one grid step).

    x_ref:    (S, D)   bf16   rows of this batch element
    wqkv_ref: (D, 3D)  bf16   fused Q|K|V weight (1/sqrt(Dh) folded into Q)
    bqkv_ref: (1, 3D)  f32
    wo_ref:   (D, D)   bf16
    bo_ref:   (1, D)   f32
    w1_ref:   (D, F)   bf16,  b1_ref: (1, F) f32
    w2_ref:   (F, D)   bf16,  b2_ref: (1, D) f32
    o_ref:    (S, D)   f32
    qkv_scr:  (S, 3D)  bf16 VMEM scratch (head-aligned slices, Dh = 128)
    attn_scr: (S, D)   bf16 VMEM scratch (per-head attention outputs)
    """
    S, D = x_ref.shape
    H = n_heads
    Dh = D // H

    x = x_ref[...]                                                  # (S, D) bf16

    # ---- fused Q|K|V projection: one MXU matmul, bias added once ----------
    qkv = jnp.dot(x, wqkv_ref[...], preferred_element_type=jnp.float32)
    qkv_scr[...] = (qkv + bqkv_ref[...]).astype(jnp.bfloat16)       # (S, 3D)

    # ---- multi-head attention; all slices are static & lane-aligned -------
    # TODO(synk): at real H use lax.fori_loop(..., unroll=True) with a grid/
    #             flash kv tiling instead of materializing full (S, S) scores.
    for h in range(H):
        lo = h * Dh
        q_h = qkv_scr[:, lo:lo + Dh]                                # (S, Dh) bf16
        k_h = qkv_scr[:, D + lo:D + lo + Dh]
        v_h = qkv_scr[:, 2 * D + lo:2 * D + lo + Dh]

        # scores (scale already folded into Wq/bq)
        s = lax.dot_general(q_h, k_h, (((1,), (1,)), ((), ())),
                            preferred_element_type=jnp.float32)     # (S, S) f32
        m = jnp.max(s, axis=-1, keepdims=True)
        p = jnp.exp(s - m)                                          # f32 (EUP)
        p = p * pl.reciprocal(jnp.sum(p, axis=-1, keepdims=True), approx=True)

        attn_scr[:, lo:lo + Dh] = jnp.dot(
            p.astype(jnp.bfloat16), v_h,
            preferred_element_type=jnp.float32).astype(jnp.bfloat16)

    # ---- head merge folded into ONE (S, D) @ (D, D) out-proj + residual ----
    y1 = (jnp.dot(attn_scr[...], wo_ref[...], preferred_element_type=jnp.float32)
          + bo_ref[...] + x.astype(jnp.float32))                    # (S, D) f32

    # ---- MLP + residual -----------------------------------------------------
    hid = jnp.dot(y1.astype(jnp.bfloat16), w1_ref[...],
                  preferred_element_type=jnp.float32) + b1_ref[...]
    hid = jnp.maximum(hid, 0.0)                                     # relu (VPU)
    y2 = jnp.dot(hid.astype(jnp.bfloat16), w2_ref[...],
                 preferred_element_type=jnp.float32) + b2_ref[...] + y1

    o_ref[...] = y2.astype(o_ref.dtype)


def encoder_forward(prepped, x, *, n_heads):
    """x: (B, S, D) f32 -> (B, S, D) f32.  One pallas_call, grid over batch."""
    B, S, D = x.shape
    F = prepped["w1"].shape[1]
    # Fold batch into the row/sublane axis; stream activations as bf16.
    x_flat = x.reshape(B * S, D).astype(jnp.bfloat16)

    kernel = functools.partial(_encoder_layer_kernel, n_heads=n_heads)
    out = pl.pallas_call(
        kernel,
        out_shape=jax.ShapeDtypeStruct((B * S, D), jnp.float32),
        grid_spec=pltpu.PrefetchScalarGridSpec(
            num_scalar_prefetch=0,
            grid=(B,),
            in_specs=[
                pl.BlockSpec((S, D), lambda b: (b, 0)),            # x rows of batch b
                pl.BlockSpec((D, 3 * D), lambda b: (0, 0)),        # wqkv (resident)
                pl.BlockSpec((1, 3 * D), lambda b: (0, 0)),        # bqkv
                pl.BlockSpec((D, D), lambda b: (0, 0)),            # wo
                pl.BlockSpec((1, D), lambda b: (0, 0)),            # bo
                pl.BlockSpec((D, F), lambda b: (0, 0)),            # w1
                pl.BlockSpec((1, F), lambda b: (0, 0)),            # b1
                pl.BlockSpec((F, D), lambda b: (0, 0)),            # w2
                pl.BlockSpec((1, D), lambda b: (0, 0)),            # b2
            ],
            out_specs=pl.BlockSpec((S, D), lambda b: (b, 0)),      # lane-dense slab
            scratch_shapes=[
                pltpu.VMEM((S, 3 * D), jnp.bfloat16),              # qkv scratch
                pltpu.VMEM((S, D), jnp.bfloat16),                  # attn-out scratch
            ],
        ),
        compiler_params=pltpu.CompilerParams(
            dimension_semantics=("parallel",),                     # megacore on v7x
            vmem_limit_bytes=32 * 1024 * 1024,
        ),
    )(x_flat, prepped["wqkv"], prepped["bqkv"], prepped["wo"], prepped["bo"],
      prepped["w1"], prepped["b1"], prepped["w2"], prepped["b2"])
    return out.reshape(B, S, D)


# ----------------------------- parameters -----------------------------------

def init_params(key, d_model, d_ff):
    ks = jax.random.split(key, 6)
    init = lambda k, s: 0.02 * jax.random.normal(k, s, dtype=jnp.float32)
    z = lambda n: jnp.zeros((n,), jnp.float32)
    return dict(
        wq=init(ks[0], (d_model, d_model)), bq=z(d_model),
        wk=init(ks[1], (d_model, d_model)), bk=z(d_model),
        wv=init(ks[2], (d_model, d_model)), bv=z(d_model),
        wo=init(ks[3], (d_model, d_model)), bo=z(d_model),
        w1=init(ks[4], (d_model, d_ff)),    b1=z(d_ff),
        w2=init(ks[5], (d_ff, d_model)),    b2=z(d_model),
    )


def prepare_params(p, n_heads):
    """Fold 1/sqrt(Dh) into Q, fuse Q|K|V, cast weights to bf16."""
    d = p["wq"].shape[0]
    dh = d // n_heads
    scale = 1.0 / math.sqrt(dh)
    wqkv = jnp.concatenate([p["wq"] * scale, p["wk"], p["wv"]], axis=1)
    bqkv = jnp.concatenate([p["bq"] * scale, p["bk"], p["bv"]])
    return dict(
        wqkv=wqkv.astype(jnp.bfloat16),
        bqkv=bqkv.reshape(1, 3 * d).astype(jnp.float32),
        wo=p["wo"].astype(jnp.bfloat16),
        bo=p["bo"].reshape(1, d),
        w1=p["w1"].astype(jnp.bfloat16),
        b1=p["b1"].reshape(1, -1),
        w2=p["w2"].astype(jnp.bfloat16),
        b2=p["b2"].reshape(1, d),
    )


# ----------------------------- pure-JAX reference ----------------------------

def encoder_reference(p, x, n_heads):
    B, S, D = x.shape
    dh = D // n_heads
    q = (x @ p["wq"] + p["bq"]) / math.sqrt(dh)
    k = x @ p["wk"] + p["bk"]
    v = x @ p["wv"] + p["bv"]
    split = lambda t: t.reshape(B, S, n_heads, dh).transpose(0, 2, 1, 3)
    q, k, v = split(q), split(k), split(v)
    s = jnp.einsum("bhqd,bhkd->bhqk", q, k)
    a = jax.nn.softmax(s, axis=-1)
    o = jnp.einsum("bhqk,bhkd->bhqd", a, v)
    o = o.transpose(0, 2, 1, 3).reshape(B, S, D)
    y1 = o @ p["wo"] + p["bo"] + x
    h = jax.nn.relu(y1 @ p["w1"] + p["b1"])
    return h @ p["w2"] + p["b2"] + y1


# ----------------------------- main ------------------------------------------

if __name__ == "__main__":
    # TODO(synk): len_mem > 0 path (self.mem concat/assign) and dropout are
    # inactive with the module's len_mem == 0 inference config; not implemented.
    # Shapes chosen small but lane/sublane aligned: D, F multiples of 128,
    # Dh = 128 so per-head slices are whole lane-aligned vreg columns.
    B, S, D, H, F = 2, 128, 256, 2, 512

    key = jax.random.PRNGKey(0)
    kx, kp = jax.random.split(key)
    x = jax.random.normal(kx, (B, S, D), dtype=jnp.float32)

    raw = init_params(kp, D, F)
    prepped = prepare_params(raw, H)

    fwd = jax.jit(functools.partial(encoder_forward, n_heads=H))
    y = jax.block_until_ready(fwd(prepped, x))

    assert y.shape == (B, S, D)
    assert y.dtype == jnp.float32
    assert bool(jnp.all(jnp.isfinite(y)))

    # loose tolerance: kernel streams bf16 activations, bf16 MXU inputs,
    # and uses the approximate EUP reciprocal in the softmax
    y_ref = encoder_reference(raw, x, H)
    max_err = float(jnp.max(jnp.abs(y - y_ref)))
    assert max_err < 5e-2, max_err

    print("KERNEL_OK")
</pallas_src>

<mosaic_0001>
module attributes {stable_mosaic.version = 11 : i64} {
  func.func @_encoder_layer_kernel(%arg0: i32, %arg1: memref<128x256xbf16, #tpu.memory_space<vmem>>, %arg2: memref<256x768xbf16, #tpu.memory_space<vmem>>, %arg3: memref<1x768xf32, #tpu.memory_space<vmem>>, %arg4: memref<256x256xbf16, #tpu.memory_space<vmem>>, %arg5: memref<1x256xf32, #tpu.memory_space<vmem>>, %arg6: memref<256x512xbf16, #tpu.memory_space<vmem>>, %arg7: memref<1x512xf32, #tpu.memory_space<vmem>>, %arg8: memref<512x256xbf16, #tpu.memory_space<vmem>>, %arg9: memref<1x256xf32, #tpu.memory_space<vmem>>, %arg10: memref<128x256xf32, #tpu.memory_space<vmem>>, %arg11: memref<128x768xbf16, #tpu.memory_space<vmem>>, %arg12: memref<128x256xbf16, #tpu.memory_space<vmem>>) attributes {dimension_semantics = [#tpu.dimension_semantics<parallel>], iteration_bounds = array<i64: 2>, scalar_prefetch = 0 : i64, scratch_operands = 2 : i64, tpu.core_type = #tpu.core_type<tc>, window_params = [{transform_indices = @transform_0, window_bounds = array<i64: 128, 256>}, {pipeline_mode = #tpu.pipeline_mode<synchronous>, transform_indices = @transform_1, window_bounds = array<i64: 256, 768>}, {pipeline_mode = #tpu.pipeline_mode<synchronous>, transform_indices = @transform_2, window_bounds = array<i64: 1, 768>}, {pipeline_mode = #tpu.pipeline_mode<synchronous>, transform_indices = @transform_3, window_bounds = array<i64: 256, 256>}, {pipeline_mode = #tpu.pipeline_mode<synchronous>, transform_indices = @transform_4, window_bounds = array<i64: 1, 256>}, {pipeline_mode = #tpu.pipeline_mode<synchronous>, transform_indices = @transform_5, window_bounds = array<i64: 256, 512>}, {pipeline_mode = #tpu.pipeline_mode<synchronous>, transform_indices = @transform_6, window_bounds = array<i64: 1, 512>}, {pipeline_mode = #tpu.pipeline_mode<synchronous>, transform_indices = @transform_7, window_bounds = array<i64: 512, 256>}, {pipeline_mode = #tpu.pipeline_mode<synchronous>, transform_indices = @transform_8, window_bounds = array<i64: 1, 256>}, {transform_indices = @transform_9, window_bounds = array<i64: 128, 256>}]} {
    %c0 = arith.constant 0 : index
    %c0_0 = arith.constant 0 : index
    %0 = vector.load %arg1[%c0, %c0_0] : memref<128x256xbf16, #tpu.memory_space<vmem>>, vector<128x256xbf16>
    %c0_1 = arith.constant 0 : index
    %c0_2 = arith.constant 0 : index
    %1 = vector.load %arg2[%c0_1, %c0_2] : memref<256x768xbf16, #tpu.memory_space<vmem>>, vector<256x768xbf16>
    %cst = arith.constant dense<0.000000e+00> : vector<128x768xf32>
    %2 = tpu.matmul %0, %1, %cst {dimension_numbers = #tpu.dot_dimension_numbers<[1], [0], [0], [1], [0, 0, 1, 1], [], []>} : vector<128x256xbf16>, vector<256x768xbf16>, vector<128x768xf32> -> vector<128x768xf32>
    %c0_3 = arith.constant 0 : index
    %c0_4 = arith.constant 0 : index
    %3 = vector.load %arg3[%c0_3, %c0_4] : memref<1x768xf32, #tpu.memory_space<vmem>>, vector<1x768xf32>
    %4 = vector.broadcast %3 : vector<1x768xf32> to vector<128x768xf32>
    %5 = arith.addf %2, %4 : vector<128x768xf32>
    %6 = arith.truncf %5 : vector<128x768xf32> to vector<128x768xbf16>
    %c0_5 = arith.constant 0 : index
    %c0_6 = arith.constant 0 : index
    %7 = vector.load %arg11[%c0_5, %c0_6] : memref<128x768xbf16, #tpu.memory_space<vmem>>, vector<128x768xbf16>
    tpu.vector_store %arg11[%c0_5, %c0_6], %6 {strides = array<i32>} : memref<128x768xbf16, #tpu.memory_space<vmem>>, vector<128x768xbf16>,
    %c0_7 = arith.constant 0 : index
    %c0_8 = arith.constant 0 : index
    %8 = vector.load %arg11[%c0_7, %c0_8] : memref<128x768xbf16, #tpu.memory_space<vmem>>, vector<128x128xbf16>
    %c0_9 = arith.constant 0 : index
    %c256 = arith.constant 256 : index
    %9 = vector.load %arg11[%c0_9, %c256] : memref<128x768xbf16, #tpu.memory_space<vmem>>, vector<128x128xbf16>
    %c0_10 = arith.constant 0 : index
    %c512 = arith.constant 512 : index
    %10 = vector.load %arg11[%c0_10, %c512] : memref<128x768xbf16, #tpu.memory_space<vmem>>, vector<128x128xbf16>
    %cst_11 = arith.constant dense<0.000000e+00> : vector<128x128xf32>
    %11 = tpu.matmul %8, %9, %cst_11 {dimension_numbers = #tpu.dot_dimension_numbers<[1], [1], [0], [0], [0, 0, 1, 0], [], []>} : vector<128x128xbf16>, vector<128x128xbf16>, vector<128x128xf32> -> vector<128x128xf32>
    %cst_12 = arith.constant dense<0xFF800000> : vector<128xf32>
    %12 = vector.multi_reduction <maximumf>, %11, %cst_12 [1] : vector<128x128xf32> to vector<128xf32>
    %13 = vector.shape_cast %12 : vector<128xf32> to vector<128x1xf32>
    %14 = vector.broadcast %13 : vector<128x1xf32> to vector<128x128xf32>
    %15 = arith.subf %11, %14 : vector<128x128xf32>
    %16 = math.exp %15 : vector<128x128xf32>
    %cst_13 = arith.constant dense<0.000000e+00> : vector<128xf32>
    %17 = vector.multi_reduction <add>, %16, %cst_13 [1] : vector<128x128xf32> to vector<128xf32>
    %18 = vector.shape_cast %17 : vector<128xf32> to vector<128x1xf32>
    %19 = tpu.reciprocal %18 {approx = true} : vector<128x1xf32> -> vector<128x1xf32>
    %20 = vector.broadcast %19 : vector<128x1xf32> to vector<128x128xf32>
    %21 = arith.mulf %16, %20 : vector<128x128xf32>
    %22 = arith.truncf %21 : vector<128x128xf32> to vector<128x128xbf16>
    %cst_14 = arith.constant dense<0.000000e+00> : vector<128x128xf32>
    %23 = tpu.matmul %22, %10, %cst_14 {dimension_numbers = #tpu.dot_dimension_numbers<[1], [0], [0], [1], [0, 0, 1, 1], [], []>} : vector<128x128xbf16>, vector<128x128xbf16>, vector<128x128xf32> -> vector<128x128xf32>
    %24 = arith.truncf %23 : vector<128x128xf32> to vector<128x128xbf16>
    %c0_15 = arith.constant 0 : index
    %c0_16 = arith.constant 0 : index
    %25 = vector.load %arg12[%c0_15, %c0_16] : memref<128x256xbf16, #tpu.memory_space<vmem>>, vector<128x128xbf16>
    tpu.vector_store %arg12[%c0_15, %c0_16], %24 {strides = array<i32>} : memref<128x256xbf16, #tpu.memory_space<vmem>>, vector<128x128xbf16>,
    %c0_17 = arith.constant 0 : index
    %c128 = arith.constant 128 : index
    %26 = vector.load %arg11[%c0_17, %c128] : memref<128x768xbf16, #tpu.memory_space<vmem>>, vector<128x128xbf16>
    %c0_18 = arith.constant 0 : index
    %c384 = arith.constant 384 : index
    %27 = vector.load %arg11[%c0_18, %c384] : memref<128x768xbf16, #tpu.memory_space<vmem>>, vector<128x128xbf16>
    %c0_19 = arith.constant 0 : index
    %c640 = arith.constant 640 : index
    %28 = vector.load %arg11[%c0_19, %c640] : memref<128x768xbf16, #tpu.memory_space<vmem>>, vector<128x128xbf16>
    %cst_20 = arith.constant dense<0.000000e+00> : vector<128x128xf32>
    %29 = tpu.matmul %26, %27, %cst_20 {dimension_numbers = #tpu.dot_dimension_numbers<[1], [1], [0], [0], [0, 0, 1, 0], [], []>} : vector<128x128xbf16>, vector<128x128xbf16>, vector<128x128xf32> -> vector<128x128xf32>
    %cst_21 = arith.constant dense<0xFF800000> : vector<128xf32>
    %30 = vector.multi_reduction <maximumf>, %29, %cst_21 [1] : vector<128x128xf32> to vector<128xf32>
    %31 = vector.shape_cast %30 : vector<128xf32> to vector<128x1xf32>
    %32 = vector.broadcast %31 : vector<128x1xf32> to vector<128x128xf32>
    %33 = arith.subf %29, %32 : vector<128x128xf32>
    %34 = math.exp %33 : vector<128x128xf32>
    %cst_22 = arith.constant dense<0.000000e+00> : vector<128xf32>
    %35 = vector.multi_reduction <add>, %34, %cst_22 [1] : vector<128x128xf32> to vector<128xf32>
    %36 = vector.shape_cast %35 : vector<128xf32> to vector<128x1xf32>
    %37 = tpu.reciprocal %36 {approx = true} : vector<128x1xf32> -> vector<128x1xf32>
    %38 = vector.broadcast %37 : vector<128x1xf32> to vector<128x128xf32>
    %39 = arith.mulf %34, %38 : vector<128x128xf32>
    %40 = arith.truncf %39 : vector<128x128xf32> to vector<128x128xbf16>
    %cst_23 = arith.constant dense<0.000000e+00> : vector<128x128xf32>
    %41 = tpu.matmul %40, %28, %cst_23 {dimension_numbers = #tpu.dot_dimension_numbers<[1], [0], [0], [1], [0, 0, 1, 1], [], []>} : vector<128x128xbf16>, vector<128x128xbf16>, vector<128x128xf32> -> vector<128x128xf32>
    %42 = arith.truncf %41 : vector<128x128xf32> to vector<128x128xbf16>
    %c0_24 = arith.constant 0 : index
    %c128_25 = arith.constant 128 : index
    %43 = vector.load %arg12[%c0_24, %c128_25] : memref<128x256xbf16, #tpu.memory_space<vmem>>, vector<128x128xbf16>
    tpu.vector_store %arg12[%c0_24, %c128_25], %42 {strides = array<i32>} : memref<128x256xbf16, #tpu.memory_space<vmem>>, vector<128x128xbf16>,
    %c0_26 = arith.constant 0 : index
    %c0_27 = arith.constant 0 : index
    %44 = vector.load %arg12[%c0_26, %c0_27] : memref<128x256xbf16, #tpu.memory_space<vmem>>, vector<128x256xbf16>
    %c0_28 = arith.constant 0 : index
    %c0_29 = arith.constant 0 : index
    %45 = vector.load %arg4[%c0_28, %c0_29] : memref<256x256xbf16, #tpu.memory_space<vmem>>, vector<256x256xbf16>
    %cst_30 = arith.constant dense<0.000000e+00> : vector<128x256xf32>
    %46 = tpu.matmul %44, %45, %cst_30 {dimension_numbers = #tpu.dot_dimension_numbers<[1], [0], [0], [1], [0, 0, 1, 1], [], []>} : vector<128x256xbf16>, vector<256x256xbf16>, vector<128x256xf32> -> vector<128x256xf32>
    %c0_31 = arith.constant 0 : index
    %c0_32 = arith.constant 0 : index
    %47 = vector.load %arg5[%c0_31, %c0_32] : memref<1x256xf32, #tpu.memory_space<vmem>>, vector<1x256xf32>
    %48 = vector.broadcast %47 : vector<1x256xf32> to vector<128x256xf32>
    %49 = arith.addf %46, %48 : vector<128x256xf32>
    %50 = arith.extf %0 : vector<128x256xbf16> to vector<128x256xf32>
    %51 = arith.addf %49, %50 : vector<128x256xf32>
    %52 = arith.truncf %51 : vector<128x256xf32> to vector<128x256xbf16>
    %c0_33 = arith.constant 0 : index
    %c0_34 = arith.constant 0 : index
    %53 = vector.load %arg6[%c0_33, %c0_34] : memref<256x512xbf16, #tpu.memory_space<vmem>>, vector<256x512xbf16>
    %cst_35 = arith.constant dense<0.000000e+00> : vector<128x512xf32>
    %54 = tpu.matmul %52, %53, %cst_35 {dimension_numbers = #tpu.dot_dimension_numbers<[1], [0], [0], [1], [0, 0, 1, 1], [], []>} : vector<128x256xbf16>, vector<256x512xbf16>, vector<128x512xf32> -> vector<128x512xf32>
    %c0_36 = arith.constant 0 : index
    %c0_37 = arith.constant 0 : index
    %55 = vector.load %arg7[%c0_36, %c0_37] : memref<1x512xf32, #tpu.memory_space<vmem>>, vector<1x512xf32>
    %56 = vector.broadcast %55 : vector<1x512xf32> to vector<128x512xf32>
    %57 = arith.addf %54, %56 : vector<128x512xf32>
    %cst_38 = arith.constant 0.000000e+00 : f32
    %58 = vector.broadcast %cst_38 : f32 to vector<128x512xf32>
    %59 = arith.maximumf %57, %58 : vector<128x512xf32>
    %60 = arith.truncf %59 : vector<128x512xf32> to vector<128x512xbf16>
    %c0_39 = arith.constant 0 : index
    %c0_40 = arith.constant 0 : index
    %61 = vector.load %arg8[%c0_39, %c0_40] : memref<512x256xbf16, #tpu.memory_space<vmem>>, vector<512x256xbf16>
    %cst_41 = arith.constant dense<0.000000e+00> : vector<128x256xf32>
    %62 = tpu.matmul %60, %61, %cst_41 {dimension_numbers = #tpu.dot_dimension_numbers<[1], [0], [0], [1], [0, 0, 1, 1], [], []>} : vector<128x512xbf16>, vector<512x256xbf16>, vector<128x256xf32> -> vector<128x256xf32>
    %c0_42 = arith.constant 0 : index
    %c0_43 = arith.constant 0 : index
    %63 = vector.load %arg9[%c0_42, %c0_43] : memref<1x256xf32, #tpu.memory_space<vmem>>, vector<1x256xf32>
    %64 = vector.broadcast %63 : vector<1x256xf32> to vector<128x256xf32>
    %65 = arith.addf %62, %64 : vector<128x256xf32>
    %66 = arith.addf %65, %51 : vector<128x256xf32>
    %c0_44 = arith.constant 0 : index
    %c0_45 = arith.constant 0 : index
    %67 = vector.load %arg10[%c0_44, %c0_45] : memref<128x256xf32, #tpu.memory_space<vmem>>, vector<128x256xf32>
    tpu.vector_store %arg10[%c0_44, %c0_45], %66 {strides = array<i32>} : memref<128x256xf32, #tpu.memory_space<vmem>>, vector<128x256xf32>,
    return
  }
  func.func @transform_0(%arg0: i32) -> (i32, i32) {
    %c0_i32 = arith.constant 0 : i32
    %c0_i32_0 = arith.constant 0 : i32
    return %arg0, %c0_i32 : i32, i32
  }
  func.func @transform_1(%arg0: i32) -> (i32, i32) {
    %c0_i32 = arith.constant 0 : i32
    %c0_i32_0 = arith.constant 0 : i32
    %c0_i32_1 = arith.constant 0 : i32
    return %c0_i32, %c0_i32_0 : i32, i32
  }
  func.func @transform_2(%arg0: i32) -> (i32, i32) {
    %c0_i32 = arith.constant 0 : i32
    %c0_i32_0 = arith.constant 0 : i32
    %c0_i32_1 = arith.constant 0 : i32
    return %c0_i32, %c0_i32_0 : i32, i32
  }
  func.func @transform_3(%arg0: i32) -> (i32, i32) {
    %c0_i32 = arith.constant 0 : i32
    %c0_i32_0 = arith.constant 0 : i32
    %c0_i32_1 = arith.constant 0 : i32
    return %c0_i32, %c0_i32_0 : i32, i32
  }
  func.func @transform_4(%arg0: i32) -> (i32, i32) {
    %c0_i32 = arith.constant 0 : i32
    %c0_i32_0 = arith.constant 0 : i32
    %c0_i32_1 = arith.constant 0 : i32
    return %c0_i32, %c0_i32_0 : i32, i32
  }
  func.func @transform_5(%arg0: i32) -> (i32, i32) {
    %c0_i32 = arith.constant 0 : i32
    %c0_i32_0 = arith.constant 0 : i32
    %c0_i32_1 = arith.constant 0 : i32
    return %c0_i32, %c0_i32_0 : i32, i32
  }
  func.func @transform_6(%arg0: i32) -> (i32, i32) {
    %c0_i32 = arith.constant 0 : i32
    %c0_i32_0 = arith.constant 0 : i32
    %c0_i32_1 = arith.constant 0 : i32
    return %c0_i32, %c0_i32_0 : i32, i32
  }
  func.func @transform_7(%arg0: i32) -> (i32, i32) {
    %c0_i32 = arith.constant 0 : i32
    %c0_i32_0 = arith.constant 0 : i32
    %c0_i32_1 = arith.constant 0 : i32
    return %c0_i32, %c0_i32_0 : i32, i32
  }
  func.func @transform_8(%arg0: i32) -> (i32, i32) {
    %c0_i32 = arith.constant 0 : i32
    %c0_i32_0 = arith.constant 0 : i32
    %c0_i32_1 = arith.constant 0 : i32
    return %c0_i32, %c0_i32_0 : i32, i32
  }
  func.func @transform_9(%arg0: i32) -> (i32, i32) {
    %c0_i32 = arith.constant 0 : i32
    %c0_i32_0 = arith.constant 0 : i32
    return %arg0, %c0_i32 : i32, i32
  }
}

</mosaic_0001>

<llo_original>
// kernel: encoder_forward.1
$region0: #{encoder_forward.1}
  #allocation0 [shape = 'u32[]', space=smem, size = 0x4, offset = 0x4, fixed_abs, tag = 'smem constant byte address 0x4 - core index']
  #allocation1 [shape = 'u32[144,128]{1,0:T(1,128)}', space=vmem, size = 0x12000, scoped, tag = 'internal scratch']
  #allocation2 [shape = 'bf16[128,768]{1,0:T(8,128)(2,1)}', space=vmem, size = 0x30000, scoped, tag = 'scratch operand']
  #allocation3 [shape = 'bf16[128,256]{1,0:T(8,128)(2,1)}', space=vmem, size = 0x10000, scoped, tag = 'scratch operand']
  %s0 = inlined_call_operand.vmem [shape: bf16[256,256], index: 0, kind: input, shape index: {}]
  %s1 = inlined_call_operand.vmem [shape: bf16[256,768], index: 1, kind: input, shape index: {}]
  %s2 = inlined_call_operand.vmem [shape: f32[1,768], index: 2, kind: input, shape index: {}]
  %s3 = inlined_call_operand.hbm [shape: bf16[256,256], index: 3, kind: input, shape index: {}]
  %s4 = inlined_call_operand.vmem [shape: f32[1,256], index: 4, kind: input, shape index: {}]
  %s5 = inlined_call_operand.hbm [shape: bf16[256,512], index: 5, kind: input, shape index: {}]
  %s6 = inlined_call_operand.vmem [shape: f32[1,512], index: 6, kind: input, shape index: {}]
  %s7 = inlined_call_operand.hbm [shape: bf16[512,256], index: 7, kind: input, shape index: {}]
  %s8 = inlined_call_operand.vmem [shape: f32[1,256], index: 8, kind: input, shape index: {}]
  %s9 = inlined_call_operand.hbm [shape: f32[256,256], index: 9, kind: output, shape index: {}]
  %s10 = sld [smem:[#allocation0]]
  $region81: #{encoder_forward.1} parent=0
    _
  %s12 = ssub.s32 1, %s10
  %s13 = scalar_select 0, %s12, %s10
  $region1: #{encoder_forward.1} parent=0
    #allocation4 [shape = 'u8[131072]{0}', space=vmem, size = 0x20000, scoped, tag = 'input window, operand 3, single buffered']
    #allocation5 [shape = 's32[2]{0}', space=sflag, size = 0x8, scoped, tag = 'scoped memory for encoder_forward.1']
    #allocation6 [shape = 's32[2]{0}', space=sflag, size = 0x8, scoped, tag = 'scoped memory for encoder_forward.1']
    #allocation7 [shape = 'u8[262144]{0}', space=vmem, size = 0x40000, scoped, tag = 'input window, operand 5, single buffered']
    #allocation8 [shape = 's32[1]{0}', space=sflag, size = 0x4, scoped, tag = 'scoped memory for encoder_forward.1']
    #allocation9 [shape = 'u8[262144]{0}', space=vmem, size = 0x40000, scoped, tag = 'input window, operand 7, single buffered']
    #allocation10 [shape = 'u8[262144]{0}', space=vmem, size = 0x40000, scoped, tag = 'output window, operand 0']
    %14 = vsyncpa [#allocation5], 0
    %15 = vsyncpa [#allocation8], 0
    %16 = vsyncpa [#allocation6], 0
    %s17 = scalar_lea.sflag [#allocation6], 1
    %18 = vsyncpa %s17, 0
    loop: start=0, step=1, limit=4
    $region2: #{encoder_forward.1} parent=1 // loop_pre_header
      _
    $region3: #{encoder_forward.1} parent=1 // loop_header
      %s20 = sphi 0, %s24
      %p21 = scmp.ge.s32.totalorder %s20, 4
      %s30 = sphi 0, %s32
      %s33 = sphi 0, %s30
      %s34 = sphi 0, %s33
      %s50 = sphi 0, %s34
      %s54 = sphi 0, %s54
      %s56 = sphi 0, %s54
      %s57 = sphi 0, %s56
      %s71 = sphi 0, %s57
      %s75 = sphi 0, %s75
      %s77 = sphi 0, %s75
      %s78 = sphi 0, %s77
      %s92 = sphi 0, %s78
      %s96 = sphi 0, %s96
      %s98 = sphi 0, %s96
      %s99 = sphi 0, %s98
      %s113 = sphi 0, %s99
      %s117 = sphi 0, %s117
      %s119 = sphi 0, %s117
      %s120 = sphi 0, %s119
      %s134 = sphi 0, %s120
      %s138 = sphi 0, %s138
      %s140 = sphi 0, %s138
      %s141 = sphi 0, %s140
      %s155 = sphi 0, %s141
      %s159 = sphi 0, %s159
      %s161 = sphi 0, %s159
      %s162 = sphi 0, %s161
      %s176 = sphi 0, %s162
      %s180 = sphi 0, %s180
      %s182 = sphi 0, %s180
      %s183 = sphi 0, %s182
      %s197 = sphi 0, %s183
      %s201 = sphi 0, %s201
      %s203 = sphi 0, %s201
      %s204 = sphi 0, %s203
      %s218 = sphi 0, %s204
      %s224 = sphi 0, %s226
      %s227 = sphi 0, %s224
      %s228 = sphi 0, %s227
      %s244 = sphi 0, %s228
    $region4: #{encoder_forward.1} parent=1 // loop_header_branch
      %23 = sbr.rel (%p21) target = $region8
    $region5: #{encoder_forward.1} parent=1 // loop_body
      %s25 = ssub.s32 %s20, 1
      %s26 = ssub.s32 %s20, 2
      %s27 = sadd.s32 %s20, 1
      %s28 = ssub.s32 %s20, %s27
      %p29 = scmp.eq.s32.totalorder %s28, 0
      %s31 = sadd.s32 %s30, 1
      %s32 = scalar_select %p29, %s30, %s31
      %p35 = pneg %p29
      %p36 = scmp.eq.s32.totalorder %s20, 1
      %p37 = por %p35, %p36
      %p38 = scmp.ne.s32.totalorder %s30, %s33
      %p39 = scmp.eq.s32.totalorder %s20, 0
      %p40 = por %p38, %p39
      %p41 = scmp.ne.s32.totalorder %s30, %s33
      %p42 = scmp.eq.s32.totalorder %s25, 1
      %p43 = por %p41, %p42
      %p44 = scmp.ne.s32.totalorder %s33, %s34
      %p45 = scmp.eq.s32.totalorder %s25, 0
      %p46 = por %p44, %p45
      %p47 = scmp.ne.s32.totalorder %s33, %s34
      %p48 = scmp.eq.s32.totalorder %s26, 1
      %p49 = por %p47, %p48
      %p51 = scmp.ne.s32.totalorder %s34, %s50
      %p52 = scmp.eq.s32.totalorder %s26, 0
      %p53 = por %p51, %p52
      %s55 = sadd.s32 %s54, 1
      %p58 = scmp.eq.s32.totalorder %s20, 1
      %p59 = scmp.ne.s32.totalorder %s54, %s56
      %p60 = scmp.eq.s32.totalorder %s20, 0
      %p61 = por %p59, %p60
      %p62 = scmp.ne.s32.totalorder %s54, %s56
      %p63 = scmp.eq.s32.totalorder %s25, 1
      %p64 = por %p62, %p63
      %p65 = scmp.ne.s32.totalorder %s56, %s57
      %p66 = scmp.eq.s32.totalorder %s25, 0
      %p67 = por %p65, %p66
      %p68 = scmp.ne.s32.totalorder %s56, %s57
      %p69 = scmp.eq.s32.totalorder %s26, 1
      %p70 = por %p68, %p69
      %p72 = scmp.ne.s32.totalorder %s57, %s71
      %p73 = scmp.eq.s32.totalorder %s26, 0
      %p74 = por %p72, %p73
      %s76 = sadd.s32 %s75, 1
      %p79 = scmp.eq.s32.totalorder %s20, 1
      %p80 = scmp.ne.s32.totalorder %s75, %s77
      %p81 = scmp.eq.s32.totalorder %s20, 0
      %p82 = por %p80, %p81
      %p83 = scmp.ne.s32.totalorder %s75, %s77
      %p84 = scmp.eq.s32.totalorder %s25, 1
      %p85 = por %p83, %p84
      %p86 = scmp.ne.s32.totalorder %s77, %s78
      %p87 = scmp.eq.s32.totalorder %s25, 0
      %p88 = por %p86, %p87
      %p89 = scmp.ne.s32.totalorder %s77, %s78
      %p90 = scmp.eq.s32.totalorder %s26, 1
      %p91 = por %p89, %p90
      %p93 = scmp.ne.s32.totalorder %s78, %s92
      %p94 = scmp.eq.s32.totalorder %s26, 0
      %p95 = por %p93, %p94
      %s97 = sadd.s32 %s96, 1
      %p100 = scmp.eq.s32.totalorder %s20, 1
      %p101 = scmp.ne.s32.totalorder %s96, %s98
      %p102 = scmp.eq.s32.totalorder %s20, 0
      %p103 = por %p101, %p102
      %p104 = scmp.ne.s32.totalorder %s96, %s98
      %p105 = scmp.eq.s32.totalorder %s25, 1
      %p106 = por %p104, %p105
      %p107 = scmp.ne.s32.totalorder %s98, %s99
      %p108 = scmp.eq.s32.totalorder %s25, 0
      %p109 = por %p107, %p108
      %p110 = scmp.ne.s32.totalorder %s98, %s99
      %p111 = scmp.eq.s32.totalorder %s26, 1
      %p112 = por %p110, %p111
      %p114 = scmp.ne.s32.totalorder %s99, %s113
      %p115 = scmp.eq.s32.totalorder %s26, 0
      %p116 = por %p114, %p115
      %s118 = sadd.s32 %s117, 1
      %p121 = scmp.eq.s32.totalorder %s20, 1
      %p122 = scmp.ne.s32.totalorder %s117, %s119
      %p123 = scmp.eq.s32.totalorder %s20, 0
      %p124 = por %p122, %p123
      %p125 = scmp.ne.s32.totalorder %s117, %s119
      %p126 = scmp.eq.s32.totalorder %s25, 1
      %p127 = por %p125, %p126
      %p128 = scmp.ne.s32.totalorder %s119, %s120
      %p129 = scmp.eq.s32.totalorder %s25, 0
      %p130 = por %p128, %p129
      %p131 = scmp.ne.s32.totalorder %s119, %s120
      %p132 = scmp.eq.s32.totalorder %s26, 1
      %p133 = por %p131, %p132
      %p135 = scmp.ne.s32.totalorder %s120, %s134
      %p136 = scmp.eq.s32.totalorder %s26, 0
      %p137 = por %p135, %p136
      %s139 = sadd.s32 %s138, 1
      %p142 = scmp.eq.s32.totalorder %s20, 1
      %p143 = scmp.ne.s32.totalorder %s138, %s140
      %p144 = scmp.eq.s32.totalorder %s20, 0
      %p145 = por %p143, %p144
      %p146 = scmp.ne.s32.totalorder %s138, %s140
      %p147 = scmp.eq.s32.totalorder %s25, 1
      %p148 = por %p146, %p147
      %p149 = scmp.ne.s32.totalorder %s140, %s141
      %p150 = scmp.eq.s32.totalorder %s25, 0
      %p151 = por %p149, %p150
      %p152 = scmp.ne.s32.totalorder %s140, %s141
      %p153 = scmp.eq.s32.totalorder %s26, 1
      %p154 = por %p152, %p153
      %p156 = scmp.ne.s32.totalorder %s141, %s155
      %p157 = scmp.eq.s32.totalorder %s26, 0
      %p158 = por %p156, %p157
      %s160 = sadd.s32 %s159, 1
      %p163 = scmp.eq.s32.totalorder %s20, 1
      %p164 = scmp.ne.s32.totalorder %s159, %s161
      %p165 = scmp.eq.s32.totalorder %s20, 0
      %p166 = por %p164, %p165
      %p167 = scmp.ne.s32.totalorder %s159, %s161
      %p168 = scmp.eq.s32.totalorder %s25, 1
      %p169 = por %p167, %p168
      %p170 = scmp.ne.s32.totalorder %s161, %s162
      %p171 = scmp.eq.s32.totalorder %s25, 0
      %p172 = por %p170, %p171
      %p173 = scmp.ne.s32.totalorder %s161, %s162
      %p174 = scmp.eq.s32.totalorder %s26, 1
      %p175 = por %p173, %p174
      %p177 = scmp.ne.s32.totalorder %s162, %s176
      %p178 = scmp.eq.s32.totalorder %s26, 0
      %p179 = por %p177, %p178
      %s181 = sadd.s32 %s180, 1
      %p184 = scmp.eq.s32.totalorder %s20, 1
      %p185 = scmp.ne.s32.totalorder %s180, %s182
      %p186 = scmp.eq.s32.totalorder %s20, 0
      %p187 = por %p185, %p186
      %p188 = scmp.ne.s32.totalorder %s180, %s182
      %p189 = scmp.eq.s32.totalorder %s25, 1
      %p190 = por %p188, %p189
      %p191 = scmp.ne.s32.totalorder %s182, %s183
      %p192 = scmp.eq.s32.totalorder %s25, 0
      %p193 = por %p191, %p192
      %p194 = scmp.ne.s32.totalorder %s182, %s183
      %p195 = scmp.eq.s32.totalorder %s26, 1
      %p196 = por %p194, %p195
      %p198 = scmp.ne.s32.totalorder %s183, %s197
      %p199 = scmp.eq.s32.totalorder %s26, 0
      %p200 = por %p198, %p199
      %s202 = sadd.s32 %s201, 1
      %p205 = scmp.eq.s32.totalorder %s20, 1
      %p206 = scmp.ne.s32.totalorder %s201, %s203
      %p207 = scmp.eq.s32.totalorder %s20, 0
      %p208 = por %p206, %p207
      %p209 = scmp.ne.s32.totalorder %s201, %s203
      %p210 = scmp.eq.s32.totalorder %s25, 1
      %p211 = por %p209, %p210
      %p212 = scmp.ne.s32.totalorder %s203, %s204
      %p213 = scmp.eq.s32.totalorder %s25, 0
      %p214 = por %p212, %p213
      %p215 = scmp.ne.s32.totalorder %s203, %s204
      %p216 = scmp.eq.s32.totalorder %s26, 1
      %p217 = por %p215, %p216
      %p219 = scmp.ne.s32.totalorder %s204, %s218
      %p220 = scmp.eq.s32.totalorder %s26, 0
      %p221 = por %p219, %p220
      %s222 = ssub.s32 %s20, %s27
      %p223 = scmp.eq.s32.totalorder %s222, 0
      %s225 = sadd.s32 %s224, 1
      %s226 = scalar_select %p223, %s224, %s225
      %p229 = pneg %p223
      %p230 = scmp.eq.s32.totalorder %s20, 1
      %p231 = por %p229, %p230
      %p232 = scmp.ne.s32.totalorder %s224, %s227
      %p233 = scmp.eq.s32.totalorder %s20, 0
      %p234 = por %p232, %p233
      %p235 = scmp.ne.s32.totalorder %s224, %s227
      %p236 = scmp.eq.s32.totalorder %s25, 1
      %p237 = por %p235, %p236
      %p238 = scmp.ne.s32.totalorder %s227, %s228
      %p239 = scmp.eq.s32.totalorder %s25, 0
      %p240 = por %p238, %p239
      %p241 = scmp.ne.s32.totalorder %s227, %s228
      %p242 = scmp.eq.s32.totalorder %s26, 1
      %p243 = por %p241, %p242
      %p245 = scmp.ne.s32.totalorder %s228, %s244
      %p246 = scmp.eq.s32.totalorder %s26, 0
      %p247 = por %p245, %p246
      %p248 = scmp.le.s32.totalorder 1, %s20
      %p249 = scmp.lt.s32.totalorder %s20, 3
      %p250 = pnand %p248, %p249
      %p251 = pneg %p250
      // Predicated region
      $region9: #{encoder_forward.1} parent=5 // pred_check
        _
      $region10: #{encoder_forward.1} parent=5 // pred_check_branch
        %253 = sbr.rel (%p250) target = $region12
      $region11: #{encoder_forward.1} parent=5 // pred_region
        %s254 = ssub.s32 %s20, 1
        // Predicated region
        $region13: #{encoder_forward.1} parent=11 // pred_check
          %p255 = pneg %p67
        $region14: #{encoder_forward.1} parent=11 // pred_check_branch
          %257 = sbr.rel (%p255) target = $region16
        $region15: #{encoder_forward.1} parent=11 // pred_region
          _
        $region16: #{encoder_forward.1} parent=11 // pred_fallthru
          _
        // Predicated region
        $region17: #{encoder_forward.1} parent=11 // pred_check
          %p258 = pneg %p88
        $region18: #{encoder_forward.1} parent=11 // pred_check_branch
          %260 = sbr.rel (%p258) target = $region20
        $region19: #{encoder_forward.1} parent=11 // pred_region
          _
        $region20: #{encoder_forward.1} parent=11 // pred_fallthru
          _
        // Predicated region
        $region21: #{encoder_forward.1} parent=11 // pred_check
          %p261 = pneg %p109
        $region22: #{encoder_forward.1} parent=11 // pred_check_branch
          %263 = sbr.rel (%p261) target = $region24
        $region23: #{encoder_forward.1} parent=11 // pred_region
          %s265 = ssub.s32 4096, 4096
          %266 = vsyncadd [#allocation5], %s265
          %s267 = sshll.u32 [#allocation4], 4
          %s268 = int_to_ptr.vmem [resolvable:$true] %s267
          %273 = dma.hbm_to_vmem [thread:$0]  %s3, 4096, %s268, [#allocation5], 128, 128, 8
        $region24: #{encoder_forward.1} parent=11 // pred_fallthru
          _
        // Predicated region
        $region25: #{encoder_forward.1} parent=11 // pred_check
          %p274 = pneg %p130
        $region26: #{encoder_forward.1} parent=11 // pred_check_branch
          %276 = sbr.rel (%p274) target = $region28
        $region27: #{encoder_forward.1} parent=11 // pred_region
          _
        $region28: #{encoder_forward.1} parent=11 // pred_fallthru
          _
        // Predicated region
        $region29: #{encoder_forward.1} parent=11 // pred_check
          %p277 = pneg %p151
        $region30: #{encoder_forward.1} parent=11 // pred_check_branch
          %279 = sbr.rel (%p277) target = $region32
        $region31: #{encoder_forward.1} parent=11 // pred_region
          %s281 = ssub.s32 8192, 8192
          %282 = vsyncadd [#allocation8], %s281
          %s283 = sshll.u32 [#allocation7], 4
          %s284 = int_to_ptr.vmem [resolvable:$true] %s283
          %289 = dma.hbm_to_vmem [thread:$0]  %s5, 8192, %s284, [#allocation8], 256, 256, 16
        $region32: #{encoder_forward.1} parent=11 // pred_fallthru
          _
        // Predicated region
        $region33: #{encoder_forward.1} parent=11 // pred_check
          %p290 = pneg %p172
        $region34: #{encoder_forward.1} parent=11 // pred_check_branch
          %292 = sbr.rel (%p290) target = $region36
        $region35: #{encoder_forward.1} parent=11 // pred_region
          _
        $region36: #{encoder_forward.1} parent=11 // pred_fallthru
          _
        // Predicated region
        $region37: #{encoder_forward.1} parent=11 // pred_check
          %p293 = pneg %p193
        $region38: #{encoder_forward.1} parent=11 // pred_check_branch
          %295 = sbr.rel (%p293) target = $region40
        $region39: #{encoder_forward.1} parent=11 // pred_region
          %s297 = ssub.s32 8192, 8192
          %298 = vsyncadd [#allocation8], %s297
          %s299 = sshll.u32 [#allocation9], 4
          %s300 = int_to_ptr.vmem [resolvable:$true] %s299
          %305 = dma.hbm_to_vmem [thread:$0]  %s7, 8192, %s300, [#allocation8], 128, 128, 8
        $region40: #{encoder_forward.1} parent=11 // pred_fallthru
          _
        // Predicated region
        $region41: #{encoder_forward.1} parent=11 // pred_check
          %p306 = pneg %p214
        $region42: #{encoder_forward.1} parent=11 // pred_check_branch
          %308 = sbr.rel (%p306) target = $region44
        $region43: #{encoder_forward.1} parent=11 // pred_region
          _
        $region44: #{encoder_forward.1} parent=11 // pred_fallthru
          _
      $region12: #{encoder_forward.1} parent=5 // pred_fallthru
        _
      %p309 = scmp.lt.s32.totalorder %s20, 2
      // Predicated region
      $region45: #{encoder_forward.1} parent=5 // pred_check
        %p310 = pneg %p309
      $region46: #{encoder_forward.1} parent=5 // pred_check_branch
        %312 = sbr.rel (%p310) target = $region48
      $region47: #{encoder_forward.1} parent=5 // pred_region
        // Predicated region
        $region49: #{encoder_forward.1} parent=47 // pred_check
          %p313 = pneg %p40
        $region50: #{encoder_forward.1} parent=47 // pred_check_branch
          %315 = sbr.rel (%p313) target = $region52
        $region51: #{encoder_forward.1} parent=47 // pred_region
          %s316 = smul.u32 16, %s20
          %p317 = scmp.lt.s32.totalorder %s316, 31
          %s318 = scalar_select %p317, %s316, 31
          %s319 = smul.addr %s318, 2
          %s320 = smul.addr %s319, 4
          %s321 = scalar_lea.vmem %s0, %s320
          %s322 = smul.u32 16, %s20
        $region52: #{encoder_forward.1} parent=47 // pred_fallthru
          _
      $region48: #{encoder_forward.1} parent=5 // pred_fallthru
        _
      %p323 = scmp.le.s32.totalorder 1, %s20
      %p324 = scmp.lt.s32.totalorder %s20, 3
      %p325 = pnand %p323, %p324
      %p326 = pneg %p325
      // Predicated region
      $region53: #{encoder_forward.1} parent=5 // pred_check
        _
      $region54: #{encoder_forward.1} parent=5 // pred_check_branch
        %328 = sbr.rel (%p325) target = $region56
      $region55: #{encoder_forward.1} parent=5 // pred_region
        %s329 = ssub.s32 %s20, 1
        // Predicated region
        $region57: #{encoder_forward.1} parent=55 // pred_check
          %p330 = pneg %p109
        $region58: #{encoder_forward.1} parent=55 // pred_check_branch
          %332 = sbr.rel (%p330) target = $region60
        $region59: #{encoder_forward.1} parent=55 // pred_region
          %333 = dma.done [#allocation5], 4096
        $region60: #{encoder_forward.1} parent=55 // pred_fallthru
          _
        // Predicated region
        $region61: #{encoder_forward.1} parent=55 // pred_check
          %p334 = pneg %p151
        $region62: #{encoder_forward.1} parent=55 // pred_check_branch
          %336 = sbr.rel (%p334) target = $region64
        $region63: #{encoder_forward.1} parent=55 // pred_region
          %337 = dma.done [#allocation8], 8192
        $region64: #{encoder_forward.1} parent=55 // pred_fallthru
          _
        // Predicated region
        $region65: #{encoder_forward.1} parent=55 // pred_check
          %p338 = pneg %p193
        $region66: #{encoder_forward.1} parent=55 // pred_check_branch
          %340 = sbr.rel (%p338) target = $region68
        $region67: #{encoder_forward.1} parent=55 // pred_region
          %341 = dma.done [#allocation8], 8192
        $region68: #{encoder_forward.1} parent=55 // pred_fallthru
          _
        %s342 = smul.u32 16, %s25
        %p343 = scmp.lt.s32.totalorder %s342, 31
        %s344 = scalar_select %p343, %s342, 31
        %s345 = smul.addr %s344, 2
        %s346 = smul.addr %s345, 4
        %s347 = scalar_lea.vmem %s0, %s346
        %p348 = pneg %p46
        %p349 = pneg %p43
        %p350 = pneg %p67
        %p351 = pneg %p64
        %p352 = pneg %p88
        %p353 = pneg %p85
        %p354 = pneg %p109
        %p355 = pneg %p106
        %p356 = pneg %p130
        %p357 = pneg %p127
        %p358 = pneg %p151
        %p359 = pneg %p148
        %p360 = pneg %p172
        %p361 = pneg %p169
        %p362 = pneg %p193
        %p363 = pneg %p190
        %p364 = pneg %p214
        %p365 = pneg %p211
        %p366 = pneg %p240
        %p367 = pneg %p237
        %s368 = sand.u32 %s227, 1
        %s369 = scalar_lea.sflag [#allocation6], %s368
        %s370 = sand.u32 %s227, 1
        %s371 = smul.addr %s370, 256
        %s372 = scalar_lea.vmem [#allocation10], %s371
        %s373 = smul.u32 16, %s25
        %p374 = scmp.lt.s32.totalorder %s373, 31
        %s375 = scalar_select %p374, %s373, 31
        %s376 = smul.addr %s375, 2
        %s377 = smul.addr %s376, 4
        %s378 = scalar_lea.vmem %s0, %s377
        %s379 = smul.u32 16, %s25
        %s380 = smul.u32 16, %s25
        %v382 = vld [vmem:[%s378] sm:$0xff]
        %v383 = vld [vmem:[%s378 + $0x8] sm:$0xff]
        %v384 = vld [vmem:[%s378 + $0x10] sm:$0xff]
        %v385 = vld [vmem:[%s378 + $0x18] sm:$0xff]
        %v386 = vld [vmem:[%s378 + $0x20] sm:$0xff]
        %v387 = vld [vmem:[%s378 + $0x28] sm:$0xff]
        %v388 = vld [vmem:[%s378 + $0x30] sm:$0xff]
        %v389 = vld [vmem:[%s378 + $0x38] sm:$0xff]
        %v390 = vld [vmem:[%s378 + $0x40] sm:$0xff]
        %v391 = vld [vmem:[%s378 + $0x48] sm:$0xff]
        %v392 = vld [vmem:[%s378 + $0x50] sm:$0xff]
        %v393 = vld [vmem:[%s378 + $0x58] sm:$0xff]
        %v394 = vld [vmem:[%s378 + $0x60] sm:$0xff]
        %v395 = vld [vmem:[%s378 + $0x68] sm:$0xff]
        %v396 = vld [vmem:[%s378 + $0x70] sm:$0xff]
        %v397 = vld [vmem:[%s378 + $0x78] sm:$0xff]
        %v398 = vld [vmem:[%s1] sm:$0xff]
        %v399 = vld [vmem:[%s1 + $0x8] sm:$0xff]
        %v400 = vld [vmem:[%s1 + $0x10] sm:$0xff]
        %v401 = vld [vmem:[%s1 + $0x18] sm:$0xff]
        %v402 = vld [vmem:[%s1 + $0x20] sm:$0xff]
        %v403 = vld [vmem:[%s1 + $0x28] sm:$0xff]
        %v404 = vld [vmem:[%s1 + $0x30] sm:$0xff]
        %v405 = vld [vmem:[%s1 + $0x38] sm:$0xff]
        %v406 = vld [vmem:[%s1 + $0x40] sm:$0xff]
        %v407 = vld [vmem:[%s1 + $0x48] sm:$0xff]
        %v408 = vld [vmem:[%s1 + $0x50] sm:$0xff]
        %v409 = vld [vmem:[%s1 + $0x58] sm:$0xff]
        %v410 = vld [vmem:[%s1 + $0x60] sm:$0xff]
        %v411 = vld [vmem:[%s1 + $0x68] sm:$0xff]
        %v412 = vld [vmem:[%s1 + $0x70] sm:$0xff]
        %v413 = vld [vmem:[%s1 + $0x78] sm:$0xff]
        %v414 = vld [vmem:[%s1 + $0x80] sm:$0xff]
        %v415 = vld [vmem:[%s1 + $0x88] sm:$0xff]
        %v416 = vld [vmem:[%s1 + $0x90] sm:$0xff]
        %v417 = vld [vmem:[%s1 + $0x98] sm:$0xff]
        %v418 = vld [vmem:[%s1 + $0xa0] sm:$0xff]
        %v419 = vld [vmem:[%s1 + $0xa8] sm:$0xff]
        %v420 = vld [vmem:[%s1 + $0xb0] sm:$0xff]
        %v421 = vld [vmem:[%s1 + $0xb8] sm:$0xff]
        %v422 = vld [vmem:[%s1 + $0xc0] sm:$0xff]
        %v423 = vld [vmem:[%s1 + $0xc8] sm:$0xff]
        %v424 = vld [vmem:[%s1 + $0xd0] sm:$0xff]
        %v425 = vld [vmem:[%s1 + $0xd8] sm:$0xff]
        %v426 = vld [vmem:[%s1 + $0xe0] sm:$0xff]
        %v427 = vld [vmem:[%s1 + $0xe8] sm:$0xff]
        %v428 = vld [vmem:[%s1 + $0xf0] sm:$0xff]
        %v429 = vld [vmem:[%s1 + $0xf8] sm:$0xff]
        %v430 = vld [vmem:[%s1 + $0x100] sm:$0xff]
        %v431 = vld [vmem:[%s1 + $0x108] sm:$0xff]
        %v432 = vld [vmem:[%s1 + $0x110] sm:$0xff]
        %v433 = vld [vmem:[%s1 + $0x118] sm:$0xff]
        %v434 = vld [vmem:[%s1 + $0x120] sm:$0xff]
        %v435 = vld [vmem:[%s1 + $0x128] sm:$0xff]
        %v436 = vld [vmem:[%s1 + $0x130] sm:$0xff]
        %v437 = vld [vmem:[%s1 + $0x138] sm:$0xff]
        %v438 = vld [vmem:[%s1 + $0x140] sm:$0xff]
        %v439 = vld [vmem:[%s1 + $0x148] sm:$0xff]
        %v440 = vld [vmem:[%s1 + $0x150] sm:$0xff]
        %v441 = vld [vmem:[%s1 + $0x158] sm:$0xff]
        %v442 = vld [vmem:[%s1 + $0x160] sm:$0xff]
        %v443 = vld [vmem:[%s1 + $0x168] sm:$0xff]
        %v444 = vld [vmem:[%s1 + $0x170] sm:$0xff]
        %v445 = vld [vmem:[%s1 + $0x178] sm:$0xff]
        %v446 = vld [vmem:[%s1 + $0x180] sm:$0xff]
        %v447 = vld [vmem:[%s1 + $0x188] sm:$0xff]
        %v448 = vld [vmem:[%s1 + $0x190] sm:$0xff]
        %v449 = vld [vmem:[%s1 + $0x198] sm:$0xff]
        %v450 = vld [vmem:[%s1 + $0x1a0] sm:$0xff]
        %v451 = vld [vmem:[%s1 + $0x1a8] sm:$0xff]
        %v452 = vld [vmem:[%s1 + $0x1b0] sm:$0xff]
        %v453 = vld [vmem:[%s1 + $0x1b8] sm:$0xff]
        %v454 = vld [vmem:[%s1 + $0x1c0] sm:$0xff]
        %v455 = vld [vmem:[%s1 + $0x1c8] sm:$0xff]
        %v456 = vld [vmem:[%s1 + $0x1d0] sm:$0xff]
        %v457 = vld [vmem:[%s1 + $0x1d8] sm:$0xff]
        %v458 = vld [vmem:[%s1 + $0x1e0] sm:$0xff]
        %v459 = vld [vmem:[%s1 + $0x1e8] sm:$0xff]
        %v460 = vld [vmem:[%s1 + $0x1f0] sm:$0xff]
        %v461 = vld [vmem:[%s1 + $0x1f8] sm:$0xff]
        %v462 = vld [vmem:[%s1 + $0x200] sm:$0xff]
        %v463 = vld [vmem:[%s1 + $0x208] sm:$0xff]
        %v464 = vld [vmem:[%s1 + $0x210] sm:$0xff]
        %v465 = vld [vmem:[%s1 + $0x218] sm:$0xff]
        %v466 = vld [vmem:[%s1 + $0x220] sm:$0xff]
        %v467 = vld [vmem:[%s1 + $0x228] sm:$0xff]
        %v468 = vld [vmem:[%s1 + $0x230] sm:$0xff]
        %v469 = vld [vmem:[%s1 + $0x238] sm:$0xff]
        %v470 = vld [vmem:[%s1 + $0x240] sm:$0xff]
        %v471 = vld [vmem:[%s1 + $0x248] sm:$0xff]
        %v472 = vld [vmem:[%s1 + $0x250] sm:$0xff]
        %v473 = vld [vmem:[%s1 + $0x258] sm:$0xff]
        %v474 = vld [vmem:[%s1 + $0x260] sm:$0xff]
        %v475 = vld [vmem:[%s1 + $0x268] sm:$0xff]
        %v476 = vld [vmem:[%s1 + $0x270] sm:$0xff]
        %v477 = vld [vmem:[%s1 + $0x278] sm:$0xff]
        %v478 = vld [vmem:[%s1 + $0x280] sm:$0xff]
        %v479 = vld [vmem:[%s1 + $0x288] sm:$0xff]
        %v480 = vld [vmem:[%s1 + $0x290] sm:$0xff]
        %v481 = vld [vmem:[%s1 + $0x298] sm:$0xff]
        %v482 = vld [vmem:[%s1 + $0x2a0] sm:$0xff]
        %v483 = vld [vmem:[%s1 + $0x2a8] sm:$0xff]
        %v484 = vld [vmem:[%s1 + $0x2b0] sm:$0xff]
        %v485 = vld [vmem:[%s1 + $0x2b8] sm:$0xff]
        %v486 = vld [vmem:[%s1 + $0x2c0] sm:$0xff]
        %v487 = vld [vmem:[%s1 + $0x2c8] sm:$0xff]
        %v488 = vld [vmem:[%s1 + $0x2d0] sm:$0xff]
        %v489 = vld [vmem:[%s1 + $0x2d8] sm:$0xff]
        %v490 = vld [vmem:[%s1 + $0x2e0] sm:$0xff]
        %v491 = vld [vmem:[%s1 + $0x2e8] sm:$0xff]
        %v492 = vld [vmem:[%s1 + $0x2f0] sm:$0xff]
        %v493 = vld [vmem:[%s1 + $0x2f8] sm:$0xff]
        %v494 = vld [vmem:[%s2] sm:$0x3f]
        %v496 = vlaneseq
        %v497 = vshrl.u32 %v496, 7
        %v498 = vsub.s32 0, %v497
        %v499 = vrot.slane %v494, %v498
        %v500 = vlaneseq
        %v501 = vshrl.u32 %v500, 7
        %v502 = vsub.s32 1, %v501
        %v503 = vrot.slane %v494, %v502
        %v504 = vlaneseq
        %v505 = vshrl.u32 %v504, 7
        %v506 = vsub.s32 2, %v505
        %v507 = vrot.slane %v494, %v506
        %v508 = vlaneseq
        %v509 = vshrl.u32 %v508, 7
        %v510 = vsub.s32 3, %v509
        %v511 = vrot.slane %v494, %v510
        %v512 = vlaneseq
        %v513 = vshrl.u32 %v512, 7
        %v514 = vsub.s32 4, %v513
        %v515 = vrot.slane %v494, %v514
        %v516 = vlaneseq
        %v517 = vshrl.u32 %v516, 7
        %v518 = vsub.s32 5, %v517
        %v519 = vrot.slane %v494, %v518
        %v542 = vunpack.c.l.b16 %v382
        %v543 = vunpack.c.h.b16 %v382
        %v544 = vunpack.c.l.b16 %v383
        %v545 = vunpack.c.h.b16 %v383
        %v546 = vunpack.c.l.b16 %v384
        %v547 = vunpack.c.h.b16 %v384
        %v548 = vunpack.c.l.b16 %v385
        %v549 = vunpack.c.h.b16 %v385
        %v550 = vunpack.c.l.b16 %v386
        %v551 = vunpack.c.h.b16 %v386
        %v552 = vunpack.c.l.b16 %v387
        %v553 = vunpack.c.h.b16 %v387
        %v554 = vunpack.c.l.b16 %v388
        %v555 = vunpack.c.h.b16 %v388
        %v556 = vunpack.c.l.b16 %v389
        %v557 = vunpack.c.h.b16 %v389
        %v558 = vunpack.c.l.b16 %v390
        %v559 = vunpack.c.h.b16 %v390
        %v560 = vunpack.c.l.b16 %v391
        %v561 = vunpack.c.h.b16 %v391
        %v562 = vunpack.c.l.b16 %v392
        %v563 = vunpack.c.h.b16 %v392
        %v564 = vunpack.c.l.b16 %v393
        %v565 = vunpack.c.h.b16 %v393
        %v566 = vunpack.c.l.b16 %v394
        %v567 = vunpack.c.h.b16 %v394
        %v568 = vunpack.c.l.b16 %v395
        %v569 = vunpack.c.h.b16 %v395
        %v570 = vunpack.c.l.b16 %v396
        %v571 = vunpack.c.h.b16 %v396
        %v572 = vunpack.c.l.b16 %v397
        %v573 = vunpack.c.h.b16 %v397
        %v574 = vpack.c.b16 %v544, %v542
        %v575 = vpack.c.b16 %v545, %v543
        %v576 = vpack.c.b16 %v548, %v546
        %v577 = vpack.c.b16 %v549, %v547
        %v578 = vpack.c.b16 %v552, %v550
        %v579 = vpack.c.b16 %v553, %v551
        %v580 = vpack.c.b16 %v556, %v554
        %v581 = vpack.c.b16 %v557, %v555
        %v582 = vpack.c.b16 %v560, %v558
        %v583 = vpack.c.b16 %v561, %v559
        %v584 = vpack.c.b16 %v564, %v562
        %v585 = vpack.c.b16 %v565, %v563
        %v586 = vpack.c.b16 %v568, %v566
        %v587 = vpack.c.b16 %v569, %v567
        %v588 = vpack.c.b16 %v572, %v570
        %v589 = vpack.c.b16 %v573, %v571
        %v702 = vunpack.c.l.b16 %v398
        %v703 = vunpack.c.h.b16 %v398
        %v704 = vunpack.c.l.b16 %v399
        %v705 = vunpack.c.h.b16 %v399
        %v706 = vunpack.c.l.b16 %v400
        %v707 = vunpack.c.h.b16 %v400
        %v708 = vunpack.c.l.b16 %v401
        %v709 = vunpack.c.h.b16 %v401
        %v710 = vunpack.c.l.b16 %v402
        %v711 = vunpack.c.h.b16 %v402
        %v712 = vunpack.c.l.b16 %v403
        %v713 = vunpack.c.h.b16 %v403
        %v714 = vunpack.c.l.b16 %v404
        %v715 = vunpack.c.h.b16 %v404
        %v716 = vunpack.c.l.b16 %v405
        %v717 = vunpack.c.h.b16 %v405
        %v718 = vunpack.c.l.b16 %v406
        %v719 = vunpack.c.h.b16 %v406
        %v720 = vunpack.c.l.b16 %v407
        %v721 = vunpack.c.h.b16 %v407
        %v722 = vunpack.c.l.b16 %v408
        %v723 = vunpack.c.h.b16 %v408
        %v724 = vunpack.c.l.b16 %v409
        %v725 = vunpack.c.h.b16 %v409
        %v726 = vunpack.c.l.b16 %v410
        %v727 = vunpack.c.h.b16 %v410
        %v728 = vunpack.c.l.b16 %v411
        %v729 = vunpack.c.h.b16 %v411
        %v730 = vunpack.c.l.b16 %v412
        %v731 = vunpack.c.h.b16 %v412
        %v732 = vunpack.c.l.b16 %v413
        %v733 = vunpack.c.h.b16 %v413
        %v734 = vunpack.c.l.b16 %v414
        %v735 = vunpack.c.h.b16 %v414
        %v736 = vunpack.c.l.b16 %v415
        %v737 = vunpack.c.h.b16 %v415
        %v738 = vunpack.c.l.b16 %v416
        %v739 = vunpack.c.h.b16 %v416
        %v740 = vunpack.c.l.b16 %v417
        %v741 = vunpack.c.h.b16 %v417
        %v742 = vunpack.c.l.b16 %v418
        %v743 = vunpack.c.h.b16 %v418
        %v744 = vunpack.c.l.b16 %v419
        %v745 = vunpack.c.h.b16 %v419
        %v746 = vunpack.c.l.b16 %v420
        %v747 = vunpack.c.h.b16 %v420
        %v748 = vunpack.c.l.b16 %v421
        %v749 = vunpack.c.h.b16 %v421
        %v750 = vunpack.c.l.b16 %v422
        %v751 = vunpack.c.h.b16 %v422
        %v752 = vunpack.c.l.b16 %v423
        %v753 = vunpack.c.h.b16 %v423
        %v754 = vunpack.c.l.b16 %v424
        %v755 = vunpack.c.h.b16 %v424
        %v756 = vunpack.c.l.b16 %v425
        %v757 = vunpack.c.h.b16 %v425
        %v758 = vunpack.c.l.b16 %v426
        %v759 = vunpack.c.h.b16 %v426
        %v760 = vunpack.c.l.b16 %v427
        %v761 = vunpack.c.h.b16 %v427
        %v762 = vunpack.c.l.b16 %v428
        %v763 = vunpack.c.h.b16 %v428
        %v764 = vunpack.c.l.b16 %v429
        %v765 = vunpack.c.h.b16 %v429
        %v766 = vunpack.c.l.b16 %v430
        %v767 = vunpack.c.h.b16 %v430
        %v768 = vunpack.c.l.b16 %v431
        %v769 = vunpack.c.h.b16 %v431
        %v770 = vunpack.c.l.b16 %v432
        %v771 = vunpack.c.h.b16 %v432
        %v772 = vunpack.c.l.b16 %v433
        %v773 = vunpack.c.h.b16 %v433
        %v774 = vunpack.c.l.b16 %v434
        %v775 = vunpack.c.h.b16 %v434
        %v776 = vunpack.c.l.b16 %v435
        %v777 = vunpack.c.h.b16 %v435
        %v778 = vunpack.c.l.b16 %v436
        %v779 = vunpack.c.h.b16 %v436
        %v780 = vunpack.c.l.b16 %v437
        %v781 = vunpack.c.h.b16 %v437
        %v782 = vunpack.c.l.b16 %v438
        %v783 = vunpack.c.h.b16 %v438
        %v784 = vunpack.c.l.b16 %v439
        %v785 = vunpack.c.h.b16 %v439
        %v786 = vunpack.c.l.b16 %v440
        %v787 = vunpack.c.h.b16 %v440
        %v788 = vunpack.c.l.b16 %v441
        %v789 = vunpack.c.h.b16 %v441
        %v790 = vunpack.c.l.b16 %v442
        %v791 = vunpack.c.h.b16 %v442
        %v792 = vunpack.c.l.b16 %v443
        %v793 = vunpack.c.h.b16 %v443
        %v794 = vunpack.c.l.b16 %v444
        %v795 = vunpack.c.h.b16 %v444
        %v796 = vunpack.c.l.b16 %v445
        %v797 = vunpack.c.h.b16 %v445
        %v798 = vunpack.c.l.b16 %v446
        %v799 = vunpack.c.h.b16 %v446
        %v800 = vunpack.c.l.b16 %v447
        %v801 = vunpack.c.h.b16 %v447
        %v802 = vunpack.c.l.b16 %v448
        %v803 = vunpack.c.h.b16 %v448
        %v804 = vunpack.c.l.b16 %v449
        %v805 = vunpack.c.h.b16 %v449
        %v806 = vunpack.c.l.b16 %v450
        %v807 = vunpack.c.h.b16 %v450
        %v808 = vunpack.c.l.b16 %v451
        %v809 = vunpack.c.h.b16 %v451
        %v810 = vunpack.c.l.b16 %v452
        %v811 = vunpack.c.h.b16 %v452
        %v812 = vunpack.c.l.b16 %v453
        %v813 = vunpack.c.h.b16 %v453
        %v814 = vunpack.c.l.b16 %v454
        %v815 = vunpack.c.h.b16 %v454
        %v816 = vunpack.c.l.b16 %v455
        %v817 = vunpack.c.h.b16 %v455
        %v818 = vunpack.c.l.b16 %v456
        %v819 = vunpack.c.h.b16 %v456
        %v820 = vunpack.c.l.b16 %v457
        %v821 = vunpack.c.h.b16 %v457
        %v822 = vunpack.c.l.b16 %v458
        %v823 = vunpack.c.h.b16 %v458
        %v824 = vunpack.c.l.b16 %v459
        %v825 = vunpack.c.h.b16 %v459
        %v826 = vunpack.c.l.b16 %v460
        %v827 = vunpack.c.h.b16 %v460
        %v828 = vunpack.c.l.b16 %v461
        %v829 = vunpack.c.h.b16 %v461
        %v830 = vunpack.c.l.b16 %v462
        %v831 = vunpack.c.h.b16 %v462
        %v832 = vunpack.c.l.b16 %v463
        %v833 = vunpack.c.h.b16 %v463
        %v834 = vunpack.c.l.b16 %v464
        %v835 = vunpack.c.h.b16 %v464
        %v836 = vunpack.c.l.b16 %v465
        %v837 = vunpack.c.h.b16 %v465
        %v838 = vunpack.c.l.b16 %v466
        %v839 = vunpack.c.h.b16 %v466
        %v840 = vunpack.c.l.b16 %v467
        %v841 = vunpack.c.h.b16 %v467
        %v842 = vunpack.c.l.b16 %v468
        %v843 = vunpack.c.h.b16 %v468
        %v844 = vunpack.c.l.b16 %v469
        %v845 = vunpack.c.h.b16 %v469
        %v846 = vunpack.c.l.b16 %v470
        %v847 = vunpack.c.h.b16 %v470
        %v848 = vunpack.c.l.b16 %v471
        %v849 = vunpack.c.h.b16 %v471
        %v850 = vunpack.c.l.b16 %v472
        %v851 = vunpack.c.h.b16 %v472
        %v852 = vunpack.c.l.b16 %v473
        %v853 = vunpack.c.h.b16 %v473
        %v854 = vunpack.c.l.b16 %v474
        %v855 = vunpack.c.h.b16 %v474
        %v856 = vunpack.c.l.b16 %v475
        %v857 = vunpack.c.h.b16 %v475
        %v858 = vunpack.c.l.b16 %v476
        %v859 = vunpack.c.h.b16 %v476
        %v860 = vunpack.c.l.b16 %v477
        %v861 = vunpack.c.h.b16 %v477
        %v862 = vunpack.c.l.b16 %v478
        %v863 = vunpack.c.h.b16 %v478
        %v864 = vunpack.c.l.b16 %v479
        %v865 = vunpack.c.h.b16 %v479
        %v866 = vunpack.c.l.b16 %v480
        %v867 = vunpack.c.h.b16 %v480
        %v868 = vunpack.c.l.b16 %v481
        %v869 = vunpack.c.h.b16 %v481
        %v870 = vunpack.c.l.b16 %v482
        %v871 = vunpack.c.h.b16 %v482
        %v872 = vunpack.c.l.b16 %v483
        %v873 = vunpack.c.h.b16 %v483
        %v874 = vunpack.c.l.b16 %v484
        %v875 = vunpack.c.h.b16 %v484
        %v876 = vunpack.c.l.b16 %v485
        %v877 = vunpack.c.h.b16 %v485
        %v878 = vunpack.c.l.b16 %v486
        %v879 = vunpack.c.h.b16 %v486
        %v880 = vunpack.c.l.b16 %v487
        %v881 = vunpack.c.h.b16 %v487
        %v882 = vunpack.c.l.b16 %v488
        %v883 = vunpack.c.h.b16 %v488
        %v884 = vunpack.c.l.b16 %v489
        %v885 = vunpack.c.h.b16 %v489
        %v886 = vunpack.c.l.b16 %v490
        %v887 = vunpack.c.h.b16 %v490
        %v888 = vunpack.c.l.b16 %v491
        %v889 = vunpack.c.h.b16 %v491
        %v890 = vunpack.c.l.b16 %v492
        %v891 = vunpack.c.h.b16 %v492
        %v892 = vunpack.c.l.b16 %v493
        %v893 = vunpack.c.h.b16 %v493
        %v894 = vpack.c.b16 %v708, %v702
        %v895 = vpack.c.b16 %v709, %v703
        %v896 = vpack.c.b16 %v710, %v704
        %v897 = vpack.c.b16 %v711, %v705
        %v898 = vpack.c.b16 %v712, %v706
        %v899 = vpack.c.b16 %v713, %v707
        %v900 = vpack.c.b16 %v720, %v714
        %v901 = vpack.c.b16 %v721, %v715
        %v902 = vpack.c.b16 %v722, %v716
        %v903 = vpack.c.b16 %v723, %v717
        %v904 = vpack.c.b16 %v724, %v718
        %v905 = vpack.c.b16 %v725, %v719
        %v906 = vpack.c.b16 %v732, %v726
        %v907 = vpack.c.b16 %v733, %v727
        %v908 = vpack.c.b16 %v734, %v728
        %v909 = vpack.c.b16 %v735, %v729
        %v910 = vpack.c.b16 %v736, %v730
        %v911 = vpack.c.b16 %v737, %v731
        %v912 = vpack.c.b16 %v744, %v738
        %v913 = vpack.c.b16 %v745, %v739
        %v914 = vpack.c.b16 %v746, %v740
        %v915 = vpack.c.b16 %v747, %v741
        %v916 = vpack.c.b16 %v748, %v742
        %v917 = vpack.c.b16 %v749, %v743
        %v918 = vpack.c.b16 %v756, %v750
        %v919 = vpack.c.b16 %v757, %v751
        %v920 = vpack.c.b16 %v758, %v752
        %v921 = vpack.c.b16 %v759, %v753
        %v922 = vpack.c.b16 %v760, %v754
        %v923 = vpack.c.b16 %v761, %v755
        %v924 = vpack.c.b16 %v768, %v762
        %v925 = vpack.c.b16 %v769, %v763
        %v926 = vpack.c.b16 %v770, %v764
        %v927 = vpack.c.b16 %v771, %v765
        %v928 = vpack.c.b16 %v772, %v766
        %v929 = vpack.c.b16 %v773, %v767
        %v930 = vpack.c.b16 %v780, %v774
        %v931 = vpack.c.b16 %v781, %v775
        %v932 = vpack.c.b16 %v782, %v776
        %v933 = vpack.c.b16 %v783, %v777
        %v934 = vpack.c.b16 %v784, %v778
        %v935 = vpack.c.b16 %v785, %v779
        %v936 = vpack.c.b16 %v792, %v786
        %v937 = vpack.c.b16 %v793, %v787
        %v938 = vpack.c.b16 %v794, %v788
        %v939 = vpack.c.b16 %v795, %v789
        %v940 = vpack.c.b16 %v796, %v790
        %v941 = vpack.c.b16 %v797, %v791
        %v942 = vpack.c.b16 %v804, %v798
        %v943 = vpack.c.b16 %v805, %v799
        %v944 = vpack.c.b16 %v806, %v800
        %v945 = vpack.c.b16 %v807, %v801
        %v946 = vpack.c.b16 %v808, %v802
        %v947 = vpack.c.b16 %v809, %v803
        %v948 = vpack.c.b16 %v816, %v810
        %v949 = vpack.c.b16 %v817, %v811
        %v950 = vpack.c.b16 %v818, %v812
        %v951 = vpack.c.b16 %v819, %v813
        %v952 = vpack.c.b16 %v820, %v814
        %v953 = vpack.c.b16 %v821, %v815
        %v954 = vpack.c.b16 %v828, %v822
        %v955 = vpack.c.b16 %v829, %v823
        %v956 = vpack.c.b16 %v830, %v824
        %v957 = vpack.c.b16 %v831, %v825
        %v958 = vpack.c.b16 %v832, %v826
        %v959 = vpack.c.b16 %v833, %v827
        %v960 = vpack.c.b16 %v840, %v834
        %v961 = vpack.c.b16 %v841, %v835
        %v962 = vpack.c.b16 %v842, %v836
        %v963 = vpack.c.b16 %v843, %v837
        %v964 = vpack.c.b16 %v844, %v838
        %v965 = vpack.c.b16 %v845, %v839
        %v966 = vpack.c.b16 %v852, %v846
        %v967 = vpack.c.b16 %v853, %v847
        %v968 = vpack.c.b16 %v854, %v848
        %v969 = vpack.c.b16 %v855, %v849
        %v970 = vpack.c.b16 %v856, %v850
        %v971 = vpack.c.b16 %v857, %v851
        %v972 = vpack.c.b16 %v864, %v858
        %v973 = vpack.c.b16 %v865, %v859
        %v974 = vpack.c.b16 %v866, %v860
        %v975 = vpack.c.b16 %v867, %v861
        %v976 = vpack.c.b16 %v868, %v862
        %v977 = vpack.c.b16 %v869, %v863
        %v978 = vpack.c.b16 %v876, %v870
        %v979 = vpack.c.b16 %v877, %v871
        %v980 = vpack.c.b16 %v878, %v872
        %v981 = vpack.c.b16 %v879, %v873
        %v982 = vpack.c.b16 %v880, %v874
        %v983 = vpack.c.b16 %v881, %v875
        %v984 = vpack.c.b16 %v888, %v882
        %v985 = vpack.c.b16 %v889, %v883
        %v986 = vpack.c.b16 %v890, %v884
        %v987 = vpack.c.b16 %v891, %v885
        %v988 = vpack.c.b16 %v892, %v886
        %v989 = vpack.c.b16 %v893, %v887
        %1086 = vmatprep.subr.bf16.mxu0 %v937
        %1087 = vmatpush1.bf16.msra.mxu0 %v936
        %1088 = vmatprep.subr.bf16.mxu0 %v931
        %1089 = vmatpush1.bf16.msra.mxu0 %v930
        %1090 = vmatprep.subr.bf16.mxu0 %v925
        %1091 = vmatpush1.bf16.msra.mxu0 %v924
        %1092 = vmatprep.subr.bf16.mxu0 %v919
        %1093 = vmatpush1.bf16.msra.mxu0 %v918
        %1094 = vmatprep.subr.bf16.mxu0 %v913
        %1095 = vmatpush1.bf16.msra.mxu0 %v912
        %1096 = vmatprep.subr.bf16.mxu0 %v907
        %1097 = vmatpush1.bf16.msra.mxu0 %v906
        %1098 = vmatprep.subr.bf16.mxu0 %v901
        %1099 = vmatpush1.bf16.msra.mxu0 %v900
        %1100 = vmatprep.subr.bf16.mxu0 %v895
        %1101 = vmatpush1.bf16.msra.mxu0 %v894
        %1102 = vmatprep.subr.bf16.mxu0 %v985
        %1103 = vmatpush2.bf16.msra.mxu0 %v984
        %1104 = vmatprep.subr.bf16.mxu0 %v979
        %1105 = vmatpush2.bf16.msra.mxu0 %v978
        %1106 = vmatprep.subr.bf16.mxu0 %v973
        %1107 = vmatpush2.bf16.msra.mxu0 %v972
        %1108 = vmatprep.subr.bf16.mxu0 %v967
        %1109 = vmatpush2.bf16.msra.mxu0 %v966
        %1110 = vmatprep.subr.bf16.mxu0 %v961
        %1111 = vmatpush2.bf16.msra.mxu0 %v960
        %1112 = vmatprep.subr.bf16.mxu0 %v955
        %1113 = vmatpush2.bf16.msra.mxu0 %v954
        %1114 = vmatprep.subr.bf16.mxu0 %v949
        %1115 = vmatpush2.bf16.msra.mxu0 %v948
        %1116 = vmatprep.subr.bf16.mxu0 %v943
        %1117 = vmatpush2.bf16.msra.mxu0 %v942
        %1118 = vmatprep.mubr.bf16.mxu0 %v575
        %1119 = vmatmul.mubr.bf16.gmra.mxu0 %v574
        %v1120 = vpop.f32.mrf.mxu0
        %v1121 = vadd.f32 %v499, %v1120
        %v1122 = vpop.f32.mrf.mxu0
        %v1123 = vadd.f32 %v503, %v1122
        %v1124 = vpop.f32.mrf.mxu0
        %v1125 = vadd.f32 %v499, %v1124
        %v1126 = vpop.f32.mrf.mxu0
        %v1127 = vadd.f32 %v503, %v1126
        %1128 = vmatprep.mubr.bf16.mxu0 %v577
        %1129 = vmatmul.mubr.bf16.gmra.mxu0 %v576
        %v1130 = vpop.f32.mrf.mxu0
        %v1131 = vadd.f32 %v499, %v1130
        %v1132 = vpop.f32.mrf.mxu0
        %v1133 = vadd.f32 %v503, %v1132
        %v1134 = vpop.f32.mrf.mxu0
        %v1135 = vadd.f32 %v499, %v1134
        %v1136 = vpop.f32.mrf.mxu0
        %v1137 = vadd.f32 %v503, %v1136
        %1138 = vmatprep.mubr.bf16.mxu0 %v579
        %1139 = vmatmul.mubr.bf16.gmra.mxu0 %v578
        %v1140 = vpop.f32.mrf.mxu0
        %v1141 = vadd.f32 %v499, %v1140
        %v1142 = vpop.f32.mrf.mxu0
        %v1143 = vadd.f32 %v503, %v1142
        %v1144 = vpop.f32.mrf.mxu0
        %v1145 = vadd.f32 %v499, %v1144
        %v1146 = vpop.f32.mrf.mxu0
        %v1147 = vadd.f32 %v503, %v1146
        %1148 = vmatprep.mubr.bf16.mxu0 %v581
        %1149 = vmatmul.mubr.bf16.gmra.mxu0 %v580
        %v1150 = vpop.f32.mrf.mxu0
        %v1151 = vadd.f32 %v499, %v1150
        %v1152 = vpop.f32.mrf.mxu0
        %v1153 = vadd.f32 %v503, %v1152
        %v1154 = vpop.f32.mrf.mxu0
        %v1155 = vadd.f32 %v499, %v1154
        %v1156 = vpop.f32.mrf.mxu0
        %v1157 = vadd.f32 %v503, %v1156
        %1158 = vmatprep.mubr.bf16.mxu0 %v583
        %1159 = vmatmul.mubr.bf16.gmra.mxu0 %v582
        %v1160 = vpop.f32.mrf.mxu0
        %v1161 = vadd.f32 %v499, %v1160
        %v1162 = vpop.f32.mrf.mxu0
        %v1163 = vadd.f32 %v503, %v1162
        %v1164 = vpop.f32.mrf.mxu0
        %v1165 = vadd.f32 %v499, %v1164
        %v1166 = vpop.f32.mrf.mxu0
        %v1167 = vadd.f32 %v503, %v1166
        %1168 = vmatprep.mubr.bf16.mxu0 %v585
        %1169 = vmatmul.mubr.bf16.gmra.mxu0 %v584
        %v1170 = vpop.f32.mrf.mxu0
        %v1171 = vadd.f32 %v499, %v1170
        %v1172 = vpop.f32.mrf.mxu0
        %v1173 = vadd.f32 %v503, %v1172
        %v1174 = vpop.f32.mrf.mxu0
        %v1175 = vadd.f32 %v499, %v1174
        %v1176 = vpop.f32.mrf.mxu0
        %v1177 = vadd.f32 %v503, %v1176
        %1178 = vmatprep.mubr.bf16.mxu0 %v587
        %1179 = vmatmul.mubr.bf16.gmra.mxu0 %v586
        %v1180 = vpop.f32.mrf.mxu0
        %v1181 = vadd.f32 %v499, %v1180
        %v1182 = vpop.f32.mrf.mxu0
        %v1183 = vadd.f32 %v503, %v1182
        %v1184 = vpop.f32.mrf.mxu0
        %v1185 = vadd.f32 %v499, %v1184
        %v1186 = vpop.f32.mrf.mxu0
        %v1187 = vadd.f32 %v503, %v1186
        %1188 = vmatprep.mubr.bf16.mxu0 %v589
        %1189 = vmatmul.mubr.bf16.gmra.mxu0 %v588
        %v1190 = vpop.f32.mrf.mxu0
        %v1191 = vadd.f32 %v499, %v1190
        %v1192 = vpop.f32.mrf.mxu0
        %v1193 = vadd.f32 %v503, %v1192
        %v1194 = vpop.f32.mrf.mxu0
        %v1195 = vadd.f32 %v499, %v1194
        %v1196 = vpop.f32.mrf.mxu0
        %v1197 = vadd.f32 %v503, %v1196
        %1198 = vdwg.mxu0
        %1199 = vmatprep.subr.bf16.mxu0 %v939
        %1200 = vmatpush1.bf16.msra.mxu0 %v938
        %1201 = vmatprep.subr.bf16.mxu0 %v933
        %1202 = vmatpush1.bf16.msra.mxu0 %v932
        %1203 = vmatprep.subr.bf16.mxu0 %v927
        %1204 = vmatpush1.bf16.msra.mxu0 %v926
        %1205 = vmatprep.subr.bf16.mxu0 %v921
        %1206 = vmatpush1.bf16.msra.mxu0 %v920
        %1207 = vmatprep.subr.bf16.mxu0 %v915
        %1208 = vmatpush1.bf16.msra.mxu0 %v914
        %1209 = vmatprep.subr.bf16.mxu0 %v909
        %1210 = vmatpush1.bf16.msra.mxu0 %v908
        %1211 = vmatprep.subr.bf16.mxu0 %v903
        %1212 = vmatpush1.bf16.msra.mxu0 %v902
        %1213 = vmatprep.subr.bf16.mxu0 %v897
        %1214 = vmatpush1.bf16.msra.mxu0 %v896
        %1215 = vmatprep.subr.bf16.mxu0 %v987
        %1216 = vmatpush2.bf16.msra.mxu0 %v986
        %1217 = vmatprep.subr.bf16.mxu0 %v981
        %1218 = vmatpush2.bf16.msra.mxu0 %v980
        %1219 = vmatprep.subr.bf16.mxu0 %v975
        %1220 = vmatpush2.bf16.msra.mxu0 %v974
        %1221 = vmatprep.subr.bf16.mxu0 %v969
        %1222 = vmatpush2.bf16.msra.mxu0 %v968
        %1223 = vmatprep.subr.bf16.mxu0 %v963
        %1224 = vmatpush2.bf16.msra.mxu0 %v962
        %1225 = vmatprep.subr.bf16.mxu0 %v957
        %1226 = vmatpush2.bf16.msra.mxu0 %v956
        %1227 = vmatprep.subr.bf16.mxu0 %v951
        %1228 = vmatpush2.bf16.msra.mxu0 %v950
        %1229 = vmatprep.subr.bf16.mxu0 %v945
        %1230 = vmatpush2.bf16.msra.mxu0 %v944
        %1231 = vmatprep.mubr.bf16.mxu0 %v575
        %1232 = vmatmul.mubr.bf16.gmra.mxu0 %v574
        %v1233 = vpop.f32.mrf.mxu0
        %v1234 = vadd.f32 %v507, %v1233
        %v1235 = vpop.f32.mrf.mxu0
        %v1236 = vadd.f32 %v511, %v1235
        %v1237 = vpop.f32.mrf.mxu0
        %v1238 = vadd.f32 %v507, %v1237
        %v1239 = vpop.f32.mrf.mxu0
        %v1240 = vadd.f32 %v511, %v1239
        %1241 = vmatprep.mubr.bf16.mxu0 %v577
        %1242 = vmatmul.mubr.bf16.gmra.mxu0 %v576
        %v1243 = vpop.f32.mrf.mxu0
        %v1244 = vadd.f32 %v507, %v1243
        %v1245 = vpop.f32.mrf.mxu0
        %v1246 = vadd.f32 %v511, %v1245
        %v1247 = vpop.f32.mrf.mxu0
        %v1248 = vadd.f32 %v507, %v1247
        %v1249 = vpop.f32.mrf.mxu0
        %v1250 = vadd.f32 %v511, %v1249
        %1251 = vmatprep.mubr.bf16.mxu0 %v579
        %1252 = vmatmul.mubr.bf16.gmra.mxu0 %v578
        %v1253 = vpop.f32.mrf.mxu0
        %v1254 = vadd.f32 %v507, %v1253
        %v1255 = vpop.f32.mrf.mxu0
        %v1256 = vadd.f32 %v511, %v1255
        %v1257 = vpop.f32.mrf.mxu0
        %v1258 = vadd.f32 %v507, %v1257
        %v1259 = vpop.f32.mrf.mxu0
        %v1260 = vadd.f32 %v511, %v1259
        %1261 = vmatprep.mubr.bf16.mxu0 %v581
        %1262 = vmatmul.mubr.bf16.gmra.mxu0 %v580
        %v1263 = vpop.f32.mrf.mxu0
        %v1264 = vadd.f32 %v507, %v1263
        %v1265 = vpop.f32.mrf.mxu0
        %v1266 = vadd.f32 %v511, %v1265
        %v1267 = vpop.f32.mrf.mxu0
        %v1268 = vadd.f32 %v507, %v1267
        %v1269 = vpop.f32.mrf.mxu0
        %v1270 = vadd.f32 %v511, %v1269
        %1271 = vmatprep.mubr.bf16.mxu0 %v583
        %1272 = vmatmul.mubr.bf16.gmra.mxu0 %v582
        %v1273 = vpop.f32.mrf.mxu0
        %v1274 = vadd.f32 %v507, %v1273
        %v1275 = vpop.f32.mrf.mxu0
        %v1276 = vadd.f32 %v511, %v1275
        %v1277 = vpop.f32.mrf.mxu0
        %v1278 = vadd.f32 %v507, %v1277
        %v1279 = vpop.f32.mrf.mxu0
        %v1280 = vadd.f32 %v511, %v1279
        %1281 = vmatprep.mubr.bf16.mxu0 %v585
        %1282 = vmatmul.mubr.bf16.gmra.mxu0 %v584
        %v1283 = vpop.f32.mrf.mxu0
        %v1284 = vadd.f32 %v507, %v1283
        %v1285 = vpop.f32.mrf.mxu0
        %v1286 = vadd.f32 %v511, %v1285
        %v1287 = vpop.f32.mrf.mxu0
        %v1288 = vadd.f32 %v507, %v1287
        %v1289 = vpop.f32.mrf.mxu0
        %v1290 = vadd.f32 %v511, %v1289
        %1291 = vmatprep.mubr.bf16.mxu0 %v587
        %1292 = vmatmul.mubr.bf16.gmra.mxu0 %v586
        %v1293 = vpop.f32.mrf.mxu0
        %v1294 = vadd.f32 %v507, %v1293
        %v1295 = vpop.f32.mrf.mxu0
        %v1296 = vadd.f32 %v511, %v1295
        %v1297 = vpop.f32.mrf.mxu0
        %v1298 = vadd.f32 %v507, %v1297
        %v1299 = vpop.f32.mrf.mxu0
        %v1300 = vadd.f32 %v511, %v1299
        %1301 = vmatprep.mubr.bf16.mxu0 %v589
        %1302 = vmatmul.mubr.bf16.gmra.mxu0 %v588
        %v1303 = vpop.f32.mrf.mxu0
        %v1304 = vadd.f32 %v507, %v1303
        %v1305 = vpop.f32.mrf.mxu0
        %v1306 = vadd.f32 %v511, %v1305
        %v1307 = vpop.f32.mrf.mxu0
        %v1308 = vadd.f32 %v507, %v1307
        %v1309 = vpop.f32.mrf.mxu0
        %v1310 = vadd.f32 %v511, %v1309
        %1311 = vdwg.mxu0
        %1312 = vmatprep.subr.bf16.mxu0 %v941
        %1313 = vmatpush1.bf16.msra.mxu0 %v940
        %1314 = vmatprep.subr.bf16.mxu0 %v935
        %1315 = vmatpush1.bf16.msra.mxu0 %v934
        %1316 = vmatprep.subr.bf16.mxu0 %v929
        %1317 = vmatpush1.bf16.msra.mxu0 %v928
        %1318 = vmatprep.subr.bf16.mxu0 %v923
        %1319 = vmatpush1.bf16.msra.mxu0 %v922
        %1320 = vmatprep.subr.bf16.mxu0 %v917
        %1321 = vmatpush1.bf16.msra.mxu0 %v916
        %1322 = vmatprep.subr.bf16.mxu0 %v911
        %1323 = vmatpush1.bf16.msra.mxu0 %v910
        %1324 = vmatprep.subr.bf16.mxu0 %v905
        %1325 = vmatpush1.bf16.msra.mxu0 %v904
        %1326 = vmatprep.subr.bf16.mxu0 %v899
        %1327 = vmatpush1.bf16.msra.mxu0 %v898
        %1328 = vmatprep.subr.bf16.mxu0 %v989
        %1329 = vmatpush2.bf16.msra.mxu0 %v988
        %1330 = vmatprep.subr.bf16.mxu0 %v983
        %1331 = vmatpush2.bf16.msra.mxu0 %v982
        %1332 = vmatprep.subr.bf16.mxu0 %v977
        %1333 = vmatpush2.bf16.msra.mxu0 %v976
        %1334 = vmatprep.subr.bf16.mxu0 %v971
        %1335 = vmatpush2.bf16.msra.mxu0 %v970
        %1336 = vmatprep.subr.bf16.mxu0 %v965
        %1337 = vmatpush2.bf16.msra.mxu0 %v964
        %1338 = vmatprep.subr.bf16.mxu0 %v959
        %1339 = vmatpush2.bf16.msra.mxu0 %v958
        %1340 = vmatprep.subr.bf16.mxu0 %v953
        %1341 = vmatpush2.bf16.msra.mxu0 %v952
        %1342 = vmatprep.subr.bf16.mxu0 %v947
        %1343 = vmatpush2.bf16.msra.mxu0 %v946
        %1344 = vmatprep.mubr.bf16.mxu0 %v575
        %1345 = vmatmul.mubr.bf16.gmra.mxu0 %v574
        %v1346 = vpop.f32.mrf.mxu0
        %v1347 = vadd.f32 %v515, %v1346
        %v1348 = vpop.f32.mrf.mxu0
        %v1349 = vadd.f32 %v519, %v1348
        %v1350 = vpop.f32.mrf.mxu0
        %v1351 = vadd.f32 %v515, %v1350
        %v1352 = vpop.f32.mrf.mxu0
        %v1353 = vadd.f32 %v519, %v1352
        %1354 = vmatprep.mubr.bf16.mxu0 %v577
        %1355 = vmatmul.mubr.bf16.gmra.mxu0 %v576
        %v1356 = vpop.f32.mrf.mxu0
        %v1357 = vadd.f32 %v515, %v1356
        %v1358 = vpop.f32.mrf.mxu0
        %v1359 = vadd.f32 %v519, %v1358
        %v1360 = vpop.f32.mrf.mxu0
        %v1361 = vadd.f32 %v515, %v1360
        %v1362 = vpop.f32.mrf.mxu0
        %v1363 = vadd.f32 %v519, %v1362
        %1364 = vmatprep.mubr.bf16.mxu0 %v579
        %1365 = vmatmul.mubr.bf16.gmra.mxu0 %v578
        %v1366 = vpop.f32.mrf.mxu0
        %v1367 = vadd.f32 %v515, %v1366
        %v1368 = vpop.f32.mrf.mxu0
        %v1369 = vadd.f32 %v519, %v1368
        %v1370 = vpop.f32.mrf.mxu0
        %v1371 = vadd.f32 %v515, %v1370
        %v1372 = vpop.f32.mrf.mxu0
        %v1373 = vadd.f32 %v519, %v1372
        %1374 = vmatprep.mubr.bf16.mxu0 %v581
        %1375 = vmatmul.mubr.bf16.gmra.mxu0 %v580
        %v1376 = vpop.f32.mrf.mxu0
        %v1377 = vadd.f32 %v515, %v1376
        %v1378 = vpop.f32.mrf.mxu0
        %v1379 = vadd.f32 %v519, %v1378
        %v1380 = vpop.f32.mrf.mxu0
        %v1381 = vadd.f32 %v515, %v1380
        %v1382 = vpop.f32.mrf.mxu0
        %v1383 = vadd.f32 %v519, %v1382
        %1384 = vmatprep.mubr.bf16.mxu0 %v583
        %1385 = vmatmul.mubr.bf16.gmra.mxu0 %v582
        %v1386 = vpop.f32.mrf.mxu0
        %v1387 = vadd.f32 %v515, %v1386
        %v1388 = vpop.f32.mrf.mxu0
        %v1389 = vadd.f32 %v519, %v1388
        %v1390 = vpop.f32.mrf.mxu0
        %v1391 = vadd.f32 %v515, %v1390
        %v1392 = vpop.f32.mrf.mxu0
        %v1393 = vadd.f32 %v519, %v1392
        %1394 = vmatprep.mubr.bf16.mxu0 %v585
        %1395 = vmatmul.mubr.bf16.gmra.mxu0 %v584
        %v1396 = vpop.f32.mrf.mxu0
        %v1397 = vadd.f32 %v515, %v1396
        %v1398 = vpop.f32.mrf.mxu0
        %v1399 = vadd.f32 %v519, %v1398
        %v1400 = vpop.f32.mrf.mxu0
        %v1401 = vadd.f32 %v515, %v1400
        %v1402 = vpop.f32.mrf.mxu0
        %v1403 = vadd.f32 %v519, %v1402
        %1404 = vmatprep.mubr.bf16.mxu0 %v587
        %1405 = vmatmul.mubr.bf16.gmra.mxu0 %v586
        %v1406 = vpop.f32.mrf.mxu0
        %v1407 = vadd.f32 %v515, %v1406
        %v1408 = vpop.f32.mrf.mxu0
        %v1409 = vadd.f32 %v519, %v1408
        %v1410 = vpop.f32.mrf.mxu0
        %v1411 = vadd.f32 %v515, %v1410
        %v1412 = vpop.f32.mrf.mxu0
        %v1413 = vadd.f32 %v519, %v1412
        %1414 = vmatprep.mubr.bf16.mxu0 %v589
        %1415 = vmatmul.mubr.bf16.gmra.mxu0 %v588
        %v1416 = vpop.f32.mrf.mxu0
        %v1417 = vadd.f32 %v515, %v1416
        %v1418 = vpop.f32.mrf.mxu0
        %v1419 = vadd.f32 %v519, %v1418
        %v1420 = vpop.f32.mrf.mxu0
        %v1421 = vadd.f32 %v515, %v1420
        %v1422 = vpop.f32.mrf.mxu0
        %v1423 = vadd.f32 %v519, %v1422
        %1424 = vdwg.mxu0
        %v1425 = vpack.c.bf16 %v1125, %v1121
        %v1426 = vpack.c.bf16 %v1127, %v1123
        %v1427 = vpack.c.bf16 %v1238, %v1234
        %v1428 = vpack.c.bf16 %v1240, %v1236
        %v1429 = vpack.c.bf16 %v1351, %v1347
        %v1430 = vpack.c.bf16 %v1353, %v1349
        %v1431 = vpack.c.bf16 %v1135, %v1131
        %v1432 = vpack.c.bf16 %v1137, %v1133
        %v1433 = vpack.c.bf16 %v1248, %v1244
        %v1434 = vpack.c.bf16 %v1250, %v1246
        %v1435 = vpack.c.bf16 %v1361, %v1357
        %v1436 = vpack.c.bf16 %v1363, %v1359
        %v1437 = vpack.c.bf16 %v1145, %v1141
        %v1438 = vpack.c.bf16 %v1147, %v1143
        %v1439 = vpack.c.bf16 %v1258, %v1254
        %v1440 = vpack.c.bf16 %v1260, %v1256
        %v1441 = vpack.c.bf16 %v1371, %v1367
        %v1442 = vpack.c.bf16 %v1373, %v1369
        %v1443 = vpack.c.bf16 %v1155, %v1151
        %v1444 = vpack.c.bf16 %v1157, %v1153
        %v1445 = vpack.c.bf16 %v1268, %v1264
        %v1446 = vpack.c.bf16 %v1270, %v1266
        %v1447 = vpack.c.bf16 %v1381, %v1377
        %v1448 = vpack.c.bf16 %v1383, %v1379
        %v1449 = vpack.c.bf16 %v1165, %v1161
        %v1450 = vpack.c.bf16 %v1167, %v1163
        %v1451 = vpack.c.bf16 %v1278, %v1274
        %v1452 = vpack.c.bf16 %v1280, %v1276
        %v1453 = vpack.c.bf16 %v1391, %v1387
        %v1454 = vpack.c.bf16 %v1393, %v1389
        %v1455 = vpack.c.bf16 %v1175, %v1171
        %v1456 = vpack.c.bf16 %v1177, %v1173
        %v1457 = vpack.c.bf16 %v1288, %v1284
        %v1458 = vpack.c.bf16 %v1290, %v1286
        %v1459 = vpack.c.bf16 %v1401, %v1397
        %v1460 = vpack.c.bf16 %v1403, %v1399
        %v1461 = vpack.c.bf16 %v1185, %v1181
        %v1462 = vpack.c.bf16 %v1187, %v1183
        %v1463 = vpack.c.bf16 %v1298, %v1294
        %v1464 = vpack.c.bf16 %v1300, %v1296
        %v1465 = vpack.c.bf16 %v1411, %v1407
        %v1466 = vpack.c.bf16 %v1413, %v1409
        %v1467 = vpack.c.bf16 %v1195, %v1191
        %v1468 = vpack.c.bf16 %v1197, %v1193
        %v1469 = vpack.c.bf16 %v1308, %v1304
        %v1470 = vpack.c.bf16 %v1310, %v1306
        %v1471 = vpack.c.bf16 %v1421, %v1417
        %v1472 = vpack.c.bf16 %v1423, %v1419
        %v1521 = vunpack.c.l.b16 %v1425
        %v1522 = vunpack.c.l.b16 %v1426
        %v1523 = vunpack.c.l.b16 %v1427
        %v1524 = vunpack.c.l.b16 %v1428
        %v1525 = vunpack.c.l.b16 %v1429
        %v1526 = vunpack.c.l.b16 %v1430
        %v1527 = vunpack.c.h.b16 %v1425
        %v1528 = vunpack.c.h.b16 %v1426
        %v1529 = vunpack.c.h.b16 %v1427
        %v1530 = vunpack.c.h.b16 %v1428
        %v1531 = vunpack.c.h.b16 %v1429
        %v1532 = vunpack.c.h.b16 %v1430
        %v1533 = vunpack.c.l.b16 %v1431
        %v1534 = vunpack.c.l.b16 %v1432
        %v1535 = vunpack.c.l.b16 %v1433
        %v1536 = vunpack.c.l.b16 %v1434
        %v1537 = vunpack.c.l.b16 %v1435
        %v1538 = vunpack.c.l.b16 %v1436
        %v1539 = vunpack.c.h.b16 %v1431
        %v1540 = vunpack.c.h.b16 %v1432
        %v1541 = vunpack.c.h.b16 %v1433
        %v1542 = vunpack.c.h.b16 %v1434
        %v1543 = vunpack.c.h.b16 %v1435
        %v1544 = vunpack.c.h.b16 %v1436
        %v1545 = vunpack.c.l.b16 %v1437
        %v1546 = vunpack.c.l.b16 %v1438
        %v1547 = vunpack.c.l.b16 %v1439
        %v1548 = vunpack.c.l.b16 %v1440
        %v1549 = vunpack.c.l.b16 %v1441
        %v1550 = vunpack.c.l.b16 %v1442
        %v1551 = vunpack.c.h.b16 %v1437
        %v1552 = vunpack.c.h.b16 %v1438
        %v1553 = vunpack.c.h.b16 %v1439
        %v1554 = vunpack.c.h.b16 %v1440
        %v1555 = vunpack.c.h.b16 %v1441
        %v1556 = vunpack.c.h.b16 %v1442
        %v1557 = vunpack.c.l.b16 %v1443
        %v1558 = vunpack.c.l.b16 %v1444
        %v1559 = vunpack.c.l.b16 %v1445
        %v1560 = vunpack.c.l.b16 %v1446
        %v1561 = vunpack.c.l.b16 %v1447
        %v1562 = vunpack.c.l.b16 %v1448
        %v1563 = vunpack.c.h.b16 %v1443
        %v1564 = vunpack.c.h.b16 %v1444
        %v1565 = vunpack.c.h.b16 %v1445
        %v1566 = vunpack.c.h.b16 %v1446
        %v1567 = vunpack.c.h.b16 %v1447
        %v1568 = vunpack.c.h.b16 %v1448
        %v1569 = vunpack.c.l.b16 %v1449
        %v1570 = vunpack.c.l.b16 %v1450
        %v1571 = vunpack.c.l.b16 %v1451
        %v1572 = vunpack.c.l.b16 %v1452
        %v1573 = vunpack.c.l.b16 %v1453
        %v1574 = vunpack.c.l.b16 %v1454
        %v1575 = vunpack.c.h.b16 %v1449
        %v1576 = vunpack.c.h.b16 %v1450
        %v1577 = vunpack.c.h.b16 %v1451
        %v1578 = vunpack.c.h.b16 %v1452
        %v1579 = vunpack.c.h.b16 %v1453
        %v1580 = vunpack.c.h.b16 %v1454
        %v1581 = vunpack.c.l.b16 %v1455
        %v1582 = vunpack.c.l.b16 %v1456
        %v1583 = vunpack.c.l.b16 %v1457
        %v1584 = vunpack.c.l.b16 %v1458
        %v1585 = vunpack.c.l.b16 %v1459
        %v1586 = vunpack.c.l.b16 %v1460
        %v1587 = vunpack.c.h.b16 %v1455
        %v1588 = vunpack.c.h.b16 %v1456
        %v1589 = vunpack.c.h.b16 %v1457
        %v1590 = vunpack.c.h.b16 %v1458
        %v1591 = vunpack.c.h.b16 %v1459
        %v1592 = vunpack.c.h.b16 %v1460
        %v1593 = vunpack.c.l.b16 %v1461
        %v1594 = vunpack.c.l.b16 %v1462
        %v1595 = vunpack.c.l.b16 %v1463
        %v1596 = vunpack.c.l.b16 %v1464
        %v1597 = vunpack.c.l.b16 %v1465
        %v1598 = vunpack.c.l.b16 %v1466
        %v1599 = vunpack.c.h.b16 %v1461
        %v1600 = vunpack.c.h.b16 %v1462
        %v1601 = vunpack.c.h.b16 %v1463
        %v1602 = vunpack.c.h.b16 %v1464
        %v1603 = vunpack.c.h.b16 %v1465
        %v1604 = vunpack.c.h.b16 %v1466
        %v1605 = vunpack.c.l.b16 %v1467
        %v1606 = vunpack.c.l.b16 %v1468
        %v1607 = vunpack.c.l.b16 %v1469
        %v1608 = vunpack.c.l.b16 %v1470
        %v1609 = vunpack.c.l.b16 %v1471
        %v1610 = vunpack.c.l.b16 %v1472
        %v1611 = vunpack.c.h.b16 %v1467
        %v1612 = vunpack.c.h.b16 %v1468
        %v1613 = vunpack.c.h.b16 %v1469
        %v1614 = vunpack.c.h.b16 %v1470
        %v1615 = vunpack.c.h.b16 %v1471
        %v1616 = vunpack.c.h.b16 %v1472
        %v1617 = vpack.c.b16 %v1522, %v1521
        %v1618 = vpack.c.b16 %v1524, %v1523
        %v1619 = vpack.c.b16 %v1526, %v1525
        %v1620 = vpack.c.b16 %v1528, %v1527
        %v1621 = vpack.c.b16 %v1530, %v1529
        %v1622 = vpack.c.b16 %v1532, %v1531
        %v1623 = vpack.c.b16 %v1534, %v1533
        %v1624 = vpack.c.b16 %v1536, %v1535
        %v1625 = vpack.c.b16 %v1538, %v1537
        %v1626 = vpack.c.b16 %v1540, %v1539
        %v1627 = vpack.c.b16 %v1542, %v1541
        %v1628 = vpack.c.b16 %v1544, %v1543
        %v1629 = vpack.c.b16 %v1546, %v1545
        %v1630 = vpack.c.b16 %v1548, %v1547
        %v1631 = vpack.c.b16 %v1550, %v1549
        %v1632 = vpack.c.b16 %v1552, %v1551
        %v1633 = vpack.c.b16 %v1554, %v1553
        %v1634 = vpack.c.b16 %v1556, %v1555
        %v1635 = vpack.c.b16 %v1558, %v1557
        %v1636 = vpack.c.b16 %v1560, %v1559
        %v1637 = vpack.c.b16 %v1562, %v1561
        %v1638 = vpack.c.b16 %v1564, %v1563
        %v1639 = vpack.c.b16 %v1566, %v1565
        %v1640 = vpack.c.b16 %v1568, %v1567
        %v1641 = vpack.c.b16 %v1570, %v1569
        %v1642 = vpack.c.b16 %v1572, %v1571
        %v1643 = vpack.c.b16 %v1574, %v1573
        %v1644 = vpack.c.b16 %v1576, %v1575
        %v1645 = vpack.c.b16 %v1578, %v1577
        %v1646 = vpack.c.b16 %v1580, %v1579
        %v1647 = vpack.c.b16 %v1582, %v1581
        %v1648 = vpack.c.b16 %v1584, %v1583
        %v1649 = vpack.c.b16 %v1586, %v1585
        %v1650 = vpack.c.b16 %v1588, %v1587
        %v1651 = vpack.c.b16 %v1590, %v1589
        %v1652 = vpack.c.b16 %v1592, %v1591
        %v1653 = vpack.c.b16 %v1594, %v1593
        %v1654 = vpack.c.b16 %v1596, %v1595
        %v1655 = vpack.c.b16 %v1598, %v1597
        %v1656 = vpack.c.b16 %v1600, %v1599
        %v1657 = vpack.c.b16 %v1602, %v1601
        %v1658 = vpack.c.b16 %v1604, %v1603
        %v1659 = vpack.c.b16 %v1606, %v1605
        %v1660 = vpack.c.b16 %v1608, %v1607
        %v1661 = vpack.c.b16 %v1610, %v1609
        %v1662 = vpack.c.b16 %v1612, %v1611
        %v1663 = vpack.c.b16 %v1614, %v1613
        %v1664 = vpack.c.b16 %v1616, %v1615
        %1713 = vst [vmem:[#allocation2] sm:$0xff] %v1617
        %1714 = vst [vmem:[#allocation2 + $0x8] sm:$0xff] %v1618
        %1715 = vst [vmem:[#allocation2 + $0x10] sm:$0xff] %v1619
        %1716 = vst [vmem:[#allocation2 + $0x18] sm:$0xff] %v1620
        %1717 = vst [vmem:[#allocation2 + $0x20] sm:$0xff] %v1621
        %1718 = vst [vmem:[#allocation2 + $0x28] sm:$0xff] %v1622
        %1719 = vst [vmem:[#allocation2 + $0x30] sm:$0xff] %v1623
        %1720 = vst [vmem:[#allocation2 + $0x38] sm:$0xff] %v1624
        %1721 = vst [vmem:[#allocation2 + $0x40] sm:$0xff] %v1625
        %1722 = vst [vmem:[#allocation2 + $0x48] sm:$0xff] %v1626
        %1723 = vst [vmem:[#allocation2 + $0x50] sm:$0xff] %v1627
        %1724 = vst [vmem:[#allocation2 + $0x58] sm:$0xff] %v1628
        %1725 = vst [vmem:[#allocation2 + $0x60] sm:$0xff] %v1629
        %1726 = vst [vmem:[#allocation2 + $0x68] sm:$0xff] %v1630
        %1727 = vst [vmem:[#allocation2 + $0x70] sm:$0xff] %v1631
        %1728 = vst [vmem:[#allocation2 + $0x78] sm:$0xff] %v1632
        %1729 = vst [vmem:[#allocation2 + $0x80] sm:$0xff] %v1633
        %1730 = vst [vmem:[#allocation2 + $0x88] sm:$0xff] %v1634
        %1731 = vst [vmem:[#allocation2 + $0x90] sm:$0xff] %v1635
        %1732 = vst [vmem:[#allocation2 + $0x98] sm:$0xff] %v1636
        %1733 = vst [vmem:[#allocation2 + $0xa0] sm:$0xff] %v1637
        %1734 = vst [vmem:[#allocation2 + $0xa8] sm:$0xff] %v1638
        %1735 = vst [vmem:[#allocation2 + $0xb0] sm:$0xff] %v1639
        %1736 = vst [vmem:[#allocation2 + $0xb8] sm:$0xff] %v1640
        %1737 = vst [vmem:[#allocation2 + $0xc0] sm:$0xff] %v1641
        %1738 = vst [vmem:[#allocation2 + $0xc8] sm:$0xff] %v1642
        %1739 = vst [vmem:[#allocation2 + $0xd0] sm:$0xff] %v1643
        %1740 = vst [vmem:[#allocation2 + $0xd8] sm:$0xff] %v1644
        %1741 = vst [vmem:[#allocation2 + $0xe0] sm:$0xff] %v1645
        %1742 = vst [vmem:[#allocation2 + $0xe8] sm:$0xff] %v1646
        %1743 = vst [vmem:[#allocation2 + $0xf0] sm:$0xff] %v1647
        %1744 = vst [vmem:[#allocation2 + $0xf8] sm:$0xff] %v1648
        %1745 = vst [vmem:[#allocation2 + $0x100] sm:$0xff] %v1649
        %1746 = vst [vmem:[#allocation2 + $0x108] sm:$0xff] %v1650
        %1747 = vst [vmem:[#allocation2 + $0x110] sm:$0xff] %v1651
        %1748 = vst [vmem:[#allocation2 + $0x118] sm:$0xff] %v1652
        %1749 = vst [vmem:[#allocation2 + $0x120] sm:$0xff] %v1653
        %1750 = vst [vmem:[#allocation2 + $0x128] sm:$0xff] %v1654
        %1751 = vst [vmem:[#allocation2 + $0x130] sm:$0xff] %v1655
        %1752 = vst [vmem:[#allocation2 + $0x138] sm:$0xff] %v1656
        %1753 = vst [vmem:[#allocation2 + $0x140] sm:$0xff] %v1657
        %1754 = vst [vmem:[#allocation2 + $0x148] sm:$0xff] %v1658
        %1755 = vst [vmem:[#allocation2 + $0x150] sm:$0xff] %v1659
        %1756 = vst [vmem:[#allocation2 + $0x158] sm:$0xff] %v1660
        %1757 = vst [vmem:[#allocation2 + $0x160] sm:$0xff] %v1661
        %1758 = vst [vmem:[#allocation2 + $0x168] sm:$0xff] %v1662
        %1759 = vst [vmem:[#allocation2 + $0x170] sm:$0xff] %v1663
        %1760 = vst [vmem:[#allocation2 + $0x178] sm:$0xff] %v1664
        %v1761 = vld [vmem:[#allocation2] sm:$0xf]
        %v1762 = vld [vmem:[#allocation2 + $0x18] sm:$0xf]
        %v1763 = vld [vmem:[#allocation2 + $0x30] sm:$0xf]
        %v1764 = vld [vmem:[#allocation2 + $0x48] sm:$0xf]
        %v1765 = vld [vmem:[#allocation2 + $0x60] sm:$0xf]
        %v1766 = vld [vmem:[#allocation2 + $0x78] sm:$0xf]
        %v1767 = vld [vmem:[#allocation2 + $0x90] sm:$0xf]
        %v1768 = vld [vmem:[#allocation2 + $0xa8] sm:$0xf]
        %v1769 = vld [vmem:[#allocation2 + $0xc0] sm:$0xf]
        %v1770 = vld [vmem:[#allocation2 + $0xd8] sm:$0xf]
        %v1771 = vld [vmem:[#allocation2 + $0xf0] sm:$0xf]
        %v1772 = vld [vmem:[#allocation2 + $0x108] sm:$0xf]
        %v1773 = vld [vmem:[#allocation2 + $0x120] sm:$0xf]
        %v1774 = vld [vmem:[#allocation2 + $0x138] sm:$0xf]
        %v1775 = vld [vmem:[#allocation2 + $0x150] sm:$0xf]
        %v1776 = vld [vmem:[#allocation2 + $0x168] sm:$0xf]
        %v1777 = vld [vmem:[#allocation2 + $0x8] sm:$0xf]
        %v1778 = vld [vmem:[#allocation2 + $0x20] sm:$0xf]
        %v1779 = vld [vmem:[#allocation2 + $0x38] sm:$0xf]
        %v1780 = vld [vmem:[#allocation2 + $0x50] sm:$0xf]
        %v1781 = vld [vmem:[#allocation2 + $0x68] sm:$0xf]
        %v1782 = vld [vmem:[#allocation2 + $0x80] sm:$0xf]
        %v1783 = vld [vmem:[#allocation2 + $0x98] sm:$0xf]
        %v1784 = vld [vmem:[#allocation2 + $0xb0] sm:$0xf]
        %v1785 = vld [vmem:[#allocation2 + $0xc8] sm:$0xf]
        %v1786 = vld [vmem:[#allocation2 + $0xe0] sm:$0xf]
        %v1787 = vld [vmem:[#allocation2 + $0xf8] sm:$0xf]
        %v1788 = vld [vmem:[#allocation2 + $0x110] sm:$0xf]
        %v1789 = vld [vmem:[#allocation2 + $0x128] sm:$0xf]
        %v1790 = vld [vmem:[#allocation2 + $0x140] sm:$0xf]
        %v1791 = vld [vmem:[#allocation2 + $0x158] sm:$0xf]
        %v1792 = vld [vmem:[#allocation2 + $0x170] sm:$0xf]
        %v1793 = vld [vmem:[#allocation2 + $0x10] sm:$0xf]
        %v1794 = vld [vmem:[#allocation2 + $0x28] sm:$0xf]
        %v1795 = vld [vmem:[#allocation2 + $0x40] sm:$0xf]
        %v1796 = vld [vmem:[#allocation2 + $0x58] sm:$0xf]
        %v1797 = vld [vmem:[#allocation2 + $0x70] sm:$0xf]
        %v1798 = vld [vmem:[#allocation2 + $0x88] sm:$0xf]
        %v1799 = vld [vmem:[#allocation2 + $0xa0] sm:$0xf]
        %v1800 = vld [vmem:[#allocation2 + $0xb8] sm:$0xf]
        %v1801 = vld [vmem:[#allocation2 + $0xd0] sm:$0xf]
        %v1802 = vld [vmem:[#allocation2 + $0xe8] sm:$0xf]
        %v1803 = vld [vmem:[#allocation2 + $0x100] sm:$0xf]
        %v1804 = vld [vmem:[#allocation2 + $0x118] sm:$0xf]
        %v1805 = vld [vmem:[#allocation2 + $0x130] sm:$0xf]
        %v1806 = vld [vmem:[#allocation2 + $0x148] sm:$0xf]
        %v1807 = vld [vmem:[#allocation2 + $0x160] sm:$0xf]
        %v1808 = vld [vmem:[#allocation2 + $0x178] sm:$0xf]
        %v1825 = vunpack.c.l.b16 %v1761
        %v1826 = vunpack.c.l.b16 %v1762
        %v1827 = vunpack.c.l.b16 %v1763
        %v1828 = vunpack.c.l.b16 %v1764
        %v1829 = vunpack.c.l.b16 %v1765
        %v1830 = vunpack.c.l.b16 %v1766
        %v1831 = vunpack.c.l.b16 %v1767
        %v1832 = vunpack.c.l.b16 %v1768
        %v1833 = vunpack.c.l.b16 %v1769
        %v1834 = vunpack.c.l.b16 %v1770
        %v1835 = vunpack.c.l.b16 %v1771
        %v1836 = vunpack.c.l.b16 %v1772
        %v1837 = vunpack.c.l.b16 %v1773
        %v1838 = vunpack.c.l.b16 %v1774
        %v1839 = vunpack.c.l.b16 %v1775
        %v1840 = vunpack.c.l.b16 %v1776
        %v1841 = vpack.c.b16 %v1826, %v1825
        %v1842 = vpack.c.b16 %v1828, %v1827
        %v1843 = vpack.c.b16 %v1830, %v1829
        %v1844 = vpack.c.b16 %v1832, %v1831
        %v1845 = vpack.c.b16 %v1834, %v1833
        %v1846 = vpack.c.b16 %v1836, %v1835
        %v1847 = vpack.c.b16 %v1838, %v1837
        %v1848 = vpack.c.b16 %v1840, %v1839
        %v1873 = vunpack.c.l.b16 %v1777
        %v1874 = vunpack.c.l.b16 %v1778
        %v1875 = vunpack.c.l.b16 %v1779
        %v1876 = vunpack.c.l.b16 %v1780
        %v1877 = vunpack.c.l.b16 %v1781
        %v1878 = vunpack.c.l.b16 %v1782
        %v1879 = vunpack.c.l.b16 %v1783
        %v1880 = vunpack.c.l.b16 %v1784
        %v1881 = vunpack.c.l.b16 %v1785
        %v1882 = vunpack.c.l.b16 %v1786
        %v1883 = vunpack.c.l.b16 %v1787
        %v1884 = vunpack.c.l.b16 %v1788
        %v1885 = vunpack.c.l.b16 %v1789
        %v1886 = vunpack.c.l.b16 %v1790
        %v1887 = vunpack.c.l.b16 %v1791
        %v1888 = vunpack.c.l.b16 %v1792
        %v1889 = vpack.c.b16 %v1874, %v1873
        %v1890 = vpack.c.b16 %v1876, %v1875
        %v1891 = vpack.c.b16 %v1878, %v1877
        %v1892 = vpack.c.b16 %v1880, %v1879
        %v1893 = vpack.c.b16 %v1882, %v1881
        %v1894 = vpack.c.b16 %v1884, %v1883
        %v1895 = vpack.c.b16 %v1886, %v1885
        %v1896 = vpack.c.b16 %v1888, %v1887
        %1905 = vmatprep.subr.bf16.mxu0 0
        %1906 = vmatpush1.bf16.xpose.msra.mxu0 %v1896
        %1907 = vmatprep.subr.bf16.mxu0 0
        %1908 = vmatpush1.bf16.xpose.msra.mxu0 %v1895
        %1909 = vmatprep.subr.bf16.mxu0 0
        %1910 = vmatpush1.bf16.xpose.msra.mxu0 %v1894
        %1911 = vmatprep.subr.bf16.mxu0 0
        %1912 = vmatpush1.bf16.xpose.msra.mxu0 %v1893
        %1913 = vmatprep.subr.bf16.mxu0 0
        %1914 = vmatpush1.bf16.xpose.msra.mxu0 %v1892
        %1915 = vmatprep.subr.bf16.mxu0 0
        %1916 = vmatpush1.bf16.xpose.msra.mxu0 %v1891
        %1917 = vmatprep.subr.bf16.mxu0 0
        %1918 = vmatpush1.bf16.xpose.msra.mxu0 %v1890
        %1919 = vmatprep.subr.bf16.mxu0 0
        %1920 = vmatpush1.bf16.xpose.msra.mxu0 %v1889
        %1921 = vmatprep.subr.bf16.mxu0 0
        %1922 = vmatpush2.bf16.xpose.msra.mxu0 0
        %1923 = vmatprep.subr.bf16.mxu0 0
        %1924 = vmatpush2.bf16.xpose.msra.mxu0 0
        %1925 = vmatprep.subr.bf16.mxu0 0
        %1926 = vmatpush2.bf16.xpose.msra.mxu0 0
        %1927 = vmatprep.subr.bf16.mxu0 0
        %1928 = vmatpush2.bf16.xpose.msra.mxu0 0
        %1929 = vmatprep.subr.bf16.mxu0 0
        %1930 = vmatpush2.bf16.xpose.msra.mxu0 0
        %1931 = vmatprep.subr.bf16.mxu0 0
        %1932 = vmatpush2.bf16.xpose.msra.mxu0 0
        %1933 = vmatprep.subr.bf16.mxu0 0
        %1934 = vmatpush2.bf16.xpose.msra.mxu0 0
        %1935 = vmatprep.subr.bf16.mxu0 0
        %1936 = vmatpush2.bf16.xpose.msra.mxu0 0
        %1937 = vmatprep.mubr.bf16.mxu0 0
        %1938 = vmatmul.mubr.bf16.gmra.mxu0 %v1841
        %v1939 = vpop.f32.mrf.mxu0
        %v1940 = vadd.f32 0.0, %v1939
        %v1941 = vpop.f32.mrf.mxu0
        %v1942 = vpop.f32.mrf.mxu0
        %v1943 = vadd.f32 0.0, %v1942
        %v1944 = vpop.f32.mrf.mxu0
        %1945 = vmatprep.mubr.bf16.mxu0 0
        %1946 = vmatmul.mubr.bf16.gmra.mxu0 %v1842
        %v1947 = vpop.f32.mrf.mxu0
        %v1948 = vadd.f32 0.0, %v1947
        %v1949 = vpop.f32.mrf.mxu0
        %v1950 = vpop.f32.mrf.mxu0
        %v1951 = vadd.f32 0.0, %v1950
        %v1952 = vpop.f32.mrf.mxu0
        %1953 = vmatprep.mubr.bf16.mxu0 0
        %1954 = vmatmul.mubr.bf16.gmra.mxu0 %v1843
        %v1955 = vpop.f32.mrf.mxu0
        %v1956 = vadd.f32 0.0, %v1955
        %v1957 = vpop.f32.mrf.mxu0
        %v1958 = vpop.f32.mrf.mxu0
        %v1959 = vadd.f32 0.0, %v1958
        %v1960 = vpop.f32.mrf.mxu0
        %1961 = vmatprep.mubr.bf16.mxu0 0
        %1962 = vmatmul.mubr.bf16.gmra.mxu0 %v1844
        %v1963 = vpop.f32.mrf.mxu0
        %v1964 = vadd.f32 0.0, %v1963
        %v1965 = vpop.f32.mrf.mxu0
        %v1966 = vpop.f32.mrf.mxu0
        %v1967 = vadd.f32 0.0, %v1966
        %v1968 = vpop.f32.mrf.mxu0
        %1969 = vmatprep.mubr.bf16.mxu0 0
        %1970 = vmatmul.mubr.bf16.gmra.mxu0 %v1845
        %v1971 = vpop.f32.mrf.mxu0
        %v1972 = vadd.f32 0.0, %v1971
        %v1973 = vpop.f32.mrf.mxu0
        %v1974 = vpop.f32.mrf.mxu0
        %v1975 = vadd.f32 0.0, %v1974
        %v1976 = vpop.f32.mrf.mxu0
        %1977 = vmatprep.mubr.bf16.mxu0 0
        %1978 = vmatmul.mubr.bf16.gmra.mxu0 %v1846
        %v1979 = vpop.f32.mrf.mxu0
        %v1980 = vadd.f32 0.0, %v1979
        %v1981 = vpop.f32.mrf.mxu0
        %v1982 = vpop.f32.mrf.mxu0
        %v1983 = vadd.f32 0.0, %v1982
        %v1984 = vpop.f32.mrf.mxu0
        %1985 = vmatprep.mubr.bf16.mxu0 0
        %1986 = vmatmul.mubr.bf16.gmra.mxu0 %v1847
        %v1987 = vpop.f32.mrf.mxu0
        %v1988 = vadd.f32 0.0, %v1987
        %v1989 = vpop.f32.mrf.mxu0
        %v1990 = vpop.f32.mrf.mxu0
        %v1991 = vadd.f32 0.0, %v1990
        %v1992 = vpop.f32.mrf.mxu0
        %1993 = vmatprep.mubr.bf16.mxu0 0
        %1994 = vmatmul.mubr.bf16.gmra.mxu0 %v1848
        %v1995 = vpop.f32.mrf.mxu0
        %v1996 = vadd.f32 0.0, %v1995
        %v1997 = vpop.f32.mrf.mxu0
        %v1998 = vpop.f32.mrf.mxu0
        %v1999 = vadd.f32 0.0, %v1998
        %v2000 = vpop.f32.mrf.mxu0
        %2001 = vdwg.mxu0
        %2002 = vmax.xlane.f32.xlu0 %v1940
        %v2003 = vpop.xlane.xlu0 %2002
        %2004 = vmax.xlane.f32.xlu0 %v1943
        %v2005 = vpop.xlane.xlu0 %2004
        %2006 = vmax.xlane.f32.xlu0 %v1948
        %v2007 = vpop.xlane.xlu0 %2006
        %2008 = vmax.xlane.f32.xlu0 %v1951
        %v2009 = vpop.xlane.xlu0 %2008
        %2010 = vmax.xlane.f32.xlu0 %v1956
        %v2011 = vpop.xlane.xlu0 %2010
        %2012 = vmax.xlane.f32.xlu0 %v1959
        %v2013 = vpop.xlane.xlu0 %2012
        %2014 = vmax.xlane.f32.xlu0 %v1964
        %v2015 = vpop.xlane.xlu0 %2014
        %2016 = vmax.xlane.f32.xlu0 %v1967
        %v2017 = vpop.xlane.xlu0 %2016
        %2018 = vmax.xlane.f32.xlu0 %v1972
        %v2019 = vpop.xlane.xlu0 %2018
        %2020 = vmax.xlane.f32.xlu0 %v1975
        %v2021 = vpop.xlane.xlu0 %2020
        %2022 = vmax.xlane.f32.xlu0 %v1980
        %v2023 = vpop.xlane.xlu0 %2022
        %2024 = vmax.xlane.f32.xlu0 %v1983
        %v2025 = vpop.xlane.xlu0 %2024
        %2026 = vmax.xlane.f32.xlu0 %v1988
        %v2027 = vpop.xlane.xlu0 %2026
        %2028 = vmax.xlane.f32.xlu0 %v1991
        %v2029 = vpop.xlane.xlu0 %2028
        %2030 = vmax.xlane.f32.xlu0 %v1996
        %v2031 = vpop.xlane.xlu0 %2030
        %2032 = vmax.xlane.f32.xlu0 %v1999
        %v2033 = vpop.xlane.xlu0 %2032
        %v2034 = vsub.f32 %v1940, %v2003
        %v2035 = vsub.f32 %v1943, %v2005
        %v2036 = vsub.f32 %v1948, %v2007
        %v2037 = vsub.f32 %v1951, %v2009
        %v2038 = vsub.f32 %v1956, %v2011
        %v2039 = vsub.f32 %v1959, %v2013
        %v2040 = vsub.f32 %v1964, %v2015
        %v2041 = vsub.f32 %v1967, %v2017
        %v2042 = vsub.f32 %v1972, %v2019
        %v2043 = vsub.f32 %v1975, %v2021
        %v2044 = vsub.f32 %v1980, %v2023
        %v2045 = vsub.f32 %v1983, %v2025
        %v2046 = vsub.f32 %v1988, %v2027
        %v2047 = vsub.f32 %v1991, %v2029
        %v2048 = vsub.f32 %v1996, %v2031
        %v2049 = vsub.f32 %v1999, %v2033
        %v2050 = vmul.f32 %v2034, 1.442695
        %v2051 = vpow.pop %v2050
        %v2052 = vmul.f32 %v2035, 1.442695
        %v2053 = vpow.pop %v2052
        %v2054 = vmul.f32 %v2036, 1.442695
        %v2055 = vpow.pop %v2054
        %v2056 = vmul.f32 %v2037, 1.442695
        %v2057 = vpow.pop %v2056
        %v2058 = vmul.f32 %v2038, 1.442695
        %v2059 = vpow.pop %v2058
        %v2060 = vmul.f32 %v2039, 1.442695
        %v2061 = vpow.pop %v2060
        %v2062 = vmul.f32 %v2040, 1.442695
        %v2063 = vpow.pop %v2062
        %v2064 = vmul.f32 %v2041, 1.442695
        %v2065 = vpow.pop %v2064
        %v2066 = vmul.f32 %v2042, 1.442695
        %v2067 = vpow.pop %v2066
        %v2068 = vmul.f32 %v2043, 1.442695
        %v2069 = vpow.pop %v2068
        %v2070 = vmul.f32 %v2044, 1.442695
        %v2071 = vpow.pop %v2070
        %v2072 = vmul.f32 %v2045, 1.442695
        %v2073 = vpow.pop %v2072
        %v2074 = vmul.f32 %v2046, 1.442695
        %v2075 = vpow.pop %v2074
        %v2076 = vmul.f32 %v2047, 1.442695
        %v2077 = vpow.pop %v2076
        %v2078 = vmul.f32 %v2048, 1.442695
        %v2079 = vpow.pop %v2078
        %v2080 = vmul.f32 %v2049, 1.442695
        %v2081 = vpow.pop %v2080
        %2082 = vadd.xlane.f32.xlu0 %v2051
        %v2083 = vpop.xlane.xlu0 %2082
        %2084 = vadd.xlane.f32.xlu0 %v2053
        %v2085 = vpop.xlane.xlu0 %2084
        %2086 = vadd.xlane.f32.xlu0 %v2055
        %v2087 = vpop.xlane.xlu0 %2086
        %2088 = vadd.xlane.f32.xlu0 %v2057
        %v2089 = vpop.xlane.xlu0 %2088
        %2090 = vadd.xlane.f32.xlu0 %v2059
        %v2091 = vpop.xlane.xlu0 %2090
        %2092 = vadd.xlane.f32.xlu0 %v2061
        %v2093 = vpop.xlane.xlu0 %2092
        %2094 = vadd.xlane.f32.xlu0 %v2063
        %v2095 = vpop.xlane.xlu0 %2094
        %2096 = vadd.xlane.f32.xlu0 %v2065
        %v2097 = vpop.xlane.xlu0 %2096
        %2098 = vadd.xlane.f32.xlu0 %v2067
        %v2099 = vpop.xlane.xlu0 %2098
        %2100 = vadd.xlane.f32.xlu0 %v2069
        %v2101 = vpop.xlane.xlu0 %2100
        %2102 = vadd.xlane.f32.xlu0 %v2071
        %v2103 = vpop.xlane.xlu0 %2102
        %2104 = vadd.xlane.f32.xlu0 %v2073
        %v2105 = vpop.xlane.xlu0 %2104
        %2106 = vadd.xlane.f32.xlu0 %v2075
        %v2107 = vpop.xlane.xlu0 %2106
        %2108 = vadd.xlane.f32.xlu0 %v2077
        %v2109 = vpop.xlane.xlu0 %2108
        %2110 = vadd.xlane.f32.xlu0 %v2079
        %v2111 = vpop.xlane.xlu0 %2110
        %2112 = vadd.xlane.f32.xlu0 %v2081
        %v2113 = vpop.xlane.xlu0 %2112
        %v2114 = vrcp.pop %v2083
        %v2115 = vrcp.pop %v2085
        %v2116 = vrcp.pop %v2087
        %v2117 = vrcp.pop %v2089
        %v2118 = vrcp.pop %v2091
        %v2119 = vrcp.pop %v2093
        %v2120 = vrcp.pop %v2095
        %v2121 = vrcp.pop %v2097
        %v2122 = vrcp.pop %v2099
        %v2123 = vrcp.pop %v2101
        %v2124 = vrcp.pop %v2103
        %v2125 = vrcp.pop %v2105
        %v2126 = vrcp.pop %v2107
        %v2127 = vrcp.pop %v2109
        %v2128 = vrcp.pop %v2111
        %v2129 = vrcp.pop %v2113
        %v2130 = vmul.f32 %v2051, %v2114
        %v2131 = vmul.f32 %v2053, %v2115
        %v2132 = vmul.f32 %v2055, %v2116
        %v2133 = vmul.f32 %v2057, %v2117
        %v2134 = vmul.f32 %v2059, %v2118
        %v2135 = vmul.f32 %v2061, %v2119
        %v2136 = vmul.f32 %v2063, %v2120
        %v2137 = vmul.f32 %v2065, %v2121
        %v2138 = vmul.f32 %v2067, %v2122
        %v2139 = vmul.f32 %v2069, %v2123
        %v2140 = vmul.f32 %v2071, %v2124
        %v2141 = vmul.f32 %v2073, %v2125
        %v2142 = vmul.f32 %v2075, %v2126
        %v2143 = vmul.f32 %v2077, %v2127
        %v2144 = vmul.f32 %v2079, %v2128
        %v2145 = vmul.f32 %v2081, %v2129
        %v2146 = vpack.c.bf16 %v2131, %v2130
        %v2147 = vpack.c.bf16 %v2133, %v2132
        %v2148 = vpack.c.bf16 %v2135, %v2134
        %v2149 = vpack.c.bf16 %v2137, %v2136
        %v2150 = vpack.c.bf16 %v2139, %v2138
        %v2151 = vpack.c.bf16 %v2141, %v2140
        %v2152 = vpack.c.bf16 %v2143, %v2142
        %v2153 = vpack.c.bf16 %v2145, %v2144
        %v2170 = vunpack.c.l.b16 %v1793
        %v2171 = vunpack.c.l.b16 %v1794
        %v2172 = vunpack.c.l.b16 %v1795
        %v2173 = vunpack.c.l.b16 %v1796
        %v2174 = vunpack.c.l.b16 %v1797
        %v2175 = vunpack.c.l.b16 %v1798
        %v2176 = vunpack.c.l.b16 %v1799
        %v2177 = vunpack.c.l.b16 %v1800
        %v2178 = vunpack.c.l.b16 %v1801
        %v2179 = vunpack.c.l.b16 %v1802
        %v2180 = vunpack.c.l.b16 %v1803
        %v2181 = vunpack.c.l.b16 %v1804
        %v2182 = vunpack.c.l.b16 %v1805
        %v2183 = vunpack.c.l.b16 %v1806
        %v2184 = vunpack.c.l.b16 %v1807
        %v2185 = vunpack.c.l.b16 %v1808
        %v2186 = vpack.c.b16 %v2171, %v2170
        %v2187 = vpack.c.b16 %v2173, %v2172
        %v2188 = vpack.c.b16 %v2175, %v2174
        %v2189 = vpack.c.b16 %v2177, %v2176
        %v2190 = vpack.c.b16 %v2179, %v2178
        %v2191 = vpack.c.b16 %v2181, %v2180
        %v2192 = vpack.c.b16 %v2183, %v2182
        %v2193 = vpack.c.b16 %v2185, %v2184
        %2202 = vmatprep.subr.bf16.mxu0 0
        %2203 = vmatpush1.bf16.msra.mxu0 %v2193
        %2204 = vmatprep.subr.bf16.mxu0 0
        %2205 = vmatpush1.bf16.msra.mxu0 %v2192
        %2206 = vmatprep.subr.bf16.mxu0 0
        %2207 = vmatpush1.bf16.msra.mxu0 %v2191
        %2208 = vmatprep.subr.bf16.mxu0 0
        %2209 = vmatpush1.bf16.msra.mxu0 %v2190
        %2210 = vmatprep.subr.bf16.mxu0 0
        %2211 = vmatpush1.bf16.msra.mxu0 %v2189
        %2212 = vmatprep.subr.bf16.mxu0 0
        %2213 = vmatpush1.bf16.msra.mxu0 %v2188
        %2214 = vmatprep.subr.bf16.mxu0 0
        %2215 = vmatpush1.bf16.msra.mxu0 %v2187
        %2216 = vmatprep.subr.bf16.mxu0 0
        %2217 = vmatpush1.bf16.msra.mxu0 %v2186
        %2218 = vmatprep.subr.bf16.mxu0 0
        %2219 = vmatpush2.bf16.msra.mxu0 0
        %2220 = vmatprep.subr.bf16.mxu0 0
        %2221 = vmatpush2.bf16.msra.mxu0 0
        %2222 = vmatprep.subr.bf16.mxu0 0
        %2223 = vmatpush2.bf16.msra.mxu0 0
        %2224 = vmatprep.subr.bf16.mxu0 0
        %2225 = vmatpush2.bf16.msra.mxu0 0
        %2226 = vmatprep.subr.bf16.mxu0 0
        %2227 = vmatpush2.bf16.msra.mxu0 0
        %2228 = vmatprep.subr.bf16.mxu0 0
        %2229 = vmatpush2.bf16.msra.mxu0 0
        %2230 = vmatprep.subr.bf16.mxu0 0
        %2231 = vmatpush2.bf16.msra.mxu0 0
        %2232 = vmatprep.subr.bf16.mxu0 0
        %2233 = vmatpush2.bf16.msra.mxu0 0
        %2234 = vmatprep.mubr.bf16.mxu0 0
        %2235 = vmatmul.mubr.bf16.gmra.mxu0 %v2146
        %v2236 = vpop.f32.mrf.mxu0
        %v2237 = vadd.f32 0.0, %v2236
        %v2238 = vpop.f32.mrf.mxu0
        %v2239 = vpop.f32.mrf.mxu0
        %v2240 = vadd.f32 0.0, %v2239
        %v2241 = vpop.f32.mrf.mxu0
        %2242 = vmatprep.mubr.bf16.mxu0 0
        %2243 = vmatmul.mubr.bf16.gmra.mxu0 %v2147
        %v2244 = vpop.f32.mrf.mxu0
        %v2245 = vadd.f32 0.0, %v2244
        %v2246 = vpop.f32.mrf.mxu0
        %v2247 = vpop.f32.mrf.mxu0
        %v2248 = vadd.f32 0.0, %v2247
        %v2249 = vpop.f32.mrf.mxu0
        %2250 = vmatprep.mubr.bf16.mxu0 0
        %2251 = vmatmul.mubr.bf16.gmra.mxu0 %v2148
        %v2252 = vpop.f32.mrf.mxu0
        %v2253 = vadd.f32 0.0, %v2252
        %v2254 = vpop.f32.mrf.mxu0
        %v2255 = vpop.f32.mrf.mxu0
        %v2256 = vadd.f32 0.0, %v2255
        %v2257 = vpop.f32.mrf.mxu0
        %2258 = vmatprep.mubr.bf16.mxu0 0
        %2259 = vmatmul.mubr.bf16.gmra.mxu0 %v2149
        %v2260 = vpop.f32.mrf.mxu0
        %v2261 = vadd.f32 0.0, %v2260
        %v2262 = vpop.f32.mrf.mxu0
        %v2263 = vpop.f32.mrf.mxu0
        %v2264 = vadd.f32 0.0, %v2263
        %v2265 = vpop.f32.mrf.mxu0
        %2266 = vmatprep.mubr.bf16.mxu0 0
        %2267 = vmatmul.mubr.bf16.gmra.mxu0 %v2150
        %v2268 = vpop.f32.mrf.mxu0
        %v2269 = vadd.f32 0.0, %v2268
        %v2270 = vpop.f32.mrf.mxu0
        %v2271 = vpop.f32.mrf.mxu0
        %v2272 = vadd.f32 0.0, %v2271
        %v2273 = vpop.f32.mrf.mxu0
        %2274 = vmatprep.mubr.bf16.mxu0 0
        %2275 = vmatmul.mubr.bf16.gmra.mxu0 %v2151
        %v2276 = vpop.f32.mrf.mxu0
        %v2277 = vadd.f32 0.0, %v2276
        %v2278 = vpop.f32.mrf.mxu0
        %v2279 = vpop.f32.mrf.mxu0
        %v2280 = vadd.f32 0.0, %v2279
        %v2281 = vpop.f32.mrf.mxu0
        %2282 = vmatprep.mubr.bf16.mxu0 0
        %2283 = vmatmul.mubr.bf16.gmra.mxu0 %v2152
        %v2284 = vpop.f32.mrf.mxu0
        %v2285 = vadd.f32 0.0, %v2284
        %v2286 = vpop.f32.mrf.mxu0
        %v2287 = vpop.f32.mrf.mxu0
        %v2288 = vadd.f32 0.0, %v2287
        %v2289 = vpop.f32.mrf.mxu0
        %2290 = vmatprep.mubr.bf16.mxu0 0
        %2291 = vmatmul.mubr.bf16.gmra.mxu0 %v2153
        %v2292 = vpop.f32.mrf.mxu0
        %v2293 = vadd.f32 0.0, %v2292
        %v2294 = vpop.f32.mrf.mxu0
        %v2295 = vpop.f32.mrf.mxu0
        %v2296 = vadd.f32 0.0, %v2295
        %v2297 = vpop.f32.mrf.mxu0
        %2298 = vdwg.mxu0
        %v2299 = vpack.c.bf16 %v2240, %v2237
        %v2300 = vpack.c.bf16 %v2248, %v2245
        %v2301 = vpack.c.bf16 %v2256, %v2253
        %v2302 = vpack.c.bf16 %v2264, %v2261
        %v2303 = vpack.c.bf16 %v2272, %v2269
        %v2304 = vpack.c.bf16 %v2280, %v2277
        %v2305 = vpack.c.bf16 %v2288, %v2285
        %v2306 = vpack.c.bf16 %v2296, %v2293
        %v2315 = vunpack.c.l.b16 %v2299
        %v2316 = vunpack.c.h.b16 %v2299
        %v2317 = vunpack.c.l.b16 %v2300
        %v2318 = vunpack.c.h.b16 %v2300
        %v2319 = vunpack.c.l.b16 %v2301
        %v2320 = vunpack.c.h.b16 %v2301
        %v2321 = vunpack.c.l.b16 %v2302
        %v2322 = vunpack.c.h.b16 %v2302
        %v2323 = vunpack.c.l.b16 %v2303
        %v2324 = vunpack.c.h.b16 %v2303
        %v2325 = vunpack.c.l.b16 %v2304
        %v2326 = vunpack.c.h.b16 %v2304
        %v2327 = vunpack.c.l.b16 %v2305
        %v2328 = vunpack.c.h.b16 %v2305
        %v2329 = vunpack.c.l.b16 %v2306
        %v2330 = vunpack.c.h.b16 %v2306
        %v2331 = vpack.c.b16 %v2315, %v2315
        %v2332 = vpack.c.b16 %v2316, %v2316
        %v2333 = vpack.c.b16 %v2317, %v2317
        %v2334 = vpack.c.b16 %v2318, %v2318
        %v2335 = vpack.c.b16 %v2319, %v2319
        %v2336 = vpack.c.b16 %v2320, %v2320
        %v2337 = vpack.c.b16 %v2321, %v2321
        %v2338 = vpack.c.b16 %v2322, %v2322
        %v2339 = vpack.c.b16 %v2323, %v2323
        %v2340 = vpack.c.b16 %v2324, %v2324
        %v2341 = vpack.c.b16 %v2325, %v2325
        %v2342 = vpack.c.b16 %v2326, %v2326
        %v2343 = vpack.c.b16 %v2327, %v2327
        %v2344 = vpack.c.b16 %v2328, %v2328
        %v2345 = vpack.c.b16 %v2329, %v2329
        %v2346 = vpack.c.b16 %v2330, %v2330
        %2363 = vst [vmem:[#allocation3] sm:$0xf] %v2331
        %2364 = vst [vmem:[#allocation3 + $0x8] sm:$0xf] %v2332
        %2365 = vst [vmem:[#allocation3 + $0x10] sm:$0xf] %v2333
        %2366 = vst [vmem:[#allocation3 + $0x18] sm:$0xf] %v2334
        %2367 = vst [vmem:[#allocation3 + $0x20] sm:$0xf] %v2335
        %2368 = vst [vmem:[#allocation3 + $0x28] sm:$0xf] %v2336
        %2369 = vst [vmem:[#allocation3 + $0x30] sm:$0xf] %v2337
        %2370 = vst [vmem:[#allocation3 + $0x38] sm:$0xf] %v2338
        %2371 = vst [vmem:[#allocation3 + $0x40] sm:$0xf] %v2339
        %2372 = vst [vmem:[#allocation3 + $0x48] sm:$0xf] %v2340
        %2373 = vst [vmem:[#allocation3 + $0x50] sm:$0xf] %v2341
        %2374 = vst [vmem:[#allocation3 + $0x58] sm:$0xf] %v2342
        %2375 = vst [vmem:[#allocation3 + $0x60] sm:$0xf] %v2343
        %2376 = vst [vmem:[#allocation3 + $0x68] sm:$0xf] %v2344
        %2377 = vst [vmem:[#allocation3 + $0x70] sm:$0xf] %v2345
        %2378 = vst [vmem:[#allocation3 + $0x78] sm:$0xf] %v2346
        %v2379 = vld [vmem:[#allocation2 + $0x4] sm:$0xf]
        %v2380 = vld [vmem:[#allocation2 + $0x1c] sm:$0xf]
        %v2381 = vld [vmem:[#allocation2 + $0x34] sm:$0xf]
        %v2382 = vld [vmem:[#allocation2 + $0x4c] sm:$0xf]
        %v2383 = vld [vmem:[#allocation2 + $0x64] sm:$0xf]
        %v2384 = vld [vmem:[#allocation2 + $0x7c] sm:$0xf]
        %v2385 = vld [vmem:[#allocation2 + $0x94] sm:$0xf]
        %v2386 = vld [vmem:[#allocation2 + $0xac] sm:$0xf]
        %v2387 = vld [vmem:[#allocation2 + $0xc4] sm:$0xf]
        %v2388 = vld [vmem:[#allocation2 + $0xdc] sm:$0xf]
        %v2389 = vld [vmem:[#allocation2 + $0xf4] sm:$0xf]
        %v2390 = vld [vmem:[#allocation2 + $0x10c] sm:$0xf]
        %v2391 = vld [vmem:[#allocation2 + $0x124] sm:$0xf]
        %v2392 = vld [vmem:[#allocation2 + $0x13c] sm:$0xf]
        %v2393 = vld [vmem:[#allocation2 + $0x154] sm:$0xf]
        %v2394 = vld [vmem:[#allocation2 + $0x16c] sm:$0xf]
        %v2395 = vld [vmem:[#allocation2 + $0xc] sm:$0xf]
        %v2396 = vld [vmem:[#allocation2 + $0x24] sm:$0xf]
        %v2397 = vld [vmem:[#allocation2 + $0x3c] sm:$0xf]
        %v2398 = vld [vmem:[#allocation2 + $0x54] sm:$0xf]
        %v2399 = vld [vmem:[#allocation2 + $0x6c] sm:$0xf]
        %v2400 = vld [vmem:[#allocation2 + $0x84] sm:$0xf]
        %v2401 = vld [vmem:[#allocation2 + $0x9c] sm:$0xf]
        %v2402 = vld [vmem:[#allocation2 + $0xb4] sm:$0xf]
        %v2403 = vld [vmem:[#allocation2 + $0xcc] sm:$0xf]
        %v2404 = vld [vmem:[#allocation2 + $0xe4] sm:$0xf]
        %v2405 = vld [vmem:[#allocation2 + $0xfc] sm:$0xf]
        %v2406 = vld [vmem:[#allocation2 + $0x114] sm:$0xf]
        %v2407 = vld [vmem:[#allocation2 + $0x12c] sm:$0xf]
        %v2408 = vld [vmem:[#allocation2 + $0x144] sm:$0xf]
        %v2409 = vld [vmem:[#allocation2 + $0x15c] sm:$0xf]
        %v2410 = vld [vmem:[#allocation2 + $0x174] sm:$0xf]
        %v2411 = vld [vmem:[#allocation2 + $0x14] sm:$0xf]
        %v2412 = vld [vmem:[#allocation2 + $0x2c] sm:$0xf]
        %v2413 = vld [vmem:[#allocation2 + $0x44] sm:$0xf]
        %v2414 = vld [vmem:[#allocation2 + $0x5c] sm:$0xf]
        %v2415 = vld [vmem:[#allocation2 + $0x74] sm:$0xf]
        %v2416 = vld [vmem:[#allocation2 + $0x8c] sm:$0xf]
        %v2417 = vld [vmem:[#allocation2 + $0xa4] sm:$0xf]
        %v2418 = vld [vmem:[#allocation2 + $0xbc] sm:$0xf]
        %v2419 = vld [vmem:[#allocation2 + $0xd4] sm:$0xf]
        %v2420 = vld [vmem:[#allocation2 + $0xec] sm:$0xf]
        %v2421 = vld [vmem:[#allocation2 + $0x104] sm:$0xf]
        %v2422 = vld [vmem:[#allocation2 + $0x11c] sm:$0xf]
        %v2423 = vld [vmem:[#allocation2 + $0x134] sm:$0xf]
        %v2424 = vld [vmem:[#allocation2 + $0x14c] sm:$0xf]
        %v2425 = vld [vmem:[#allocation2 + $0x164] sm:$0xf]
        %v2426 = vld [vmem:[#allocation2 + $0x17c] sm:$0xf]
        %v2443 = vunpack.c.l.b16 %v2379
        %v2444 = vunpack.c.l.b16 %v2380
        %v2445 = vunpack.c.l.b16 %v2381
        %v2446 = vunpack.c.l.b16 %v2382
        %v2447 = vunpack.c.l.b16 %v2383
        %v2448 = vunpack.c.l.b16 %v2384
        %v2449 = vunpack.c.l.b16 %v2385
        %v2450 = vunpack.c.l.b16 %v2386
        %v2451 = vunpack.c.l.b16 %v2387
        %v2452 = vunpack.c.l.b16 %v2388
        %v2453 = vunpack.c.l.b16 %v2389
        %v2454 = vunpack.c.l.b16 %v2390
        %v2455 = vunpack.c.l.b16 %v2391
        %v2456 = vunpack.c.l.b16 %v2392
        %v2457 = vunpack.c.l.b16 %v2393
        %v2458 = vunpack.c.l.b16 %v2394
        %v2459 = vpack.c.b16 %v2444, %v2443
        %v2460 = vpack.c.b16 %v2446, %v2445
        %v2461 = vpack.c.b16 %v2448, %v2447
        %v2462 = vpack.c.b16 %v2450, %v2449
        %v2463 = vpack.c.b16 %v2452, %v2451
        %v2464 = vpack.c.b16 %v2454, %v2453
        %v2465 = vpack.c.b16 %v2456, %v2455
        %v2466 = vpack.c.b16 %v2458, %v2457
        %v2491 = vunpack.c.l.b16 %v2395
        %v2492 = vunpack.c.l.b16 %v2396
        %v2493 = vunpack.c.l.b16 %v2397
        %v2494 = vunpack.c.l.b16 %v2398
        %v2495 = vunpack.c.l.b16 %v2399
        %v2496 = vunpack.c.l.b16 %v2400
        %v2497 = vunpack.c.l.b16 %v2401
        %v2498 = vunpack.c.l.b16 %v2402
        %v2499 = vunpack.c.l.b16 %v2403
        %v2500 = vunpack.c.l.b16 %v2404
        %v2501 = vunpack.c.l.b16 %v2405
        %v2502 = vunpack.c.l.b16 %v2406
        %v2503 = vunpack.c.l.b16 %v2407
        %v2504 = vunpack.c.l.b16 %v2408
        %v2505 = vunpack.c.l.b16 %v2409
        %v2506 = vunpack.c.l.b16 %v2410
        %v2507 = vpack.c.b16 %v2492, %v2491
        %v2508 = vpack.c.b16 %v2494, %v2493
        %v2509 = vpack.c.b16 %v2496, %v2495
        %v2510 = vpack.c.b16 %v2498, %v2497
        %v2511 = vpack.c.b16 %v2500, %v2499
        %v2512 = vpack.c.b16 %v2502, %v2501
        %v2513 = vpack.c.b16 %v2504, %v2503
        %v2514 = vpack.c.b16 %v2506, %v2505
        %2523 = vmatprep.subr.bf16.mxu0 0
        %2524 = vmatpush1.bf16.xpose.msra.mxu0 %v2514
        %2525 = vmatprep.subr.bf16.mxu0 0
        %2526 = vmatpush1.bf16.xpose.msra.mxu0 %v2513
        %2527 = vmatprep.subr.bf16.mxu0 0
        %2528 = vmatpush1.bf16.xpose.msra.mxu0 %v2512
        %2529 = vmatprep.subr.bf16.mxu0 0
        %2530 = vmatpush1.bf16.xpose.msra.mxu0 %v2511
        %2531 = vmatprep.subr.bf16.mxu0 0
        %2532 = vmatpush1.bf16.xpose.msra.mxu0 %v2510
        %2533 = vmatprep.subr.bf16.mxu0 0
        %2534 = vmatpush1.bf16.xpose.msra.mxu0 %v2509
        %2535 = vmatprep.subr.bf16.mxu0 0
        %2536 = vmatpush1.bf16.xpose.msra.mxu0 %v2508
        %2537 = vmatprep.subr.bf16.mxu0 0
        %2538 = vmatpush1.bf16.xpose.msra.mxu0 %v2507
        %2539 = vmatprep.subr.bf16.mxu0 0
        %2540 = vmatpush2.bf16.xpose.msra.mxu0 0
        %2541 = vmatprep.subr.bf16.mxu0 0
        %2542 = vmatpush2.bf16.xpose.msra.mxu0 0
        %2543 = vmatprep.subr.bf16.mxu0 0
        %2544 = vmatpush2.bf16.xpose.msra.mxu0 0
        %2545 = vmatprep.subr.bf16.mxu0 0
        %2546 = vmatpush2.bf16.xpose.msra.mxu0 0
        %2547 = vmatprep.subr.bf16.mxu0 0
        %2548 = vmatpush2.bf16.xpose.msra.mxu0 0
        %2549 = vmatprep.subr.bf16.mxu0 0
        %2550 = vmatpush2.bf16.xpose.msra.mxu0 0
        %2551 = vmatprep.subr.bf16.mxu0 0
        %2552 = vmatpush2.bf16.xpose.msra.mxu0 0
        %2553 = vmatprep.subr.bf16.mxu0 0
        %2554 = vmatpush2.bf16.xpose.msra.mxu0 0
        %2555 = vmatprep.mubr.bf16.mxu0 0
        %2556 = vmatmul.mubr.bf16.gmra.mxu0 %v2459
        %v2557 = vpop.f32.mrf.mxu0
        %v2558 = vadd.f32 0.0, %v2557
        %v2559 = vpop.f32.mrf.mxu0
        %v2560 = vpop.f32.mrf.mxu0
        %v2561 = vadd.f32 0.0, %v2560
        %v2562 = vpop.f32.mrf.mxu0
        %2563 = vmatprep.mubr.bf16.mxu0 0
        %2564 = vmatmul.mubr.bf16.gmra.mxu0 %v2460
        %v2565 = vpop.f32.mrf.mxu0
        %v2566 = vadd.f32 0.0, %v2565
        %v2567 = vpop.f32.mrf.mxu0
        %v2568 = vpop.f32.mrf.mxu0
        %v2569 = vadd.f32 0.0, %v2568
        %v2570 = vpop.f32.mrf.mxu0
        %2571 = vmatprep.mubr.bf16.mxu0 0
        %2572 = vmatmul.mubr.bf16.gmra.mxu0 %v2461
        %v2573 = vpop.f32.mrf.mxu0
        %v2574 = vadd.f32 0.0, %v2573
        %v2575 = vpop.f32.mrf.mxu0
        %v2576 = vpop.f32.mrf.mxu0
        %v2577 = vadd.f32 0.0, %v2576
        %v2578 = vpop.f32.mrf.mxu0
        %2579 = vmatprep.mubr.bf16.mxu0 0
        %2580 = vmatmul.mubr.bf16.gmra.mxu0 %v2462
        %v2581 = vpop.f32.mrf.mxu0
        %v2582 = vadd.f32 0.0, %v2581
        %v2583 = vpop.f32.mrf.mxu0
        %v2584 = vpop.f32.mrf.mxu0
        %v2585 = vadd.f32 0.0, %v2584
        %v2586 = vpop.f32.mrf.mxu0
        %2587 = vmatprep.mubr.bf16.mxu0 0
        %2588 = vmatmul.mubr.bf16.gmra.mxu0 %v2463
        %v2589 = vpop.f32.mrf.mxu0
        %v2590 = vadd.f32 0.0, %v2589
        %v2591 = vpop.f32.mrf.mxu0
        %v2592 = vpop.f32.mrf.mxu0
        %v2593 = vadd.f32 0.0, %v2592
        %v2594 = vpop.f32.mrf.mxu0
        %2595 = vmatprep.mubr.bf16.mxu0 0
        %2596 = vmatmul.mubr.bf16.gmra.mxu0 %v2464
        %v2597 = vpop.f32.mrf.mxu0
        %v2598 = vadd.f32 0.0, %v2597
        %v2599 = vpop.f32.mrf.mxu0
        %v2600 = vpop.f32.mrf.mxu0
        %v2601 = vadd.f32 0.0, %v2600
        %v2602 = vpop.f32.mrf.mxu0
        %2603 = vmatprep.mubr.bf16.mxu0 0
        %2604 = vmatmul.mubr.bf16.gmra.mxu0 %v2465
        %v2605 = vpop.f32.mrf.mxu0
        %v2606 = vadd.f32 0.0, %v2605
        %v2607 = vpop.f32.mrf.mxu0
        %v2608 = vpop.f32.mrf.mxu0
        %v2609 = vadd.f32 0.0, %v2608
        %v2610 = vpop.f32.mrf.mxu0
        %2611 = vmatprep.mubr.bf16.mxu0 0
        %2612 = vmatmul.mubr.bf16.gmra.mxu0 %v2466
        %v2613 = vpop.f32.mrf.mxu0
        %v2614 = vadd.f32 0.0, %v2613
        %v2615 = vpop.f32.mrf.mxu0
        %v2616 = vpop.f32.mrf.mxu0
        %v2617 = vadd.f32 0.0, %v2616
        %v2618 = vpop.f32.mrf.mxu0
        %2619 = vdwg.mxu0
        %2620 = vmax.xlane.f32.xlu0 %v2558
        %v2621 = vpop.xlane.xlu0 %2620
        %2622 = vmax.xlane.f32.xlu0 %v2561
        %v2623 = vpop.xlane.xlu0 %2622
        %2624 = vmax.xlane.f32.xlu0 %v2566
        %v2625 = vpop.xlane.xlu0 %2624
        %2626 = vmax.xlane.f32.xlu0 %v2569
        %v2627 = vpop.xlane.xlu0 %2626
        %2628 = vmax.xlane.f32.xlu0 %v2574
        %v2629 = vpop.xlane.xlu0 %2628
        %2630 = vmax.xlane.f32.xlu0 %v2577
        %v2631 = vpop.xlane.xlu0 %2630
        %2632 = vmax.xlane.f32.xlu0 %v2582
        %v2633 = vpop.xlane.xlu0 %2632
        %2634 = vmax.xlane.f32.xlu0 %v2585
        %v2635 = vpop.xlane.xlu0 %2634
        %2636 = vmax.xlane.f32.xlu0 %v2590
        %v2637 = vpop.xlane.xlu0 %2636
        %2638 = vmax.xlane.f32.xlu0 %v2593
        %v2639 = vpop.xlane.xlu0 %2638
        %2640 = vmax.xlane.f32.xlu0 %v2598
        %v2641 = vpop.xlane.xlu0 %2640
        %2642 = vmax.xlane.f32.xlu0 %v2601
        %v2643 = vpop.xlane.xlu0 %2642
        %2644 = vmax.xlane.f32.xlu0 %v2606
        %v2645 = vpop.xlane.xlu0 %2644
        %2646 = vmax.xlane.f32.xlu0 %v2609
        %v2647 = vpop.xlane.xlu0 %2646
        %2648 = vmax.xlane.f32.xlu0 %v2614
        %v2649 = vpop.xlane.xlu0 %2648
        %2650 = vmax.xlane.f32.xlu0 %v2617
        %v2651 = vpop.xlane.xlu0 %2650
        %v2652 = vsub.f32 %v2558, %v2621
        %v2653 = vsub.f32 %v2561, %v2623
        %v2654 = vsub.f32 %v2566, %v2625
        %v2655 = vsub.f32 %v2569, %v2627
        %v2656 = vsub.f32 %v2574, %v2629
        %v2657 = vsub.f32 %v2577, %v2631
        %v2658 = vsub.f32 %v2582, %v2633
        %v2659 = vsub.f32 %v2585, %v2635
        %v2660 = vsub.f32 %v2590, %v2637
        %v2661 = vsub.f32 %v2593, %v2639
        %v2662 = vsub.f32 %v2598, %v2641
        %v2663 = vsub.f32 %v2601, %v2643
        %v2664 = vsub.f32 %v2606, %v2645
        %v2665 = vsub.f32 %v2609, %v2647
        %v2666 = vsub.f32 %v2614, %v2649
        %v2667 = vsub.f32 %v2617, %v2651
        %v2668 = vmul.f32 %v2652, 1.442695
        %v2669 = vpow.pop %v2668
        %v2670 = vmul.f32 %v2653, 1.442695
        %v2671 = vpow.pop %v2670
        %v2672 = vmul.f32 %v2654, 1.442695
        %v2673 = vpow.pop %v2672
        %v2674 = vmul.f32 %v2655, 1.442695
        %v2675 = vpow.pop %v2674
        %v2676 = vmul.f32 %v2656, 1.442695
        %v2677 = vpow.pop %v2676
        %v2678 = vmul.f32 %v2657, 1.442695
        %v2679 = vpow.pop %v2678
        %v2680 = vmul.f32 %v2658, 1.442695
        %v2681 = vpow.pop %v2680
        %v2682 = vmul.f32 %v2659, 1.442695
        %v2683 = vpow.pop %v2682
        %v2684 = vmul.f32 %v2660, 1.442695
        %v2685 = vpow.pop %v2684
        %v2686 = vmul.f32 %v2661, 1.442695
        %v2687 = vpow.pop %v2686
        %v2688 = vmul.f32 %v2662, 1.442695
        %v2689 = vpow.pop %v2688
        %v2690 = vmul.f32 %v2663, 1.442695
        %v2691 = vpow.pop %v2690
        %v2692 = vmul.f32 %v2664, 1.442695
        %v2693 = vpow.pop %v2692
        %v2694 = vmul.f32 %v2665, 1.442695
        %v2695 = vpow.pop %v2694
        %v2696 = vmul.f32 %v2666, 1.442695
        %v2697 = vpow.pop %v2696
        %v2698 = vmul.f32 %v2667, 1.442695
        %v2699 = vpow.pop %v2698
        %2700 = vadd.xlane.f32.xlu0 %v2669
        %v2701 = vpop.xlane.xlu0 %2700
        %2702 = vadd.xlane.f32.xlu0 %v2671
        %v2703 = vpop.xlane.xlu0 %2702
        %2704 = vadd.xlane.f32.xlu0 %v2673
        %v2705 = vpop.xlane.xlu0 %2704
        %2706 = vadd.xlane.f32.xlu0 %v2675
        %v2707 = vpop.xlane.xlu0 %2706
        %2708 = vadd.xlane.f32.xlu0 %v2677
        %v2709 = vpop.xlane.xlu0 %2708
        %2710 = vadd.xlane.f32.xlu0 %v2679
        %v2711 = vpop.xlane.xlu0 %2710
        %2712 = vadd.xlane.f32.xlu0 %v2681
        %v2713 = vpop.xlane.xlu0 %2712
        %2714 = vadd.xlane.f32.xlu0 %v2683
        %v2715 = vpop.xlane.xlu0 %2714
        %2716 = vadd.xlane.f32.xlu0 %v2685
        %v2717 = vpop.xlane.xlu0 %2716
        %2718 = vadd.xlane.f32.xlu0 %v2687
        %v2719 = vpop.xlane.xlu0 %2718
        %2720 = vadd.xlane.f32.xlu0 %v2689
        %v2721 = vpop.xlane.xlu0 %2720
        %2722 = vadd.xlane.f32.xlu0 %v2691
        %v2723 = vpop.xlane.xlu0 %2722
        %2724 = vadd.xlane.f32.xlu0 %v2693
        %v2725 = vpop.xlane.xlu0 %2724
        %2726 = vadd.xlane.f32.xlu0 %v2695
        %v2727 = vpop.xlane.xlu0 %2726
        %2728 = vadd.xlane.f32.xlu0 %v2697
        %v2729 = vpop.xlane.xlu0 %2728
        %2730 = vadd.xlane.f32.xlu0 %v2699
        %v2731 = vpop.xlane.xlu0 %2730
        %v2732 = vrcp.pop %v2701
        %v2733 = vrcp.pop %v2703
        %v2734 = vrcp.pop %v2705
        %v2735 = vrcp.pop %v2707
        %v2736 = vrcp.pop %v2709
        %v2737 = vrcp.pop %v2711
        %v2738 = vrcp.pop %v2713
        %v2739 = vrcp.pop %v2715
        %v2740 = vrcp.pop %v2717
        %v2741 = vrcp.pop %v2719
        %v2742 = vrcp.pop %v2721
        %v2743 = vrcp.pop %v2723
        %v2744 = vrcp.pop %v2725
        %v2745 = vrcp.pop %v2727
        %v2746 = vrcp.pop %v2729
        %v2747 = vrcp.pop %v2731
        %v2748 = vmul.f32 %v2669, %v2732
        %v2749 = vmul.f32 %v2671, %v2733
        %v2750 = vmul.f32 %v2673, %v2734
        %v2751 = vmul.f32 %v2675, %v2735
        %v2752 = vmul.f32 %v2677, %v2736
        %v2753 = vmul.f32 %v2679, %v2737
        %v2754 = vmul.f32 %v2681, %v2738
        %v2755 = vmul.f32 %v2683, %v2739
        %v2756 = vmul.f32 %v2685, %v2740
        %v2757 = vmul.f32 %v2687, %v2741
        %v2758 = vmul.f32 %v2689, %v2742
        %v2759 = vmul.f32 %v2691, %v2743
        %v2760 = vmul.f32 %v2693, %v2744
        %v2761 = vmul.f32 %v2695, %v2745
        %v2762 = vmul.f32 %v2697, %v2746
        %v2763 = vmul.f32 %v2699, %v2747
        %v2764 = vpack.c.bf16 %v2749, %v2748
        %v2765 = vpack.c.bf16 %v2751, %v2750
        %v2766 = vpack.c.bf16 %v2753, %v2752
        %v2767 = vpack.c.bf16 %v2755, %v2754
        %v2768 = vpack.c.bf16 %v2757, %v2756
        %v2769 = vpack.c.bf16 %v2759, %v2758
        %v2770 = vpack.c.bf16 %v2761, %v2760
        %v2771 = vpack.c.bf16 %v2763, %v2762
        %v2788 = vunpack.c.l.b16 %v2411
        %v2789 = vunpack.c.l.b16 %v2412
        %v2790 = vunpack.c.l.b16 %v2413
        %v2791 = vunpack.c.l.b16 %v2414
        %v2792 = vunpack.c.l.b16 %v2415
        %v2793 = vunpack.c.l.b16 %v2416
        %v2794 = vunpack.c.l.b16 %v2417
        %v2795 = vunpack.c.l.b16 %v2418
        %v2796 = vunpack.c.l.b16 %v2419
        %v2797 = vunpack.c.l.b16 %v2420
        %v2798 = vunpack.c.l.b16 %v2421
        %v2799 = vunpack.c.l.b16 %v2422
        %v2800 = vunpack.c.l.b16 %v2423
        %v2801 = vunpack.c.l.b16 %v2424
        %v2802 = vunpack.c.l.b16 %v2425
        %v2803 = vunpack.c.l.b16 %v2426
        %v2804 = vpack.c.b16 %v2789, %v2788
        %v2805 = vpack.c.b16 %v2791, %v2790
        %v2806 = vpack.c.b16 %v2793, %v2792
        %v2807 = vpack.c.b16 %v2795, %v2794
        %v2808 = vpack.c.b16 %v2797, %v2796
        %v2809 = vpack.c.b16 %v2799, %v2798
        %v2810 = vpack.c.b16 %v2801, %v2800
        %v2811 = vpack.c.b16 %v2803, %v2802
        %2820 = vmatprep.subr.bf16.mxu0 0
        %2821 = vmatpush1.bf16.msra.mxu0 %v2811
        %2822 = vmatprep.subr.bf16.mxu0 0
        %2823 = vmatpush1.bf16.msra.mxu0 %v2810
        %2824 = vmatprep.subr.bf16.mxu0 0
        %2825 = vmatpush1.bf16.msra.mxu0 %v2809
        %2826 = vmatprep.subr.bf16.mxu0 0
        %2827 = vmatpush1.bf16.msra.mxu0 %v2808
        %2828 = vmatprep.subr.bf16.mxu0 0
        %2829 = vmatpush1.bf16.msra.mxu0 %v2807
        %2830 = vmatprep.subr.bf16.mxu0 0
        %2831 = vmatpush1.bf16.msra.mxu0 %v2806
        %2832 = vmatprep.subr.bf16.mxu0 0
        %2833 = vmatpush1.bf16.msra.mxu0 %v2805
        %2834 = vmatprep.subr.bf16.mxu0 0
        %2835 = vmatpush1.bf16.msra.mxu0 %v2804
        %2836 = vmatprep.subr.bf16.mxu0 0
        %2837 = vmatpush2.bf16.msra.mxu0 0
        %2838 = vmatprep.subr.bf16.mxu0 0
        %2839 = vmatpush2.bf16.msra.mxu0 0
        %2840 = vmatprep.subr.bf16.mxu0 0
        %2841 = vmatpush2.bf16.msra.mxu0 0
        %2842 = vmatprep.subr.bf16.mxu0 0
        %2843 = vmatpush2.bf16.msra.mxu0 0
        %2844 = vmatprep.subr.bf16.mxu0 0
        %2845 = vmatpush2.bf16.msra.mxu0 0
        %2846 = vmatprep.subr.bf16.mxu0 0
        %2847 = vmatpush2.bf16.msra.mxu0 0
        %2848 = vmatprep.subr.bf16.mxu0 0
        %2849 = vmatpush2.bf16.msra.mxu0 0
        %2850 = vmatprep.subr.bf16.mxu0 0
        %2851 = vmatpush2.bf16.msra.mxu0 0
        %2852 = vmatprep.mubr.bf16.mxu0 0
        %2853 = vmatmul.mubr.bf16.gmra.mxu0 %v2764
        %v2854 = vpop.f32.mrf.mxu0
        %v2855 = vadd.f32 0.0, %v2854
        %v2856 = vpop.f32.mrf.mxu0
        %v2857 = vpop.f32.mrf.mxu0
        %v2858 = vadd.f32 0.0, %v2857
        %v2859 = vpop.f32.mrf.mxu0
        %2860 = vmatprep.mubr.bf16.mxu0 0
        %2861 = vmatmul.mubr.bf16.gmra.mxu0 %v2765
        %v2862 = vpop.f32.mrf.mxu0
        %v2863 = vadd.f32 0.0, %v2862
        %v2864 = vpop.f32.mrf.mxu0
        %v2865 = vpop.f32.mrf.mxu0
        %v2866 = vadd.f32 0.0, %v2865
        %v2867 = vpop.f32.mrf.mxu0
        %2868 = vmatprep.mubr.bf16.mxu0 0
        %2869 = vmatmul.mubr.bf16.gmra.mxu0 %v2766
        %v2870 = vpop.f32.mrf.mxu0
        %v2871 = vadd.f32 0.0, %v2870
        %v2872 = vpop.f32.mrf.mxu0
        %v2873 = vpop.f32.mrf.mxu0
        %v2874 = vadd.f32 0.0, %v2873
        %v2875 = vpop.f32.mrf.mxu0
        %2876 = vmatprep.mubr.bf16.mxu0 0
        %2877 = vmatmul.mubr.bf16.gmra.mxu0 %v2767
        %v2878 = vpop.f32.mrf.mxu0
        %v2879 = vadd.f32 0.0, %v2878
        %v2880 = vpop.f32.mrf.mxu0
        %v2881 = vpop.f32.mrf.mxu0
        %v2882 = vadd.f32 0.0, %v2881
        %v2883 = vpop.f32.mrf.mxu0
        %2884 = vmatprep.mubr.bf16.mxu0 0
        %2885 = vmatmul.mubr.bf16.gmra.mxu0 %v2768
        %v2886 = vpop.f32.mrf.mxu0
        %v2887 = vadd.f32 0.0, %v2886
        %v2888 = vpop.f32.mrf.mxu0
        %v2889 = vpop.f32.mrf.mxu0
        %v2890 = vadd.f32 0.0, %v2889
        %v2891 = vpop.f32.mrf.mxu0
        %2892 = vmatprep.mubr.bf16.mxu0 0
        %2893 = vmatmul.mubr.bf16.gmra.mxu0 %v2769
        %v2894 = vpop.f32.mrf.mxu0
        %v2895 = vadd.f32 0.0, %v2894
        %v2896 = vpop.f32.mrf.mxu0
        %v2897 = vpop.f32.mrf.mxu0
        %v2898 = vadd.f32 0.0, %v2897
        %v2899 = vpop.f32.mrf.mxu0
        %2900 = vmatprep.mubr.bf16.mxu0 0
        %2901 = vmatmul.mubr.bf16.gmra.mxu0 %v2770
        %v2902 = vpop.f32.mrf.mxu0
        %v2903 = vadd.f32 0.0, %v2902
        %v2904 = vpop.f32.mrf.mxu0
        %v2905 = vpop.f32.mrf.mxu0
        %v2906 = vadd.f32 0.0, %v2905
        %v2907 = vpop.f32.mrf.mxu0
        %2908 = vmatprep.mubr.bf16.mxu0 0
        %2909 = vmatmul.mubr.bf16.gmra.mxu0 %v2771
        %v2910 = vpop.f32.mrf.mxu0
        %v2911 = vadd.f32 0.0, %v2910
        %v2912 = vpop.f32.mrf.mxu0
        %v2913 = vpop.f32.mrf.mxu0
        %v2914 = vadd.f32 0.0, %v2913
        %v2915 = vpop.f32.mrf.mxu0
        %2916 = vdwg.mxu0
        %v2917 = vpack.c.bf16 %v2858, %v2855
        %v2918 = vpack.c.bf16 %v2866, %v2863
        %v2919 = vpack.c.bf16 %v2874, %v2871
        %v2920 = vpack.c.bf16 %v2882, %v2879
        %v2921 = vpack.c.bf16 %v2890, %v2887
        %v2922 = vpack.c.bf16 %v2898, %v2895
        %v2923 = vpack.c.bf16 %v2906, %v2903
        %v2924 = vpack.c.bf16 %v2914, %v2911
        %v2933 = vunpack.c.l.b16 %v2917
        %v2934 = vunpack.c.h.b16 %v2917
        %v2935 = vunpack.c.l.b16 %v2918
        %v2936 = vunpack.c.h.b16 %v2918
        %v2937 = vunpack.c.l.b16 %v2919
        %v2938 = vunpack.c.h.b16 %v2919
        %v2939 = vunpack.c.l.b16 %v2920
        %v2940 = vunpack.c.h.b16 %v2920
        %v2941 = vunpack.c.l.b16 %v2921
        %v2942 = vunpack.c.h.b16 %v2921
        %v2943 = vunpack.c.l.b16 %v2922
        %v2944 = vunpack.c.h.b16 %v2922
        %v2945 = vunpack.c.l.b16 %v2923
        %v2946 = vunpack.c.h.b16 %v2923
        %v2947 = vunpack.c.l.b16 %v2924
        %v2948 = vunpack.c.h.b16 %v2924
        %v2949 = vpack.c.b16 %v2933, %v2933
        %v2950 = vpack.c.b16 %v2934, %v2934
        %v2951 = vpack.c.b16 %v2935, %v2935
        %v2952 = vpack.c.b16 %v2936, %v2936
        %v2953 = vpack.c.b16 %v2937, %v2937
        %v2954 = vpack.c.b16 %v2938, %v2938
        %v2955 = vpack.c.b16 %v2939, %v2939
        %v2956 = vpack.c.b16 %v2940, %v2940
        %v2957 = vpack.c.b16 %v2941, %v2941
        %v2958 = vpack.c.b16 %v2942, %v2942
        %v2959 = vpack.c.b16 %v2943, %v2943
        %v2960 = vpack.c.b16 %v2944, %v2944
        %v2961 = vpack.c.b16 %v2945, %v2945
        %v2962 = vpack.c.b16 %v2946, %v2946
        %v2963 = vpack.c.b16 %v2947, %v2947
        %v2964 = vpack.c.b16 %v2948, %v2948
        %2981 = vst [vmem:[#allocation3 + $0x4] sm:$0xf] %v2949
        %2982 = vst [vmem:[#allocation3 + $0xc] sm:$0xf] %v2950
        %2983 = vst [vmem:[#allocation3 + $0x14] sm:$0xf] %v2951
        %2984 = vst [vmem:[#allocation3 + $0x1c] sm:$0xf] %v2952
        %2985 = vst [vmem:[#allocation3 + $0x24] sm:$0xf] %v2953
        %2986 = vst [vmem:[#allocation3 + $0x2c] sm:$0xf] %v2954
        %2987 = vst [vmem:[#allocation3 + $0x34] sm:$0xf] %v2955
        %2988 = vst [vmem:[#allocation3 + $0x3c] sm:$0xf] %v2956
        %2989 = vst [vmem:[#allocation3 + $0x44] sm:$0xf] %v2957
        %2990 = vst [vmem:[#allocation3 + $0x4c] sm:$0xf] %v2958
        %2991 = vst [vmem:[#allocation3 + $0x54] sm:$0xf] %v2959
        %2992 = vst [vmem:[#allocation3 + $0x5c] sm:$0xf] %v2960
        %2993 = vst [vmem:[#allocation3 + $0x64] sm:$0xf] %v2961
        %2994 = vst [vmem:[#allocation3 + $0x6c] sm:$0xf] %v2962
        %2995 = vst [vmem:[#allocation3 + $0x74] sm:$0xf] %v2963
        %2996 = vst [vmem:[#allocation3 + $0x7c] sm:$0xf] %v2964
        %v2997 = vld [vmem:[#allocation3] sm:$0xff]
        %v2998 = vld [vmem:[#allocation3 + $0x8] sm:$0xff]
        %v2999 = vld [vmem:[#allocation3 + $0x10] sm:$0xff]
        %v3000 = vld [vmem:[#allocation3 + $0x18] sm:$0xff]
        %v3001 = vld [vmem:[#allocation3 + $0x20] sm:$0xff]
        %v3002 = vld [vmem:[#allocation3 + $0x28] sm:$0xff]
        %v3003 = vld [vmem:[#allocation3 + $0x30] sm:$0xff]
        %v3004 = vld [vmem:[#allocation3 + $0x38] sm:$0xff]
        %v3005 = vld [vmem:[#allocation3 + $0x40] sm:$0xff]
        %v3006 = vld [vmem:[#allocation3 + $0x48] sm:$0xff]
        %v3007 = vld [vmem:[#allocation3 + $0x50] sm:$0xff]
        %v3008 = vld [vmem:[#allocation3 + $0x58] sm:$0xff]
        %v3009 = vld [vmem:[#allocation3 + $0x60] sm:$0xff]
        %v3010 = vld [vmem:[#allocation3 + $0x68] sm:$0xff]
        %v3011 = vld [vmem:[#allocation3 + $0x70] sm:$0xff]
        %v3012 = vld [vmem:[#allocation3 + $0x78] sm:$0xff]
        %v3013 = vld [vmem:[#allocation4] sm:$0xff]
        %v3014 = vld [vmem:[#allocation4 + $0x8] sm:$0xff]
        %v3015 = vld [vmem:[#allocation4 + $0x10] sm:$0xff]
        %v3016 = vld [vmem:[#allocation4 + $0x18] sm:$0xff]
        %v3017 = vld [vmem:[#allocation4 + $0x20] sm:$0xff]
        %v3018 = vld [vmem:[#allocation4 + $0x28] sm:$0xff]
        %v3019 = vld [vmem:[#allocation4 + $0x30] sm:$0xff]
        %v3020 = vld [vmem:[#allocation4 + $0x38] sm:$0xff]
        %v3021 = vld [vmem:[#allocation4 + $0x40] sm:$0xff]
        %v3022 = vld [vmem:[#allocation4 + $0x48] sm:$0xff]
        %v3023 = vld [vmem:[#allocation4 + $0x50] sm:$0xff]
        %v3024 = vld [vmem:[#allocation4 + $0x58] sm:$0xff]
        %v3025 = vld [vmem:[#allocation4 + $0x60] sm:$0xff]
        %v3026 = vld [vmem:[#allocation4 + $0x68] sm:$0xff]
        %v3027 = vld [vmem:[#allocation4 + $0x70] sm:$0xff]
        %v3028 = vld [vmem:[#allocation4 + $0x78] sm:$0xff]
        %v3029 = vld [vmem:[#allocation4 + $0x80] sm:$0xff]
        %v3030 = vld [vmem:[#allocation4 + $0x88] sm:$0xff]
        %v3031 = vld [vmem:[#allocation4 + $0x90] sm:$0xff]
        %v3032 = vld [vmem:[#allocation4 + $0x98] sm:$0xff]
        %v3033 = vld [vmem:[#allocation4 + $0xa0] sm:$0xff]
        %v3034 = vld [vmem:[#allocation4 + $0xa8] sm:$0xff]
        %v3035 = vld [vmem:[#allocation4 + $0xb0] sm:$0xff]
        %v3036 = vld [vmem:[#allocation4 + $0xb8] sm:$0xff]
        %v3037 = vld [vmem:[#allocation4 + $0xc0] sm:$0xff]
        %v3038 = vld [vmem:[#allocation4 + $0xc8] sm:$0xff]
        %v3039 = vld [vmem:[#allocation4 + $0xd0] sm:$0xff]
        %v3040 = vld [vmem:[#allocation4 + $0xd8] sm:$0xff]
        %v3041 = vld [vmem:[#allocation4 + $0xe0] sm:$0xff]
        %v3042 = vld [vmem:[#allocation4 + $0xe8] sm:$0xff]
        %v3043 = vld [vmem:[#allocation4 + $0xf0] sm:$0xff]
        %v3044 = vld [vmem:[#allocation4 + $0xf8] sm:$0xff]
        %v3045 = vld [vmem:[%s4] sm:$0x3]
        %v3047 = vlaneseq
        %v3048 = vshrl.u32 %v3047, 7
        %v3049 = vsub.s32 0, %v3048
        %v3050 = vrot.slane %v3045, %v3049
        %v3051 = vlaneseq
        %v3052 = vshrl.u32 %v3051, 7
        %v3053 = vsub.s32 1, %v3052
        %v3054 = vrot.slane %v3045, %v3053
        %v3073 = vunpack.c.l.b16 %v2997
        %v3074 = vunpack.c.h.b16 %v2997
        %v3075 = vunpack.c.l.b16 %v2998
        %v3076 = vunpack.c.h.b16 %v2998
        %v3077 = vunpack.c.l.b16 %v2999
        %v3078 = vunpack.c.h.b16 %v2999
        %v3079 = vunpack.c.l.b16 %v3000
        %v3080 = vunpack.c.h.b16 %v3000
        %v3081 = vunpack.c.l.b16 %v3001
        %v3082 = vunpack.c.h.b16 %v3001
        %v3083 = vunpack.c.l.b16 %v3002
        %v3084 = vunpack.c.h.b16 %v3002
        %v3085 = vunpack.c.l.b16 %v3003
        %v3086 = vunpack.c.h.b16 %v3003
        %v3087 = vunpack.c.l.b16 %v3004
        %v3088 = vunpack.c.h.b16 %v3004
        %v3089 = vunpack.c.l.b16 %v3005
        %v3090 = vunpack.c.h.b16 %v3005
        %v3091 = vunpack.c.l.b16 %v3006
        %v3092 = vunpack.c.h.b16 %v3006
        %v3093 = vunpack.c.l.b16 %v3007
        %v3094 = vunpack.c.h.b16 %v3007
        %v3095 = vunpack.c.l.b16 %v3008
        %v3096 = vunpack.c.h.b16 %v3008
        %v3097 = vunpack.c.l.b16 %v3009
        %v3098 = vunpack.c.h.b16 %v3009
        %v3099 = vunpack.c.l.b16 %v3010
        %v3100 = vunpack.c.h.b16 %v3010
        %v3101 = vunpack.c.l.b16 %v3011
        %v3102 = vunpack.c.h.b16 %v3011
        %v3103 = vunpack.c.l.b16 %v3012
        %v3104 = vunpack.c.h.b16 %v3012
        %v3105 = vpack.c.b16 %v3075, %v3073
        %v3106 = vpack.c.b16 %v3076, %v3074
        %v3107 = vpack.c.b16 %v3079, %v3077
        %v3108 = vpack.c.b16 %v3080, %v3078
        %v3109 = vpack.c.b16 %v3083, %v3081
        %v3110 = vpack.c.b16 %v3084, %v3082
        %v3111 = vpack.c.b16 %v3087, %v3085
        %v3112 = vpack.c.b16 %v3088, %v3086
        %v3113 = vpack.c.b16 %v3091, %v3089
        %v3114 = vpack.c.b16 %v3092, %v3090
        %v3115 = vpack.c.b16 %v3095, %v3093
        %v3116 = vpack.c.b16 %v3096, %v3094
        %v3117 = vpack.c.b16 %v3099, %v3097
        %v3118 = vpack.c.b16 %v3100, %v3098
        %v3119 = vpack.c.b16 %v3103, %v3101
        %v3120 = vpack.c.b16 %v3104, %v3102
        %v3169 = vunpack.c.l.b16 %v3013
        %v3170 = vunpack.c.h.b16 %v3013
        %v3171 = vunpack.c.l.b16 %v3014
        %v3172 = vunpack.c.h.b16 %v3014
        %v3173 = vunpack.c.l.b16 %v3015
        %v3174 = vunpack.c.h.b16 %v3015
        %v3175 = vunpack.c.l.b16 %v3016
        %v3176 = vunpack.c.h.b16 %v3016
        %v3177 = vunpack.c.l.b16 %v3017
        %v3178 = vunpack.c.h.b16 %v3017
        %v3179 = vunpack.c.l.b16 %v3018
        %v3180 = vunpack.c.h.b16 %v3018
        %v3181 = vunpack.c.l.b16 %v3019
        %v3182 = vunpack.c.h.b16 %v3019
        %v3183 = vunpack.c.l.b16 %v3020
        %v3184 = vunpack.c.h.b16 %v3020
        %v3185 = vunpack.c.l.b16 %v3021
        %v3186 = vunpack.c.h.b16 %v3021
        %v3187 = vunpack.c.l.b16 %v3022
        %v3188 = vunpack.c.h.b16 %v3022
        %v3189 = vunpack.c.l.b16 %v3023
        %v3190 = vunpack.c.h.b16 %v3023
        %v3191 = vunpack.c.l.b16 %v3024
        %v3192 = vunpack.c.h.b16 %v3024
        %v3193 = vunpack.c.l.b16 %v3025
        %v3194 = vunpack.c.h.b16 %v3025
        %v3195 = vunpack.c.l.b16 %v3026
        %v3196 = vunpack.c.h.b16 %v3026
        %v3197 = vunpack.c.l.b16 %v3027
        %v3198 = vunpack.c.h.b16 %v3027
        %v3199 = vunpack.c.l.b16 %v3028
        %v3200 = vunpack.c.h.b16 %v3028
        %v3201 = vunpack.c.l.b16 %v3029
        %v3202 = vunpack.c.h.b16 %v3029
        %v3203 = vunpack.c.l.b16 %v3030
        %v3204 = vunpack.c.h.b16 %v3030
        %v3205 = vunpack.c.l.b16 %v3031
        %v3206 = vunpack.c.h.b16 %v3031
        %v3207 = vunpack.c.l.b16 %v3032
        %v3208 = vunpack.c.h.b16 %v3032
        %v3209 = vunpack.c.l.b16 %v3033
        %v3210 = vunpack.c.h.b16 %v3033
        %v3211 = vunpack.c.l.b16 %v3034
        %v3212 = vunpack.c.h.b16 %v3034
        %v3213 = vunpack.c.l.b16 %v3035
        %v3214 = vunpack.c.h.b16 %v3035
        %v3215 = vunpack.c.l.b16 %v3036
        %v3216 = vunpack.c.h.b16 %v3036
        %v3217 = vunpack.c.l.b16 %v3037
        %v3218 = vunpack.c.h.b16 %v3037
        %v3219 = vunpack.c.l.b16 %v3038
        %v3220 = vunpack.c.h.b16 %v3038
        %v3221 = vunpack.c.l.b16 %v3039
        %v3222 = vunpack.c.h.b16 %v3039
        %v3223 = vunpack.c.l.b16 %v3040
        %v3224 = vunpack.c.h.b16 %v3040
        %v3225 = vunpack.c.l.b16 %v3041
        %v3226 = vunpack.c.h.b16 %v3041
        %v3227 = vunpack.c.l.b16 %v3042
        %v3228 = vunpack.c.h.b16 %v3042
        %v3229 = vunpack.c.l.b16 %v3043
        %v3230 = vunpack.c.h.b16 %v3043
        %v3231 = vunpack.c.l.b16 %v3044
        %v3232 = vunpack.c.h.b16 %v3044
        %v3233 = vpack.c.b16 %v3171, %v3169
        %v3234 = vpack.c.b16 %v3172, %v3170
        %v3235 = vpack.c.b16 %v3175, %v3173
        %v3236 = vpack.c.b16 %v3176, %v3174
        %v3237 = vpack.c.b16 %v3179, %v3177
        %v3238 = vpack.c.b16 %v3180, %v3178
        %v3239 = vpack.c.b16 %v3183, %v3181
        %v3240 = vpack.c.b16 %v3184, %v3182
        %v3241 = vpack.c.b16 %v3187, %v3185
        %v3242 = vpack.c.b16 %v3188, %v3186
        %v3243 = vpack.c.b16 %v3191, %v3189
        %v3244 = vpack.c.b16 %v3192, %v3190
        %v3245 = vpack.c.b16 %v3195, %v3193
        %v3246 = vpack.c.b16 %v3196, %v3194
        %v3247 = vpack.c.b16 %v3199, %v3197
        %v3248 = vpack.c.b16 %v3200, %v3198
        %v3249 = vpack.c.b16 %v3203, %v3201
        %v3250 = vpack.c.b16 %v3204, %v3202
        %v3251 = vpack.c.b16 %v3207, %v3205
        %v3252 = vpack.c.b16 %v3208, %v3206
        %v3253 = vpack.c.b16 %v3211, %v3209
        %v3254 = vpack.c.b16 %v3212, %v3210
        %v3255 = vpack.c.b16 %v3215, %v3213
        %v3256 = vpack.c.b16 %v3216, %v3214
        %v3257 = vpack.c.b16 %v3219, %v3217
        %v3258 = vpack.c.b16 %v3220, %v3218
        %v3259 = vpack.c.b16 %v3223, %v3221
        %v3260 = vpack.c.b16 %v3224, %v3222
        %v3261 = vpack.c.b16 %v3227, %v3225
        %v3262 = vpack.c.b16 %v3228, %v3226
        %v3263 = vpack.c.b16 %v3231, %v3229
        %v3264 = vpack.c.b16 %v3232, %v3230
        %3297 = vmatprep.subr.bf16.mxu0 %v3248
        %3298 = vmatpush1.bf16.msra.mxu0 %v3247
        %3299 = vmatprep.subr.bf16.mxu0 %v3246
        %3300 = vmatpush1.bf16.msra.mxu0 %v3245
        %3301 = vmatprep.subr.bf16.mxu0 %v3244
        %3302 = vmatpush1.bf16.msra.mxu0 %v3243
        %3303 = vmatprep.subr.bf16.mxu0 %v3242
        %3304 = vmatpush1.bf16.msra.mxu0 %v3241
        %3305 = vmatprep.subr.bf16.mxu0 %v3240
        %3306 = vmatpush1.bf16.msra.mxu0 %v3239
        %3307 = vmatprep.subr.bf16.mxu0 %v3238
        %3308 = vmatpush1.bf16.msra.mxu0 %v3237
        %3309 = vmatprep.subr.bf16.mxu0 %v3236
        %3310 = vmatpush1.bf16.msra.mxu0 %v3235
        %3311 = vmatprep.subr.bf16.mxu0 %v3234
        %3312 = vmatpush1.bf16.msra.mxu0 %v3233
        %3313 = vmatprep.subr.bf16.mxu0 %v3264
        %3314 = vmatpush2.bf16.msra.mxu0 %v3263
        %3315 = vmatprep.subr.bf16.mxu0 %v3262
        %3316 = vmatpush2.bf16.msra.mxu0 %v3261
        %3317 = vmatprep.subr.bf16.mxu0 %v3260
        %3318 = vmatpush2.bf16.msra.mxu0 %v3259
        %3319 = vmatprep.subr.bf16.mxu0 %v3258
        %3320 = vmatpush2.bf16.msra.mxu0 %v3257
        %3321 = vmatprep.subr.bf16.mxu0 %v3256
        %3322 = vmatpush2.bf16.msra.mxu0 %v3255
        %3323 = vmatprep.subr.bf16.mxu0 %v3254
        %3324 = vmatpush2.bf16.msra.mxu0 %v3253
        %3325 = vmatprep.subr.bf16.mxu0 %v3252
        %3326 = vmatpush2.bf16.msra.mxu0 %v3251
        %3327 = vmatprep.subr.bf16.mxu0 %v3250
        %3328 = vmatpush2.bf16.msra.mxu0 %v3249
        %3329 = vmatprep.mubr.bf16.mxu0 %v3106
        %3330 = vmatmul.mubr.bf16.gmra.mxu0 %v3105
        %v3331 = vpop.f32.mrf.mxu0
        %v3332 = vadd.f32 %v3050, %v3331
        %v3333 = vpop.f32.mrf.mxu0
        %v3334 = vadd.f32 %v3054, %v3333
        %v3335 = vpop.f32.mrf.mxu0
        %v3336 = vadd.f32 %v3050, %v3335
        %v3337 = vpop.f32.mrf.mxu0
        %v3338 = vadd.f32 %v3054, %v3337
        %3339 = vmatprep.mubr.bf16.mxu0 %v3108
        %3340 = vmatmul.mubr.bf16.gmra.mxu0 %v3107
        %v3341 = vpop.f32.mrf.mxu0
        %v3342 = vadd.f32 %v3050, %v3341
        %v3343 = vpop.f32.mrf.mxu0
        %v3344 = vadd.f32 %v3054, %v3343
        %v3345 = vpop.f32.mrf.mxu0
        %v3346 = vadd.f32 %v3050, %v3345
        %v3347 = vpop.f32.mrf.mxu0
        %v3348 = vadd.f32 %v3054, %v3347
        %3349 = vmatprep.mubr.bf16.mxu0 %v3110
        %3350 = vmatmul.mubr.bf16.gmra.mxu0 %v3109
        %v3351 = vpop.f32.mrf.mxu0
        %v3352 = vadd.f32 %v3050, %v3351
        %v3353 = vpop.f32.mrf.mxu0
        %v3354 = vadd.f32 %v3054, %v3353
        %v3355 = vpop.f32.mrf.mxu0
        %v3356 = vadd.f32 %v3050, %v3355
        %v3357 = vpop.f32.mrf.mxu0
        %v3358 = vadd.f32 %v3054, %v3357
        %3359 = vmatprep.mubr.bf16.mxu0 %v3112
        %3360 = vmatmul.mubr.bf16.gmra.mxu0 %v3111
        %v3361 = vpop.f32.mrf.mxu0
        %v3362 = vadd.f32 %v3050, %v3361
        %v3363 = vpop.f32.mrf.mxu0
        %v3364 = vadd.f32 %v3054, %v3363
        %v3365 = vpop.f32.mrf.mxu0
        %v3366 = vadd.f32 %v3050, %v3365
        %v3367 = vpop.f32.mrf.mxu0
        %v3368 = vadd.f32 %v3054, %v3367
        %3369 = vmatprep.mubr.bf16.mxu0 %v3114
        %3370 = vmatmul.mubr.bf16.gmra.mxu0 %v3113
        %v3371 = vpop.f32.mrf.mxu0
        %v3372 = vadd.f32 %v3050, %v3371
        %v3373 = vpop.f32.mrf.mxu0
        %v3374 = vadd.f32 %v3054, %v3373
        %v3375 = vpop.f32.mrf.mxu0
        %v3376 = vadd.f32 %v3050, %v3375
        %v3377 = vpop.f32.mrf.mxu0
        %v3378 = vadd.f32 %v3054, %v3377
        %3379 = vmatprep.mubr.bf16.mxu0 %v3116
        %3380 = vmatmul.mubr.bf16.gmra.mxu0 %v3115
        %v3381 = vpop.f32.mrf.mxu0
        %v3382 = vadd.f32 %v3050, %v3381
        %v3383 = vpop.f32.mrf.mxu0
        %v3384 = vadd.f32 %v3054, %v3383
        %v3385 = vpop.f32.mrf.mxu0
        %v3386 = vadd.f32 %v3050, %v3385
        %v3387 = vpop.f32.mrf.mxu0
        %v3388 = vadd.f32 %v3054, %v3387
        %3389 = vmatprep.mubr.bf16.mxu0 %v3118
        %3390 = vmatmul.mubr.bf16.gmra.mxu0 %v3117
        %v3391 = vpop.f32.mrf.mxu0
        %v3392 = vadd.f32 %v3050, %v3391
        %v3393 = vpop.f32.mrf.mxu0
        %v3394 = vadd.f32 %v3054, %v3393
        %v3395 = vpop.f32.mrf.mxu0
        %v3396 = vadd.f32 %v3050, %v3395
        %v3397 = vpop.f32.mrf.mxu0
        %v3398 = vadd.f32 %v3054, %v3397
        %3399 = vmatprep.mubr.bf16.mxu0 %v3120
        %3400 = vmatmul.mubr.bf16.gmra.mxu0 %v3119
        %v3401 = vpop.f32.mrf.mxu0
        %v3402 = vadd.f32 %v3050, %v3401
        %v3403 = vpop.f32.mrf.mxu0
        %v3404 = vadd.f32 %v3054, %v3403
        %v3405 = vpop.f32.mrf.mxu0
        %v3406 = vadd.f32 %v3050, %v3405
        %v3407 = vpop.f32.mrf.mxu0
        %v3408 = vadd.f32 %v3054, %v3407
        %3409 = vdwg.mxu0
        %v3410 = vunpack.c.l.bf16 %v382
        %v3411 = vunpack.c.h.bf16 %v382
        %v3412 = vunpack.c.l.bf16 %v383
        %v3413 = vunpack.c.h.bf16 %v383
        %v3414 = vunpack.c.l.bf16 %v384
        %v3415 = vunpack.c.h.bf16 %v384
        %v3416 = vunpack.c.l.bf16 %v385
        %v3417 = vunpack.c.h.bf16 %v385
        %v3418 = vunpack.c.l.bf16 %v386
        %v3419 = vunpack.c.h.bf16 %v386
        %v3420 = vunpack.c.l.bf16 %v387
        %v3421 = vunpack.c.h.bf16 %v387
        %v3422 = vunpack.c.l.bf16 %v388
        %v3423 = vunpack.c.h.bf16 %v388
        %v3424 = vunpack.c.l.bf16 %v389
        %v3425 = vunpack.c.h.bf16 %v389
        %v3426 = vunpack.c.l.bf16 %v390
        %v3427 = vunpack.c.h.bf16 %v390
        %v3428 = vunpack.c.l.bf16 %v391
        %v3429 = vunpack.c.h.bf16 %v391
        %v3430 = vunpack.c.l.bf16 %v392
        %v3431 = vunpack.c.h.bf16 %v392
        %v3432 = vunpack.c.l.bf16 %v393
        %v3433 = vunpack.c.h.bf16 %v393
        %v3434 = vunpack.c.l.bf16 %v394
        %v3435 = vunpack.c.h.bf16 %v394
        %v3436 = vunpack.c.l.bf16 %v395
        %v3437 = vunpack.c.h.bf16 %v395
        %v3438 = vunpack.c.l.bf16 %v396
        %v3439 = vunpack.c.h.bf16 %v396
        %v3440 = vunpack.c.l.bf16 %v397
        %v3441 = vunpack.c.h.bf16 %v397
        %v3442 = vadd.f32 %v3332, %v3410
        %v3443 = vadd.f32 %v3334, %v3411
        %v3444 = vadd.f32 %v3336, %v3412
        %v3445 = vadd.f32 %v3338, %v3413
        %v3446 = vadd.f32 %v3342, %v3414
        %v3447 = vadd.f32 %v3344, %v3415
        %v3448 = vadd.f32 %v3346, %v3416
        %v3449 = vadd.f32 %v3348, %v3417
        %v3450 = vadd.f32 %v3352, %v3418
        %v3451 = vadd.f32 %v3354, %v3419
        %v3452 = vadd.f32 %v3356, %v3420
        %v3453 = vadd.f32 %v3358, %v3421
        %v3454 = vadd.f32 %v3362, %v3422
        %v3455 = vadd.f32 %v3364, %v3423
        %v3456 = vadd.f32 %v3366, %v3424
        %v3457 = vadd.f32 %v3368, %v3425
        %v3458 = vadd.f32 %v3372, %v3426
        %v3459 = vadd.f32 %v3374, %v3427
        %v3460 = vadd.f32 %v3376, %v3428
        %v3461 = vadd.f32 %v3378, %v3429
        %v3462 = vadd.f32 %v3382, %v3430
        %v3463 = vadd.f32 %v3384, %v3431
        %v3464 = vadd.f32 %v3386, %v3432
        %v3465 = vadd.f32 %v3388, %v3433
        %v3466 = vadd.f32 %v3392, %v3434
        %v3467 = vadd.f32 %v3394, %v3435
        %v3468 = vadd.f32 %v3396, %v3436
        %v3469 = vadd.f32 %v3398, %v3437
        %v3470 = vadd.f32 %v3402, %v3438
        %v3471 = vadd.f32 %v3404, %v3439
        %v3472 = vadd.f32 %v3406, %v3440
        %v3473 = vadd.f32 %v3408, %v3441
        %v3474 = vpack.c.bf16 %v3444, %v3442
        %v3475 = vpack.c.bf16 %v3445, %v3443
        %v3476 = vpack.c.bf16 %v3448, %v3446
        %v3477 = vpack.c.bf16 %v3449, %v3447
        %v3478 = vpack.c.bf16 %v3452, %v3450
        %v3479 = vpack.c.bf16 %v3453, %v3451
        %v3480 = vpack.c.bf16 %v3456, %v3454
        %v3481 = vpack.c.bf16 %v3457, %v3455
        %v3482 = vpack.c.bf16 %v3460, %v3458
        %v3483 = vpack.c.bf16 %v3461, %v3459
        %v3484 = vpack.c.bf16 %v3464, %v3462
        %v3485 = vpack.c.bf16 %v3465, %v3463
        %v3486 = vpack.c.bf16 %v3468, %v3466
        %v3487 = vpack.c.bf16 %v3469, %v3467
        %v3488 = vpack.c.bf16 %v3472, %v3470
        %v3489 = vpack.c.bf16 %v3473, %v3471
        %v3490 = vld [vmem:[#allocation7] sm:$0xff]
        %v3491 = vld [vmem:[#allocation7 + $0x8] sm:$0xff]
        %v3492 = vld [vmem:[#allocation7 + $0x10] sm:$0xff]
        %v3493 = vld [vmem:[#allocation7 + $0x18] sm:$0xff]
        %v3494 = vld [vmem:[#allocation7 + $0x20] sm:$0xff]
        %v3495 = vld [vmem:[#allocation7 + $0x28] sm:$0xff]
        %v3496 = vld [vmem:[#allocation7 + $0x30] sm:$0xff]
        %v3497 = vld [vmem:[#allocation7 + $0x38] sm:$0xff]
        %v3498 = vld [vmem:[#allocation7 + $0x40] sm:$0xff]
        %v3499 = vld [vmem:[#allocation7 + $0x48] sm:$0xff]
        %v3500 = vld [vmem:[#allocation7 + $0x50] sm:$0xff]
        %v3501 = vld [vmem:[#allocation7 + $0x58] sm:$0xff]
        %v3502 = vld [vmem:[#allocation7 + $0x60] sm:$0xff]
        %v3503 = vld [vmem:[#allocation7 + $0x68] sm:$0xff]
        %v3504 = vld [vmem:[#allocation7 + $0x70] sm:$0xff]
        %v3505 = vld [vmem:[#allocation7 + $0x78] sm:$0xff]
        %v3506 = vld [vmem:[#allocation7 + $0x80] sm:$0xff]
        %v3507 = vld [vmem:[#allocation7 + $0x88] sm:$0xff]
        %v3508 = vld [vmem:[#allocation7 + $0x90] sm:$0xff]
        %v3509 = vld [vmem:[#allocation7 + $0x98] sm:$0xff]
        %v3510 = vld [vmem:[#allocation7 + $0xa0] sm:$0xff]
        %v3511 = vld [vmem:[#allocation7 + $0xa8] sm:$0xff]
        %v3512 = vld [vmem:[#allocation7 + $0xb0] sm:$0xff]
        %v3513 = vld [vmem:[#allocation7 + $0xb8] sm:$0xff]
        %v3514 = vld [vmem:[#allocation7 + $0xc0] sm:$0xff]
        %v3515 = vld [vmem:[#allocation7 + $0xc8] sm:$0xff]
        %v3516 = vld [vmem:[#allocation7 + $0xd0] sm:$0xff]
        %v3517 = vld [vmem:[#allocation7 + $0xd8] sm:$0xff]
        %v3518 = vld [vmem:[#allocation7 + $0xe0] sm:$0xff]
        %v3519 = vld [vmem:[#allocation7 + $0xe8] sm:$0xff]
        %v3520 = vld [vmem:[#allocation7 + $0xf0] sm:$0xff]
        %v3521 = vld [vmem:[#allocation7 + $0xf8] sm:$0xff]
        %v3522 = vld [vmem:[#allocation7 + $0x100] sm:$0xff]
        %v3523 = vld [vmem:[#allocation7 + $0x108] sm:$0xff]
        %v3524 = vld [vmem:[#allocation7 + $0x110] sm:$0xff]
        %v3525 = vld [vmem:[#allocation7 + $0x118] sm:$0xff]
        %v3526 = vld [vmem:[#allocation7 + $0x120] sm:$0xff]
        %v3527 = vld [vmem:[#allocation7 + $0x128] sm:$0xff]
        %v3528 = vld [vmem:[#allocation7 + $0x130] sm:$0xff]
        %v3529 = vld [vmem:[#allocation7 + $0x138] sm:$0xff]
        %v3530 = vld [vmem:[#allocation7 + $0x140] sm:$0xff]
        %v3531 = vld [vmem:[#allocation7 + $0x148] sm:$0xff]
        %v3532 = vld [vmem:[#allocation7 + $0x150] sm:$0xff]
        %v3533 = vld [vmem:[#allocation7 + $0x158] sm:$0xff]
        %v3534 = vld [vmem:[#allocation7 + $0x160] sm:$0xff]
        %v3535 = vld [vmem:[#allocation7 + $0x168] sm:$0xff]
        %v3536 = vld [vmem:[#allocation7 + $0x170] sm:$0xff]
        %v3537 = vld [vmem:[#allocation7 + $0x178] sm:$0xff]
        %v3538 = vld [vmem:[#allocation7 + $0x180] sm:$0xff]
        %v3539 = vld [vmem:[#allocation7 + $0x188] sm:$0xff]
        %v3540 = vld [vmem:[#allocation7 + $0x190] sm:$0xff]
        %v3541 = vld [vmem:[#allocation7 + $0x198] sm:$0xff]
        %v3542 = vld [vmem:[#allocation7 + $0x1a0] sm:$0xff]
        %v3543 = vld [vmem:[#allocation7 + $0x1a8] sm:$0xff]
        %v3544 = vld [vmem:[#allocation7 + $0x1b0] sm:$0xff]
        %v3545 = vld [vmem:[#allocation7 + $0x1b8] sm:$0xff]
        %v3546 = vld [vmem:[#allocation7 + $0x1c0] sm:$0xff]
        %v3547 = vld [vmem:[#allocation7 + $0x1c8] sm:$0xff]
        %v3548 = vld [vmem:[#allocation7 + $0x1d0] sm:$0xff]
        %v3549 = vld [vmem:[#allocation7 + $0x1d8] sm:$0xff]
        %v3550 = vld [vmem:[#allocation7 + $0x1e0] sm:$0xff]
        %v3551 = vld [vmem:[#allocation7 + $0x1e8] sm:$0xff]
        %v3552 = vld [vmem:[#allocation7 + $0x1f0] sm:$0xff]
        %v3553 = vld [vmem:[#allocation7 + $0x1f8] sm:$0xff]
        %v3554 = vld [vmem:[%s6] sm:$0xf]
        %v3556 = vlaneseq
        %v3557 = vshrl.u32 %v3556, 7
        %v3558 = vsub.s32 0, %v3557
        %v3559 = vrot.slane %v3554, %v3558
        %v3560 = vlaneseq
        %v3561 = vshrl.u32 %v3560, 7
        %v3562 = vsub.s32 1, %v3561
        %v3563 = vrot.slane %v3554, %v3562
        %v3564 = vlaneseq
        %v3565 = vshrl.u32 %v3564, 7
        %v3566 = vsub.s32 2, %v3565
        %v3567 = vrot.slane %v3554, %v3566
        %v3568 = vlaneseq
        %v3569 = vshrl.u32 %v3568, 7
        %v3570 = vsub.s32 3, %v3569
        %v3571 = vrot.slane %v3554, %v3570
        %v3640 = vunpack.c.l.b16 %v3490
        %v3641 = vunpack.c.h.b16 %v3490
        %v3642 = vunpack.c.l.b16 %v3491
        %v3643 = vunpack.c.h.b16 %v3491
        %v3644 = vunpack.c.l.b16 %v3492
        %v3645 = vunpack.c.h.b16 %v3492
        %v3646 = vunpack.c.l.b16 %v3493
        %v3647 = vunpack.c.h.b16 %v3493
        %v3648 = vunpack.c.l.b16 %v3494
        %v3649 = vunpack.c.h.b16 %v3494
        %v3650 = vunpack.c.l.b16 %v3495
        %v3651 = vunpack.c.h.b16 %v3495
        %v3652 = vunpack.c.l.b16 %v3496
        %v3653 = vunpack.c.h.b16 %v3496
        %v3654 = vunpack.c.l.b16 %v3497
        %v3655 = vunpack.c.h.b16 %v3497
        %v3656 = vunpack.c.l.b16 %v3498
        %v3657 = vunpack.c.h.b16 %v3498
        %v3658 = vunpack.c.l.b16 %v3499
        %v3659 = vunpack.c.h.b16 %v3499
        %v3660 = vunpack.c.l.b16 %v3500
        %v3661 = vunpack.c.h.b16 %v3500
        %v3662 = vunpack.c.l.b16 %v3501
        %v3663 = vunpack.c.h.b16 %v3501
        %v3664 = vunpack.c.l.b16 %v3502
        %v3665 = vunpack.c.h.b16 %v3502
        %v3666 = vunpack.c.l.b16 %v3503
        %v3667 = vunpack.c.h.b16 %v3503
        %v3668 = vunpack.c.l.b16 %v3504
        %v3669 = vunpack.c.h.b16 %v3504
        %v3670 = vunpack.c.l.b16 %v3505
        %v3671 = vunpack.c.h.b16 %v3505
        %v3672 = vunpack.c.l.b16 %v3506
        %v3673 = vunpack.c.h.b16 %v3506
        %v3674 = vunpack.c.l.b16 %v3507
        %v3675 = vunpack.c.h.b16 %v3507
        %v3676 = vunpack.c.l.b16 %v3508
        %v3677 = vunpack.c.h.b16 %v3508
        %v3678 = vunpack.c.l.b16 %v3509
        %v3679 = vunpack.c.h.b16 %v3509
        %v3680 = vunpack.c.l.b16 %v3510
        %v3681 = vunpack.c.h.b16 %v3510
        %v3682 = vunpack.c.l.b16 %v3511
        %v3683 = vunpack.c.h.b16 %v3511
        %v3684 = vunpack.c.l.b16 %v3512
        %v3685 = vunpack.c.h.b16 %v3512
        %v3686 = vunpack.c.l.b16 %v3513
        %v3687 = vunpack.c.h.b16 %v3513
        %v3688 = vunpack.c.l.b16 %v3514
        %v3689 = vunpack.c.h.b16 %v3514
        %v3690 = vunpack.c.l.b16 %v3515
        %v3691 = vunpack.c.h.b16 %v3515
        %v3692 = vunpack.c.l.b16 %v3516
        %v3693 = vunpack.c.h.b16 %v3516
        %v3694 = vunpack.c.l.b16 %v3517
        %v3695 = vunpack.c.h.b16 %v3517
        %v3696 = vunpack.c.l.b16 %v3518
        %v3697 = vunpack.c.h.b16 %v3518
        %v3698 = vunpack.c.l.b16 %v3519
        %v3699 = vunpack.c.h.b16 %v3519
        %v3700 = vunpack.c.l.b16 %v3520
        %v3701 = vunpack.c.h.b16 %v3520
        %v3702 = vunpack.c.l.b16 %v3521
        %v3703 = vunpack.c.h.b16 %v3521
        %v3704 = vunpack.c.l.b16 %v3522
        %v3705 = vunpack.c.h.b16 %v3522
        %v3706 = vunpack.c.l.b16 %v3523
        %v3707 = vunpack.c.h.b16 %v3523
        %v3708 = vunpack.c.l.b16 %v3524
        %v3709 = vunpack.c.h.b16 %v3524
        %v3710 = vunpack.c.l.b16 %v3525
        %v3711 = vunpack.c.h.b16 %v3525
        %v3712 = vunpack.c.l.b16 %v3526
        %v3713 = vunpack.c.h.b16 %v3526
        %v3714 = vunpack.c.l.b16 %v3527
        %v3715 = vunpack.c.h.b16 %v3527
        %v3716 = vunpack.c.l.b16 %v3528
        %v3717 = vunpack.c.h.b16 %v3528
        %v3718 = vunpack.c.l.b16 %v3529
        %v3719 = vunpack.c.h.b16 %v3529
        %v3720 = vunpack.c.l.b16 %v3530
        %v3721 = vunpack.c.h.b16 %v3530
        %v3722 = vunpack.c.l.b16 %v3531
        %v3723 = vunpack.c.h.b16 %v3531
        %v3724 = vunpack.c.l.b16 %v3532
        %v3725 = vunpack.c.h.b16 %v3532
        %v3726 = vunpack.c.l.b16 %v3533
        %v3727 = vunpack.c.h.b16 %v3533
        %v3728 = vunpack.c.l.b16 %v3534
        %v3729 = vunpack.c.h.b16 %v3534
        %v3730 = vunpack.c.l.b16 %v3535
        %v3731 = vunpack.c.h.b16 %v3535
        %v3732 = vunpack.c.l.b16 %v3536
        %v3733 = vunpack.c.h.b16 %v3536
        %v3734 = vunpack.c.l.b16 %v3537
        %v3735 = vunpack.c.h.b16 %v3537
        %v3736 = vunpack.c.l.b16 %v3538
        %v3737 = vunpack.c.h.b16 %v3538
        %v3738 = vunpack.c.l.b16 %v3539
        %v3739 = vunpack.c.h.b16 %v3539
        %v3740 = vunpack.c.l.b16 %v3540
        %v3741 = vunpack.c.h.b16 %v3540
        %v3742 = vunpack.c.l.b16 %v3541
        %v3743 = vunpack.c.h.b16 %v3541
        %v3744 = vunpack.c.l.b16 %v3542
        %v3745 = vunpack.c.h.b16 %v3542
        %v3746 = vunpack.c.l.b16 %v3543
        %v3747 = vunpack.c.h.b16 %v3543
        %v3748 = vunpack.c.l.b16 %v3544
        %v3749 = vunpack.c.h.b16 %v3544
        %v3750 = vunpack.c.l.b16 %v3545
        %v3751 = vunpack.c.h.b16 %v3545
        %v3752 = vunpack.c.l.b16 %v3546
        %v3753 = vunpack.c.h.b16 %v3546
        %v3754 = vunpack.c.l.b16 %v3547
        %v3755 = vunpack.c.h.b16 %v3547
        %v3756 = vunpack.c.l.b16 %v3548
        %v3757 = vunpack.c.h.b16 %v3548
        %v3758 = vunpack.c.l.b16 %v3549
        %v3759 = vunpack.c.h.b16 %v3549
        %v3760 = vunpack.c.l.b16 %v3550
        %v3761 = vunpack.c.h.b16 %v3550
        %v3762 = vunpack.c.l.b16 %v3551
        %v3763 = vunpack.c.h.b16 %v3551
        %v3764 = vunpack.c.l.b16 %v3552
        %v3765 = vunpack.c.h.b16 %v3552
        %v3766 = vunpack.c.l.b16 %v3553
        %v3767 = vunpack.c.h.b16 %v3553
        %v3768 = vpack.c.b16 %v3644, %v3640
        %v3769 = vpack.c.b16 %v3645, %v3641
        %v3770 = vpack.c.b16 %v3646, %v3642
        %v3771 = vpack.c.b16 %v3647, %v3643
        %v3772 = vpack.c.b16 %v3652, %v3648
        %v3773 = vpack.c.b16 %v3653, %v3649
        %v3774 = vpack.c.b16 %v3654, %v3650
        %v3775 = vpack.c.b16 %v3655, %v3651
        %v3776 = vpack.c.b16 %v3660, %v3656
        %v3777 = vpack.c.b16 %v3661, %v3657
        %v3778 = vpack.c.b16 %v3662, %v3658
        %v3779 = vpack.c.b16 %v3663, %v3659
        %v3780 = vpack.c.b16 %v3668, %v3664
        %v3781 = vpack.c.b16 %v3669, %v3665
        %v3782 = vpack.c.b16 %v3670, %v3666
        %v3783 = vpack.c.b16 %v3671, %v3667
        %v3784 = vpack.c.b16 %v3676, %v3672
        %v3785 = vpack.c.b16 %v3677, %v3673
        %v3786 = vpack.c.b16 %v3678, %v3674
        %v3787 = vpack.c.b16 %v3679, %v3675
        %v3788 = vpack.c.b16 %v3684, %v3680
        %v3789 = vpack.c.b16 %v3685, %v3681
        %v3790 = vpack.c.b16 %v3686, %v3682
        %v3791 = vpack.c.b16 %v3687, %v3683
        %v3792 = vpack.c.b16 %v3692, %v3688
        %v3793 = vpack.c.b16 %v3693, %v3689
        %v3794 = vpack.c.b16 %v3694, %v3690
        %v3795 = vpack.c.b16 %v3695, %v3691
        %v3796 = vpack.c.b16 %v3700, %v3696
        %v3797 = vpack.c.b16 %v3701, %v3697
        %v3798 = vpack.c.b16 %v3702, %v3698
        %v3799 = vpack.c.b16 %v3703, %v3699
        %v3800 = vpack.c.b16 %v3708, %v3704
        %v3801 = vpack.c.b16 %v3709, %v3705
        %v3802 = vpack.c.b16 %v3710, %v3706
        %v3803 = vpack.c.b16 %v3711, %v3707
        %v3804 = vpack.c.b16 %v3716, %v3712
        %v3805 = vpack.c.b16 %v3717, %v3713
        %v3806 = vpack.c.b16 %v3718, %v3714
        %v3807 = vpack.c.b16 %v3719, %v3715
        %v3808 = vpack.c.b16 %v3724, %v3720
        %v3809 = vpack.c.b16 %v3725, %v3721
        %v3810 = vpack.c.b16 %v3726, %v3722
        %v3811 = vpack.c.b16 %v3727, %v3723
        %v3812 = vpack.c.b16 %v3732, %v3728
        %v3813 = vpack.c.b16 %v3733, %v3729
        %v3814 = vpack.c.b16 %v3734, %v3730
        %v3815 = vpack.c.b16 %v3735, %v3731
        %v3816 = vpack.c.b16 %v3740, %v3736
        %v3817 = vpack.c.b16 %v3741, %v3737
        %v3818 = vpack.c.b16 %v3742, %v3738
        %v3819 = vpack.c.b16 %v3743, %v3739
        %v3820 = vpack.c.b16 %v3748, %v3744
        %v3821 = vpack.c.b16 %v3749, %v3745
        %v3822 = vpack.c.b16 %v3750, %v3746
        %v3823 = vpack.c.b16 %v3751, %v3747
        %v3824 = vpack.c.b16 %v3756, %v3752
        %v3825 = vpack.c.b16 %v3757, %v3753
        %v3826 = vpack.c.b16 %v3758, %v3754
        %v3827 = vpack.c.b16 %v3759, %v3755
        %v3828 = vpack.c.b16 %v3764, %v3760
        %v3829 = vpack.c.b16 %v3765, %v3761
        %v3830 = vpack.c.b16 %v3766, %v3762
        %v3831 = vpack.c.b16 %v3767, %v3763
        %3896 = vmatprep.subr.bf16.mxu0 %v3797
        %3897 = vmatpush1.bf16.msra.mxu0 %v3796
        %3898 = vmatprep.subr.bf16.mxu0 %v3793
        %3899 = vmatpush1.bf16.msra.mxu0 %v3792
        %3900 = vmatprep.subr.bf16.mxu0 %v3789
        %3901 = vmatpush1.bf16.msra.mxu0 %v3788
        %3902 = vmatprep.subr.bf16.mxu0 %v3785
        %3903 = vmatpush1.bf16.msra.mxu0 %v3784
        %3904 = vmatprep.subr.bf16.mxu0 %v3781
        %3905 = vmatpush1.bf16.msra.mxu0 %v3780
        %3906 = vmatprep.subr.bf16.mxu0 %v3777
        %3907 = vmatpush1.bf16.msra.mxu0 %v3776
        %3908 = vmatprep.subr.bf16.mxu0 %v3773
        %3909 = vmatpush1.bf16.msra.mxu0 %v3772
        %3910 = vmatprep.subr.bf16.mxu0 %v3769
        %3911 = vmatpush1.bf16.msra.mxu0 %v3768
        %3912 = vmatprep.subr.bf16.mxu0 %v3829
        %3913 = vmatpush2.bf16.msra.mxu0 %v3828
        %3914 = vmatprep.subr.bf16.mxu0 %v3825
        %3915 = vmatpush2.bf16.msra.mxu0 %v3824
        %3916 = vmatprep.subr.bf16.mxu0 %v3821
        %3917 = vmatpush2.bf16.msra.mxu0 %v3820
        %3918 = vmatprep.subr.bf16.mxu0 %v3817
        %3919 = vmatpush2.bf16.msra.mxu0 %v3816
        %3920 = vmatprep.subr.bf16.mxu0 %v3813
        %3921 = vmatpush2.bf16.msra.mxu0 %v3812
        %3922 = vmatprep.subr.bf16.mxu0 %v3809
        %3923 = vmatpush2.bf16.msra.mxu0 %v3808
        %3924 = vmatprep.subr.bf16.mxu0 %v3805
        %3925 = vmatpush2.bf16.msra.mxu0 %v3804
        %3926 = vmatprep.subr.bf16.mxu0 %v3801
        %3927 = vmatpush2.bf16.msra.mxu0 %v3800
        %3928 = vmatprep.mubr.bf16.mxu0 %v3475
        %3929 = vmatmul.mubr.bf16.gmra.mxu0 %v3474
        %v3930 = vpop.f32.mrf.mxu0
        %v3931 = vadd.f32 %v3559, %v3930
        %v3932 = vpop.f32.mrf.mxu0
        %v3933 = vadd.f32 %v3563, %v3932
        %v3934 = vpop.f32.mrf.mxu0
        %v3935 = vadd.f32 %v3559, %v3934
        %v3936 = vpop.f32.mrf.mxu0
        %v3937 = vadd.f32 %v3563, %v3936
        %3938 = vmatprep.mubr.bf16.mxu0 %v3477
        %3939 = vmatmul.mubr.bf16.gmra.mxu0 %v3476
        %v3940 = vpop.f32.mrf.mxu0
        %v3941 = vadd.f32 %v3559, %v3940
        %v3942 = vpop.f32.mrf.mxu0
        %v3943 = vadd.f32 %v3563, %v3942
        %v3944 = vpop.f32.mrf.mxu0
        %v3945 = vadd.f32 %v3559, %v3944
        %v3946 = vpop.f32.mrf.mxu0
        %v3947 = vadd.f32 %v3563, %v3946
        %3948 = vmatprep.mubr.bf16.mxu0 %v3479
        %3949 = vmatmul.mubr.bf16.gmra.mxu0 %v3478
        %v3950 = vpop.f32.mrf.mxu0
        %v3951 = vadd.f32 %v3559, %v3950
        %v3952 = vpop.f32.mrf.mxu0
        %v3953 = vadd.f32 %v3563, %v3952
        %v3954 = vpop.f32.mrf.mxu0
        %v3955 = vadd.f32 %v3559, %v3954
        %v3956 = vpop.f32.mrf.mxu0
        %v3957 = vadd.f32 %v3563, %v3956
        %3958 = vmatprep.mubr.bf16.mxu0 %v3481
        %3959 = vmatmul.mubr.bf16.gmra.mxu0 %v3480
        %v3960 = vpop.f32.mrf.mxu0
        %v3961 = vadd.f32 %v3559, %v3960
        %v3962 = vpop.f32.mrf.mxu0
        %v3963 = vadd.f32 %v3563, %v3962
        %v3964 = vpop.f32.mrf.mxu0
        %v3965 = vadd.f32 %v3559, %v3964
        %v3966 = vpop.f32.mrf.mxu0
        %v3967 = vadd.f32 %v3563, %v3966
        %3968 = vmatprep.mubr.bf16.mxu0 %v3483
        %3969 = vmatmul.mubr.bf16.gmra.mxu0 %v3482
        %v3970 = vpop.f32.mrf.mxu0
        %v3971 = vadd.f32 %v3559, %v3970
        %v3972 = vpop.f32.mrf.mxu0
        %v3973 = vadd.f32 %v3563, %v3972
        %v3974 = vpop.f32.mrf.mxu0
        %v3975 = vadd.f32 %v3559, %v3974
        %v3976 = vpop.f32.mrf.mxu0
        %v3977 = vadd.f32 %v3563, %v3976
        %3978 = vmatprep.mubr.bf16.mxu0 %v3485
        %3979 = vmatmul.mubr.bf16.gmra.mxu0 %v3484
        %v3980 = vpop.f32.mrf.mxu0
        %v3981 = vadd.f32 %v3559, %v3980
        %v3982 = vpop.f32.mrf.mxu0
        %v3983 = vadd.f32 %v3563, %v3982
        %v3984 = vpop.f32.mrf.mxu0
        %v3985 = vadd.f32 %v3559, %v3984
        %v3986 = vpop.f32.mrf.mxu0
        %v3987 = vadd.f32 %v3563, %v3986
        %3988 = vmatprep.mubr.bf16.mxu0 %v3487
        %3989 = vmatmul.mubr.bf16.gmra.mxu0 %v3486
        %v3990 = vpop.f32.mrf.mxu0
        %v3991 = vadd.f32 %v3559, %v3990
        %v3992 = vpop.f32.mrf.mxu0
        %v3993 = vadd.f32 %v3563, %v3992
        %v3994 = vpop.f32.mrf.mxu0
        %v3995 = vadd.f32 %v3559, %v3994
        %v3996 = vpop.f32.mrf.mxu0
        %v3997 = vadd.f32 %v3563, %v3996
        %3998 = vmatprep.mubr.bf16.mxu0 %v3489
        %3999 = vmatmul.mubr.bf16.gmra.mxu0 %v3488
        %v4000 = vpop.f32.mrf.mxu0
        %v4001 = vadd.f32 %v3559, %v4000
        %v4002 = vpop.f32.mrf.mxu0
        %v4003 = vadd.f32 %v3563, %v4002
        %v4004 = vpop.f32.mrf.mxu0
        %v4005 = vadd.f32 %v3559, %v4004
        %v4006 = vpop.f32.mrf.mxu0
        %v4007 = vadd.f32 %v3563, %v4006
        %4008 = vdwg.mxu0
        %4009 = vmatprep.subr.bf16.mxu0 %v3799
        %4010 = vmatpush1.bf16.msra.mxu0 %v3798
        %4011 = vmatprep.subr.bf16.mxu0 %v3795
        %4012 = vmatpush1.bf16.msra.mxu0 %v3794
        %4013 = vmatprep.subr.bf16.mxu0 %v3791
        %4014 = vmatpush1.bf16.msra.mxu0 %v3790
        %4015 = vmatprep.subr.bf16.mxu0 %v3787
        %4016 = vmatpush1.bf16.msra.mxu0 %v3786
        %4017 = vmatprep.subr.bf16.mxu0 %v3783
        %4018 = vmatpush1.bf16.msra.mxu0 %v3782
        %4019 = vmatprep.subr.bf16.mxu0 %v3779
        %4020 = vmatpush1.bf16.msra.mxu0 %v3778
        %4021 = vmatprep.subr.bf16.mxu0 %v3775
        %4022 = vmatpush1.bf16.msra.mxu0 %v3774
        %4023 = vmatprep.subr.bf16.mxu0 %v3771
        %4024 = vmatpush1.bf16.msra.mxu0 %v3770
        %4025 = vmatprep.subr.bf16.mxu0 %v3831
        %4026 = vmatpush2.bf16.msra.mxu0 %v3830
        %4027 = vmatprep.subr.bf16.mxu0 %v3827
        %4028 = vmatpush2.bf16.msra.mxu0 %v3826
        %4029 = vmatprep.subr.bf16.mxu0 %v3823
        %4030 = vmatpush2.bf16.msra.mxu0 %v3822
        %4031 = vmatprep.subr.bf16.mxu0 %v3819
        %4032 = vmatpush2.bf16.msra.mxu0 %v3818
        %4033 = vmatprep.subr.bf16.mxu0 %v3815
        %4034 = vmatpush2.bf16.msra.mxu0 %v3814
        %4035 = vmatprep.subr.bf16.mxu0 %v3811
        %4036 = vmatpush2.bf16.msra.mxu0 %v3810
        %4037 = vmatprep.subr.bf16.mxu0 %v3807
        %4038 = vmatpush2.bf16.msra.mxu0 %v3806
        %4039 = vmatprep.subr.bf16.mxu0 %v3803
        %4040 = vmatpush2.bf16.msra.mxu0 %v3802
        %4041 = vmatprep.mubr.bf16.mxu0 %v3475
        %4042 = vmatmul.mubr.bf16.gmra.mxu0 %v3474
        %v4043 = vpop.f32.mrf.mxu0
        %v4044 = vadd.f32 %v3567, %v4043
        %v4045 = vpop.f32.mrf.mxu0
        %v4046 = vadd.f32 %v3571, %v4045
        %v4047 = vpop.f32.mrf.mxu0
        %v4048 = vadd.f32 %v3567, %v4047
        %v4049 = vpop.f32.mrf.mxu0
        %v4050 = vadd.f32 %v3571, %v4049
        %4051 = vmatprep.mubr.bf16.mxu0 %v3477
        %4052 = vmatmul.mubr.bf16.gmra.mxu0 %v3476
        %v4053 = vpop.f32.mrf.mxu0
        %v4054 = vadd.f32 %v3567, %v4053
        %v4055 = vpop.f32.mrf.mxu0
        %v4056 = vadd.f32 %v3571, %v4055
        %v4057 = vpop.f32.mrf.mxu0
        %v4058 = vadd.f32 %v3567, %v4057
        %v4059 = vpop.f32.mrf.mxu0
        %v4060 = vadd.f32 %v3571, %v4059
        %4061 = vmatprep.mubr.bf16.mxu0 %v3479
        %4062 = vmatmul.mubr.bf16.gmra.mxu0 %v3478
        %v4063 = vpop.f32.mrf.mxu0
        %v4064 = vadd.f32 %v3567, %v4063
        %v4065 = vpop.f32.mrf.mxu0
        %v4066 = vadd.f32 %v3571, %v4065
        %v4067 = vpop.f32.mrf.mxu0
        %v4068 = vadd.f32 %v3567, %v4067
        %v4069 = vpop.f32.mrf.mxu0
        %v4070 = vadd.f32 %v3571, %v4069
        %4071 = vmatprep.mubr.bf16.mxu0 %v3481
        %4072 = vmatmul.mubr.bf16.gmra.mxu0 %v3480
        %v4073 = vpop.f32.mrf.mxu0
        %v4074 = vadd.f32 %v3567, %v4073
        %v4075 = vpop.f32.mrf.mxu0
        %v4076 = vadd.f32 %v3571, %v4075
        %v4077 = vpop.f32.mrf.mxu0
        %v4078 = vadd.f32 %v3567, %v4077
        %v4079 = vpop.f32.mrf.mxu0
        %v4080 = vadd.f32 %v3571, %v4079
        %4081 = vmatprep.mubr.bf16.mxu0 %v3483
        %4082 = vmatmul.mubr.bf16.gmra.mxu0 %v3482
        %v4083 = vpop.f32.mrf.mxu0
        %v4084 = vadd.f32 %v3567, %v4083
        %v4085 = vpop.f32.mrf.mxu0
        %v4086 = vadd.f32 %v3571, %v4085
        %v4087 = vpop.f32.mrf.mxu0
        %v4088 = vadd.f32 %v3567, %v4087
        %v4089 = vpop.f32.mrf.mxu0
        %v4090 = vadd.f32 %v3571, %v4089
        %4091 = vmatprep.mubr.bf16.mxu0 %v3485
        %4092 = vmatmul.mubr.bf16.gmra.mxu0 %v3484
        %v4093 = vpop.f32.mrf.mxu0
        %v4094 = vadd.f32 %v3567, %v4093
        %v4095 = vpop.f32.mrf.mxu0
        %v4096 = vadd.f32 %v3571, %v4095
        %v4097 = vpop.f32.mrf.mxu0
        %v4098 = vadd.f32 %v3567, %v4097
        %v4099 = vpop.f32.mrf.mxu0
        %v4100 = vadd.f32 %v3571, %v4099
        %4101 = vmatprep.mubr.bf16.mxu0 %v3487
        %4102 = vmatmul.mubr.bf16.gmra.mxu0 %v3486
        %v4103 = vpop.f32.mrf.mxu0
        %v4104 = vadd.f32 %v3567, %v4103
        %v4105 = vpop.f32.mrf.mxu0
        %v4106 = vadd.f32 %v3571, %v4105
        %v4107 = vpop.f32.mrf.mxu0
        %v4108 = vadd.f32 %v3567, %v4107
        %v4109 = vpop.f32.mrf.mxu0
        %v4110 = vadd.f32 %v3571, %v4109
        %4111 = vmatprep.mubr.bf16.mxu0 %v3489
        %4112 = vmatmul.mubr.bf16.gmra.mxu0 %v3488
        %v4113 = vpop.f32.mrf.mxu0
        %v4114 = vadd.f32 %v3567, %v4113
        %v4115 = vpop.f32.mrf.mxu0
        %v4116 = vadd.f32 %v3571, %v4115
        %v4117 = vpop.f32.mrf.mxu0
        %v4118 = vadd.f32 %v3567, %v4117
        %v4119 = vpop.f32.mrf.mxu0
        %v4120 = vadd.f32 %v3571, %v4119
        %4121 = vdwg.mxu0
        %v4122 = vmax.f32 %v3931, 0.0
        %v4123 = vmax.f32 %v3933, 0.0
        %v4124 = vmax.f32 %v4044, 0.0
        %v4125 = vmax.f32 %v4046, 0.0
        %v4126 = vmax.f32 %v3935, 0.0
        %v4127 = vmax.f32 %v3937, 0.0
        %v4128 = vmax.f32 %v4048, 0.0
        %v4129 = vmax.f32 %v4050, 0.0
        %v4130 = vmax.f32 %v3941, 0.0
        %v4131 = vmax.f32 %v3943, 0.0
        %v4132 = vmax.f32 %v4054, 0.0
        %v4133 = vmax.f32 %v4056, 0.0
        %v4134 = vmax.f32 %v3945, 0.0
        %v4135 = vmax.f32 %v3947, 0.0
        %v4136 = vmax.f32 %v4058, 0.0
        %v4137 = vmax.f32 %v4060, 0.0
        %v4138 = vmax.f32 %v3951, 0.0
        %v4139 = vmax.f32 %v3953, 0.0
        %v4140 = vmax.f32 %v4064, 0.0
        %v4141 = vmax.f32 %v4066, 0.0
        %v4142 = vmax.f32 %v3955, 0.0
        %v4143 = vmax.f32 %v3957, 0.0
        %v4144 = vmax.f32 %v4068, 0.0
        %v4145 = vmax.f32 %v4070, 0.0
        %v4146 = vmax.f32 %v3961, 0.0
        %v4147 = vmax.f32 %v3963, 0.0
        %v4148 = vmax.f32 %v4074, 0.0
        %v4149 = vmax.f32 %v4076, 0.0
        %v4150 = vmax.f32 %v3965, 0.0
        %v4151 = vmax.f32 %v3967, 0.0
        %v4152 = vmax.f32 %v4078, 0.0
        %v4153 = vmax.f32 %v4080, 0.0
        %v4154 = vmax.f32 %v3971, 0.0
        %v4155 = vmax.f32 %v3973, 0.0
        %v4156 = vmax.f32 %v4084, 0.0
        %v4157 = vmax.f32 %v4086, 0.0
        %v4158 = vmax.f32 %v3975, 0.0
        %v4159 = vmax.f32 %v3977, 0.0
        %v4160 = vmax.f32 %v4088, 0.0
        %v4161 = vmax.f32 %v4090, 0.0
        %v4162 = vmax.f32 %v3981, 0.0
        %v4163 = vmax.f32 %v3983, 0.0
        %v4164 = vmax.f32 %v4094, 0.0
        %v4165 = vmax.f32 %v4096, 0.0
        %v4166 = vmax.f32 %v3985, 0.0
        %v4167 = vmax.f32 %v3987, 0.0
        %v4168 = vmax.f32 %v4098, 0.0
        %v4169 = vmax.f32 %v4100, 0.0
        %v4170 = vmax.f32 %v3991, 0.0
        %v4171 = vmax.f32 %v3993, 0.0
        %v4172 = vmax.f32 %v4104, 0.0
        %v4173 = vmax.f32 %v4106, 0.0
        %v4174 = vmax.f32 %v3995, 0.0
        %v4175 = vmax.f32 %v3997, 0.0
        %v4176 = vmax.f32 %v4108, 0.0
        %v4177 = vmax.f32 %v4110, 0.0
        %v4178 = vmax.f32 %v4001, 0.0
        %v4179 = vmax.f32 %v4003, 0.0
        %v4180 = vmax.f32 %v4114, 0.0
        %v4181 = vmax.f32 %v4116, 0.0
        %v4182 = vmax.f32 %v4005, 0.0
        %v4183 = vmax.f32 %v4007, 0.0
        %v4184 = vmax.f32 %v4118, 0.0
        %v4185 = vmax.f32 %v4120, 0.0
        %v4186 = vpack.c.bf16 %v4126, %v4122
        %v4187 = vpack.c.bf16 %v4127, %v4123
        %v4188 = vpack.c.bf16 %v4128, %v4124
        %v4189 = vpack.c.bf16 %v4129, %v4125
        %v4190 = vpack.c.bf16 %v4134, %v4130
        %v4191 = vpack.c.bf16 %v4135, %v4131
        %v4192 = vpack.c.bf16 %v4136, %v4132
        %v4193 = vpack.c.bf16 %v4137, %v4133
        %v4194 = vpack.c.bf16 %v4142, %v4138
        %v4195 = vpack.c.bf16 %v4143, %v4139
        %v4196 = vpack.c.bf16 %v4144, %v4140
        %v4197 = vpack.c.bf16 %v4145, %v4141
        %v4198 = vpack.c.bf16 %v4150, %v4146
        %v4199 = vpack.c.bf16 %v4151, %v4147
        %v4200 = vpack.c.bf16 %v4152, %v4148
        %v4201 = vpack.c.bf16 %v4153, %v4149
        %v4202 = vpack.c.bf16 %v4158, %v4154
        %v4203 = vpack.c.bf16 %v4159, %v4155
        %v4204 = vpack.c.bf16 %v4160, %v4156
        %v4205 = vpack.c.bf16 %v4161, %v4157
        %v4206 = vpack.c.bf16 %v4166, %v4162
        %v4207 = vpack.c.bf16 %v4167, %v4163
        %v4208 = vpack.c.bf16 %v4168, %v4164
        %v4209 = vpack.c.bf16 %v4169, %v4165
        %v4210 = vpack.c.bf16 %v4174, %v4170
        %v4211 = vpack.c.bf16 %v4175, %v4171
        %v4212 = vpack.c.bf16 %v4176, %v4172
        %v4213 = vpack.c.bf16 %v4177, %v4173
        %v4214 = vpack.c.bf16 %v4182, %v4178
        %v4215 = vpack.c.bf16 %v4183, %v4179
        %v4216 = vpack.c.bf16 %v4184, %v4180
        %v4217 = vpack.c.bf16 %v4185, %v4181
        %v4218 = vld [vmem:[#allocation9] sm:$0xff]
        %v4219 = vld [vmem:[#allocation9 + $0x8] sm:$0xff]
        %v4220 = vld [vmem:[#allocation9 + $0x10] sm:$0xff]
        %v4221 = vld [vmem:[#allocation9 + $0x18] sm:$0xff]
        %v4222 = vld [vmem:[#allocation9 + $0x20] sm:$0xff]
        %v4223 = vld [vmem:[#allocation9 + $0x28] sm:$0xff]
        %v4224 = vld [vmem:[#allocation9 + $0x30] sm:$0xff]
        %v4225 = vld [vmem:[#allocation9 + $0x38] sm:$0xff]
        %v4226 = vld [vmem:[#allocation9 + $0x40] sm:$0xff]
        %v4227 = vld [vmem:[#allocation9 + $0x48] sm:$0xff]
        %v4228 = vld [vmem:[#allocation9 + $0x50] sm:$0xff]
        %v4229 = vld [vmem:[#allocation9 + $0x58] sm:$0xff]
        %v4230 = vld [vmem:[#allocation9 + $0x60] sm:$0xff]
        %v4231 = vld [vmem:[#allocation9 + $0x68] sm:$0xff]
        %v4232 = vld [vmem:[#allocation9 + $0x70] sm:$0xff]
        %v4233 = vld [vmem:[#allocation9 + $0x78] sm:$0xff]
        %v4234 = vld [vmem:[#allocation9 + $0x80] sm:$0xff]
        %v4235 = vld [vmem:[#allocation9 + $0x88] sm:$0xff]
        %v4236 = vld [vmem:[#allocation9 + $0x90] sm:$0xff]
        %v4237 = vld [vmem:[#allocation9 + $0x98] sm:$0xff]
        %v4238 = vld [vmem:[#allocation9 + $0xa0] sm:$0xff]
        %v4239 = vld [vmem:[#allocation9 + $0xa8] sm:$0xff]
        %v4240 = vld [vmem:[#allocation9 + $0xb0] sm:$0xff]
        %v4241 = vld [vmem:[#allocation9 + $0xb8] sm:$0xff]
        %v4242 = vld [vmem:[#allocation9 + $0xc0] sm:$0xff]
        %v4243 = vld [vmem:[#allocation9 + $0xc8] sm:$0xff]
        %v4244 = vld [vmem:[#allocation9 + $0xd0] sm:$0xff]
        %v4245 = vld [vmem:[#allocation9 + $0xd8] sm:$0xff]
        %v4246 = vld [vmem:[#allocation9 + $0xe0] sm:$0xff]
        %v4247 = vld [vmem:[#allocation9 + $0xe8] sm:$0xff]
        %v4248 = vld [vmem:[#allocation9 + $0xf0] sm:$0xff]
        %v4249 = vld [vmem:[#allocation9 + $0xf8] sm:$0xff]
        %v4250 = vld [vmem:[#allocation9 + $0x100] sm:$0xff]
        %v4251 = vld [vmem:[#allocation9 + $0x108] sm:$0xff]
        %v4252 = vld [vmem:[#allocation9 + $0x110] sm:$0xff]
        %v4253 = vld [vmem:[#allocation9 + $0x118] sm:$0xff]
        %v4254 = vld [vmem:[#allocation9 + $0x120] sm:$0xff]
        %v4255 = vld [vmem:[#allocation9 + $0x128] sm:$0xff]
        %v4256 = vld [vmem:[#allocation9 + $0x130] sm:$0xff]
        %v4257 = vld [vmem:[#allocation9 + $0x138] sm:$0xff]
        %v4258 = vld [vmem:[#allocation9 + $0x140] sm:$0xff]
        %v4259 = vld [vmem:[#allocation9 + $0x148] sm:$0xff]
        %v4260 = vld [vmem:[#allocation9 + $0x150] sm:$0xff]
        %v4261 = vld [vmem:[#allocation9 + $0x158] sm:$0xff]
        %v4262 = vld [vmem:[#allocation9 + $0x160] sm:$0xff]
        %v4263 = vld [vmem:[#allocation9 + $0x168] sm:$0xff]
        %v4264 = vld [vmem:[#allocation9 + $0x170] sm:$0xff]
        %v4265 = vld [vmem:[#allocation9 + $0x178] sm:$0xff]
        %v4266 = vld [vmem:[#allocation9 + $0x180] sm:$0xff]
        %v4267 = vld [vmem:[#allocation9 + $0x188] sm:$0xff]
        %v4268 = vld [vmem:[#allocation9 + $0x190] sm:$0xff]
        %v4269 = vld [vmem:[#allocation9 + $0x198] sm:$0xff]
        %v4270 = vld [vmem:[#allocation9 + $0x1a0] sm:$0xff]
        %v4271 = vld [vmem:[#allocation9 + $0x1a8] sm:$0xff]
        %v4272 = vld [vmem:[#allocation9 + $0x1b0] sm:$0xff]
        %v4273 = vld [vmem:[#allocation9 + $0x1b8] sm:$0xff]
        %v4274 = vld [vmem:[#allocation9 + $0x1c0] sm:$0xff]
        %v4275 = vld [vmem:[#allocation9 + $0x1c8] sm:$0xff]
        %v4276 = vld [vmem:[#allocation9 + $0x1d0] sm:$0xff]
        %v4277 = vld [vmem:[#allocation9 + $0x1d8] sm:$0xff]
        %v4278 = vld [vmem:[#allocation9 + $0x1e0] sm:$0xff]
        %v4279 = vld [vmem:[#allocation9 + $0x1e8] sm:$0xff]
        %v4280 = vld [vmem:[#allocation9 + $0x1f0] sm:$0xff]
        %v4281 = vld [vmem:[#allocation9 + $0x1f8] sm:$0xff]
        %v4282 = vld [vmem:[%s8] sm:$0x3]
        %v4284 = vlaneseq
        %v4285 = vshrl.u32 %v4284, 7
        %v4286 = vsub.s32 0, %v4285
        %v4287 = vrot.slane %v4282, %v4286
        %v4288 = vlaneseq
        %v4289 = vshrl.u32 %v4288, 7
        %v4290 = vsub.s32 1, %v4289
        %v4291 = vrot.slane %v4282, %v4290
        %v4358 = vunpack.c.l.b16 %v4218
        %v4359 = vunpack.c.h.b16 %v4218
        %v4360 = vunpack.c.l.b16 %v4219
        %v4361 = vunpack.c.h.b16 %v4219
        %v4362 = vunpack.c.l.b16 %v4220
        %v4363 = vunpack.c.h.b16 %v4220
        %v4364 = vunpack.c.l.b16 %v4221
        %v4365 = vunpack.c.h.b16 %v4221
        %v4366 = vunpack.c.l.b16 %v4222
        %v4367 = vunpack.c.h.b16 %v4222
        %v4368 = vunpack.c.l.b16 %v4223
        %v4369 = vunpack.c.h.b16 %v4223
        %v4370 = vunpack.c.l.b16 %v4224
        %v4371 = vunpack.c.h.b16 %v4224
        %v4372 = vunpack.c.l.b16 %v4225
        %v4373 = vunpack.c.h.b16 %v4225
        %v4374 = vunpack.c.l.b16 %v4226
        %v4375 = vunpack.c.h.b16 %v4226
        %v4376 = vunpack.c.l.b16 %v4227
        %v4377 = vunpack.c.h.b16 %v4227
        %v4378 = vunpack.c.l.b16 %v4228
        %v4379 = vunpack.c.h.b16 %v4228
        %v4380 = vunpack.c.l.b16 %v4229
        %v4381 = vunpack.c.h.b16 %v4229
        %v4382 = vunpack.c.l.b16 %v4230
        %v4383 = vunpack.c.h.b16 %v4230
        %v4384 = vunpack.c.l.b16 %v4231
        %v4385 = vunpack.c.h.b16 %v4231
        %v4386 = vunpack.c.l.b16 %v4232
        %v4387 = vunpack.c.h.b16 %v4232
        %v4388 = vunpack.c.l.b16 %v4233
        %v4389 = vunpack.c.h.b16 %v4233
        %v4390 = vunpack.c.l.b16 %v4234
        %v4391 = vunpack.c.h.b16 %v4234
        %v4392 = vunpack.c.l.b16 %v4235
        %v4393 = vunpack.c.h.b16 %v4235
        %v4394 = vunpack.c.l.b16 %v4236
        %v4395 = vunpack.c.h.b16 %v4236
        %v4396 = vunpack.c.l.b16 %v4237
        %v4397 = vunpack.c.h.b16 %v4237
        %v4398 = vunpack.c.l.b16 %v4238
        %v4399 = vunpack.c.h.b16 %v4238
        %v4400 = vunpack.c.l.b16 %v4239
        %v4401 = vunpack.c.h.b16 %v4239
        %v4402 = vunpack.c.l.b16 %v4240
        %v4403 = vunpack.c.h.b16 %v4240
        %v4404 = vunpack.c.l.b16 %v4241
        %v4405 = vunpack.c.h.b16 %v4241
        %v4406 = vunpack.c.l.b16 %v4242
        %v4407 = vunpack.c.h.b16 %v4242
        %v4408 = vunpack.c.l.b16 %v4243
        %v4409 = vunpack.c.h.b16 %v4243
        %v4410 = vunpack.c.l.b16 %v4244
        %v4411 = vunpack.c.h.b16 %v4244
        %v4412 = vunpack.c.l.b16 %v4245
        %v4413 = vunpack.c.h.b16 %v4245
        %v4414 = vunpack.c.l.b16 %v4246
        %v4415 = vunpack.c.h.b16 %v4246
        %v4416 = vunpack.c.l.b16 %v4247
        %v4417 = vunpack.c.h.b16 %v4247
        %v4418 = vunpack.c.l.b16 %v4248
        %v4419 = vunpack.c.h.b16 %v4248
        %v4420 = vunpack.c.l.b16 %v4249
        %v4421 = vunpack.c.h.b16 %v4249
        %v4422 = vunpack.c.l.b16 %v4250
        %v4423 = vunpack.c.h.b16 %v4250
        %v4424 = vunpack.c.l.b16 %v4251
        %v4425 = vunpack.c.h.b16 %v4251
        %v4426 = vunpack.c.l.b16 %v4252
        %v4427 = vunpack.c.h.b16 %v4252
        %v4428 = vunpack.c.l.b16 %v4253
        %v4429 = vunpack.c.h.b16 %v4253
        %v4430 = vunpack.c.l.b16 %v4254
        %v4431 = vunpack.c.h.b16 %v4254
        %v4432 = vunpack.c.l.b16 %v4255
        %v4433 = vunpack.c.h.b16 %v4255
        %v4434 = vunpack.c.l.b16 %v4256
        %v4435 = vunpack.c.h.b16 %v4256
        %v4436 = vunpack.c.l.b16 %v4257
        %v4437 = vunpack.c.h.b16 %v4257
        %v4438 = vunpack.c.l.b16 %v4258
        %v4439 = vunpack.c.h.b16 %v4258
        %v4440 = vunpack.c.l.b16 %v4259
        %v4441 = vunpack.c.h.b16 %v4259
        %v4442 = vunpack.c.l.b16 %v4260
        %v4443 = vunpack.c.h.b16 %v4260
        %v4444 = vunpack.c.l.b16 %v4261
        %v4445 = vunpack.c.h.b16 %v4261
        %v4446 = vunpack.c.l.b16 %v4262
        %v4447 = vunpack.c.h.b16 %v4262
        %v4448 = vunpack.c.l.b16 %v4263
        %v4449 = vunpack.c.h.b16 %v4263
        %v4450 = vunpack.c.l.b16 %v4264
        %v4451 = vunpack.c.h.b16 %v4264
        %v4452 = vunpack.c.l.b16 %v4265
        %v4453 = vunpack.c.h.b16 %v4265
        %v4454 = vunpack.c.l.b16 %v4266
        %v4455 = vunpack.c.h.b16 %v4266
        %v4456 = vunpack.c.l.b16 %v4267
        %v4457 = vunpack.c.h.b16 %v4267
        %v4458 = vunpack.c.l.b16 %v4268
        %v4459 = vunpack.c.h.b16 %v4268
        %v4460 = vunpack.c.l.b16 %v4269
        %v4461 = vunpack.c.h.b16 %v4269
        %v4462 = vunpack.c.l.b16 %v4270
        %v4463 = vunpack.c.h.b16 %v4270
        %v4464 = vunpack.c.l.b16 %v4271
        %v4465 = vunpack.c.h.b16 %v4271
        %v4466 = vunpack.c.l.b16 %v4272
        %v4467 = vunpack.c.h.b16 %v4272
        %v4468 = vunpack.c.l.b16 %v4273
        %v4469 = vunpack.c.h.b16 %v4273
        %v4470 = vunpack.c.l.b16 %v4274
        %v4471 = vunpack.c.h.b16 %v4274
        %v4472 = vunpack.c.l.b16 %v4275
        %v4473 = vunpack.c.h.b16 %v4275
        %v4474 = vunpack.c.l.b16 %v4276
        %v4475 = vunpack.c.h.b16 %v4276
        %v4476 = vunpack.c.l.b16 %v4277
        %v4477 = vunpack.c.h.b16 %v4277
        %v4478 = vunpack.c.l.b16 %v4278
        %v4479 = vunpack.c.h.b16 %v4278
        %v4480 = vunpack.c.l.b16 %v4279
        %v4481 = vunpack.c.h.b16 %v4279
        %v4482 = vunpack.c.l.b16 %v4280
        %v4483 = vunpack.c.h.b16 %v4280
        %v4484 = vunpack.c.l.b16 %v4281
        %v4485 = vunpack.c.h.b16 %v4281
        %v4486 = vpack.c.b16 %v4360, %v4358
        %v4487 = vpack.c.b16 %v4361, %v4359
        %v4488 = vpack.c.b16 %v4364, %v4362
        %v4489 = vpack.c.b16 %v4365, %v4363
        %v4490 = vpack.c.b16 %v4368, %v4366
        %v4491 = vpack.c.b16 %v4369, %v4367
        %v4492 = vpack.c.b16 %v4372, %v4370
        %v4493 = vpack.c.b16 %v4373, %v4371
        %v4494 = vpack.c.b16 %v4376, %v4374
        %v4495 = vpack.c.b16 %v4377, %v4375
        %v4496 = vpack.c.b16 %v4380, %v4378
        %v4497 = vpack.c.b16 %v4381, %v4379
        %v4498 = vpack.c.b16 %v4384, %v4382
        %v4499 = vpack.c.b16 %v4385, %v4383
        %v4500 = vpack.c.b16 %v4388, %v4386
        %v4501 = vpack.c.b16 %v4389, %v4387
        %v4502 = vpack.c.b16 %v4392, %v4390
        %v4503 = vpack.c.b16 %v4393, %v4391
        %v4504 = vpack.c.b16 %v4396, %v4394
        %v4505 = vpack.c.b16 %v4397, %v4395
        %v4506 = vpack.c.b16 %v4400, %v4398
        %v4507 = vpack.c.b16 %v4401, %v4399
        %v4508 = vpack.c.b16 %v4404, %v4402
        %v4509 = vpack.c.b16 %v4405, %v4403
        %v4510 = vpack.c.b16 %v4408, %v4406
        %v4511 = vpack.c.b16 %v4409, %v4407
        %v4512 = vpack.c.b16 %v4412, %v4410
        %v4513 = vpack.c.b16 %v4413, %v4411
        %v4514 = vpack.c.b16 %v4416, %v4414
        %v4515 = vpack.c.b16 %v4417, %v4415
        %v4516 = vpack.c.b16 %v4420, %v4418
        %v4517 = vpack.c.b16 %v4421, %v4419
        %v4518 = vpack.c.b16 %v4424, %v4422
        %v4519 = vpack.c.b16 %v4425, %v4423
        %v4520 = vpack.c.b16 %v4428, %v4426
        %v4521 = vpack.c.b16 %v4429, %v4427
        %v4522 = vpack.c.b16 %v4432, %v4430
        %v4523 = vpack.c.b16 %v4433, %v4431
        %v4524 = vpack.c.b16 %v4436, %v4434
        %v4525 = vpack.c.b16 %v4437, %v4435
        %v4526 = vpack.c.b16 %v4440, %v4438
        %v4527 = vpack.c.b16 %v4441, %v4439
        %v4528 = vpack.c.b16 %v4444, %v4442
        %v4529 = vpack.c.b16 %v4445, %v4443
        %v4530 = vpack.c.b16 %v4448, %v4446
        %v4531 = vpack.c.b16 %v4449, %v4447
        %v4532 = vpack.c.b16 %v4452, %v4450
        %v4533 = vpack.c.b16 %v4453, %v4451
        %v4534 = vpack.c.b16 %v4456, %v4454
        %v4535 = vpack.c.b16 %v4457, %v4455
        %v4536 = vpack.c.b16 %v4460, %v4458
        %v4537 = vpack.c.b16 %v4461, %v4459
        %v4538 = vpack.c.b16 %v4464, %v4462
        %v4539 = vpack.c.b16 %v4465, %v4463
        %v4540 = vpack.c.b16 %v4468, %v4466
        %v4541 = vpack.c.b16 %v4469, %v4467
        %v4542 = vpack.c.b16 %v4472, %v4470
        %v4543 = vpack.c.b16 %v4473, %v4471
        %v4544 = vpack.c.b16 %v4476, %v4474
        %v4545 = vpack.c.b16 %v4477, %v4475
        %v4546 = vpack.c.b16 %v4480, %v4478
        %v4547 = vpack.c.b16 %v4481, %v4479
        %v4548 = vpack.c.b16 %v4484, %v4482
        %v4549 = vpack.c.b16 %v4485, %v4483
        %4614 = vmatprep.subr.bf16.mxu0 %v4501
        %4615 = vmatpush1.bf16.msra.mxu0 %v4500
        %4616 = vmatprep.subr.bf16.mxu0 %v4499
        %4617 = vmatpush1.bf16.msra.mxu0 %v4498
        %4618 = vmatprep.subr.bf16.mxu0 %v4497
        %4619 = vmatpush1.bf16.msra.mxu0 %v4496
        %4620 = vmatprep.subr.bf16.mxu0 %v4495
        %4621 = vmatpush1.bf16.msra.mxu0 %v4494
        %4622 = vmatprep.subr.bf16.mxu0 %v4493
        %4623 = vmatpush1.bf16.msra.mxu0 %v4492
        %4624 = vmatprep.subr.bf16.mxu0 %v4491
        %4625 = vmatpush1.bf16.msra.mxu0 %v4490
        %4626 = vmatprep.subr.bf16.mxu0 %v4489
        %4627 = vmatpush1.bf16.msra.mxu0 %v4488
        %4628 = vmatprep.subr.bf16.mxu0 %v4487
        %4629 = vmatpush1.bf16.msra.mxu0 %v4486
        %4630 = vmatprep.subr.bf16.mxu0 %v4517
        %4631 = vmatpush2.bf16.msra.mxu0 %v4516
        %4632 = vmatprep.subr.bf16.mxu0 %v4515
        %4633 = vmatpush2.bf16.msra.mxu0 %v4514
        %4634 = vmatprep.subr.bf16.mxu0 %v4513
        %4635 = vmatpush2.bf16.msra.mxu0 %v4512
        %4636 = vmatprep.subr.bf16.mxu0 %v4511
        %4637 = vmatpush2.bf16.msra.mxu0 %v4510
        %4638 = vmatprep.subr.bf16.mxu0 %v4509
        %4639 = vmatpush2.bf16.msra.mxu0 %v4508
        %4640 = vmatprep.subr.bf16.mxu0 %v4507
        %4641 = vmatpush2.bf16.msra.mxu0 %v4506
        %4642 = vmatprep.subr.bf16.mxu0 %v4505
        %4643 = vmatpush2.bf16.msra.mxu0 %v4504
        %4644 = vmatprep.subr.bf16.mxu0 %v4503
        %4645 = vmatpush2.bf16.msra.mxu0 %v4502
        %4646 = vmatprep.mubr.bf16.mxu0 %v4187
        %4647 = vmatmul.mubr.bf16.gmra.mxu0 %v4186
        %v4648 = vpop.f32.mrf.mxu0
        %v4649 = vadd.f32 %v4287, %v4648
        %v4650 = vpop.f32.mrf.mxu0
        %v4651 = vadd.f32 %v4291, %v4650
        %v4652 = vpop.f32.mrf.mxu0
        %v4653 = vadd.f32 %v4287, %v4652
        %v4654 = vpop.f32.mrf.mxu0
        %v4655 = vadd.f32 %v4291, %v4654
        %4656 = vmatprep.mubr.bf16.mxu0 %v4191
        %4657 = vmatmul.mubr.bf16.gmra.mxu0 %v4190
        %v4658 = vpop.f32.mrf.mxu0
        %v4659 = vadd.f32 %v4287, %v4658
        %v4660 = vpop.f32.mrf.mxu0
        %v4661 = vadd.f32 %v4291, %v4660
        %v4662 = vpop.f32.mrf.mxu0
        %v4663 = vadd.f32 %v4287, %v4662
        %v4664 = vpop.f32.mrf.mxu0
        %v4665 = vadd.f32 %v4291, %v4664
        %4666 = vmatprep.mubr.bf16.mxu0 %v4195
        %4667 = vmatmul.mubr.bf16.gmra.mxu0 %v4194
        %v4668 = vpop.f32.mrf.mxu0
        %v4669 = vadd.f32 %v4287, %v4668
        %v4670 = vpop.f32.mrf.mxu0
        %v4671 = vadd.f32 %v4291, %v4670
        %v4672 = vpop.f32.mrf.mxu0
        %v4673 = vadd.f32 %v4287, %v4672
        %v4674 = vpop.f32.mrf.mxu0
        %v4675 = vadd.f32 %v4291, %v4674
        %4676 = vmatprep.mubr.bf16.mxu0 %v4199
        %4677 = vmatmul.mubr.bf16.gmra.mxu0 %v4198
        %v4678 = vpop.f32.mrf.mxu0
        %v4679 = vadd.f32 %v4287, %v4678
        %v4680 = vpop.f32.mrf.mxu0
        %v4681 = vadd.f32 %v4291, %v4680
        %v4682 = vpop.f32.mrf.mxu0
        %v4683 = vadd.f32 %v4287, %v4682
        %v4684 = vpop.f32.mrf.mxu0
        %v4685 = vadd.f32 %v4291, %v4684
        %4686 = vmatprep.mubr.bf16.mxu0 %v4203
        %4687 = vmatmul.mubr.bf16.gmra.mxu0 %v4202
        %v4688 = vpop.f32.mrf.mxu0
        %v4689 = vadd.f32 %v4287, %v4688
        %v4690 = vpop.f32.mrf.mxu0
        %v4691 = vadd.f32 %v4291, %v4690
        %v4692 = vpop.f32.mrf.mxu0
        %v4693 = vadd.f32 %v4287, %v4692
        %v4694 = vpop.f32.mrf.mxu0
        %v4695 = vadd.f32 %v4291, %v4694
        %4696 = vmatprep.mubr.bf16.mxu0 %v4207
        %4697 = vmatmul.mubr.bf16.gmra.mxu0 %v4206
        %v4698 = vpop.f32.mrf.mxu0
        %v4699 = vadd.f32 %v4287, %v4698
        %v4700 = vpop.f32.mrf.mxu0
        %v4701 = vadd.f32 %v4291, %v4700
        %v4702 = vpop.f32.mrf.mxu0
        %v4703 = vadd.f32 %v4287, %v4702
        %v4704 = vpop.f32.mrf.mxu0
        %v4705 = vadd.f32 %v4291, %v4704
        %4706 = vmatprep.mubr.bf16.mxu0 %v4211
        %4707 = vmatmul.mubr.bf16.gmra.mxu0 %v4210
        %v4708 = vpop.f32.mrf.mxu0
        %v4709 = vadd.f32 %v4287, %v4708
        %v4710 = vpop.f32.mrf.mxu0
        %v4711 = vadd.f32 %v4291, %v4710
        %v4712 = vpop.f32.mrf.mxu0
        %v4713 = vadd.f32 %v4287, %v4712
        %v4714 = vpop.f32.mrf.mxu0
        %v4715 = vadd.f32 %v4291, %v4714
        %4716 = vmatprep.mubr.bf16.mxu0 %v4215
        %4717 = vmatmul.mubr.bf16.gmra.mxu0 %v4214
        %v4718 = vpop.f32.mrf.mxu0
        %v4719 = vadd.f32 %v4287, %v4718
        %v4720 = vpop.f32.mrf.mxu0
        %v4721 = vadd.f32 %v4291, %v4720
        %v4722 = vpop.f32.mrf.mxu0
        %v4723 = vadd.f32 %v4287, %v4722
        %v4724 = vpop.f32.mrf.mxu0
        %v4725 = vadd.f32 %v4291, %v4724
        %4726 = vdwg.mxu0
        %4727 = vmatprep.subr.bf16.mxu0 %v4533
        %4728 = vmatpush1.bf16.msra.mxu0 %v4532
        %4729 = vmatprep.subr.bf16.mxu0 %v4531
        %4730 = vmatpush1.bf16.msra.mxu0 %v4530
        %4731 = vmatprep.subr.bf16.mxu0 %v4529
        %4732 = vmatpush1.bf16.msra.mxu0 %v4528
        %4733 = vmatprep.subr.bf16.mxu0 %v4527
        %4734 = vmatpush1.bf16.msra.mxu0 %v4526
        %4735 = vmatprep.subr.bf16.mxu0 %v4525
        %4736 = vmatpush1.bf16.msra.mxu0 %v4524
        %4737 = vmatprep.subr.bf16.mxu0 %v4523
        %4738 = vmatpush1.bf16.msra.mxu0 %v4522
        %4739 = vmatprep.subr.bf16.mxu0 %v4521
        %4740 = vmatpush1.bf16.msra.mxu0 %v4520
        %4741 = vmatprep.subr.bf16.mxu0 %v4519
        %4742 = vmatpush1.bf16.msra.mxu0 %v4518
        %4743 = vmatprep.subr.bf16.mxu0 %v4549
        %4744 = vmatpush2.bf16.msra.mxu0 %v4548
        %4745 = vmatprep.subr.bf16.mxu0 %v4547
        %4746 = vmatpush2.bf16.msra.mxu0 %v4546
        %4747 = vmatprep.subr.bf16.mxu0 %v4545
        %4748 = vmatpush2.bf16.msra.mxu0 %v4544
        %4749 = vmatprep.subr.bf16.mxu0 %v4543
        %4750 = vmatpush2.bf16.msra.mxu0 %v4542
        %4751 = vmatprep.subr.bf16.mxu0 %v4541
        %4752 = vmatpush2.bf16.msra.mxu0 %v4540
        %4753 = vmatprep.subr.bf16.mxu0 %v4539
        %4754 = vmatpush2.bf16.msra.mxu0 %v4538
        %4755 = vmatprep.subr.bf16.mxu0 %v4537
        %4756 = vmatpush2.bf16.msra.mxu0 %v4536
        %4757 = vmatprep.subr.bf16.mxu0 %v4535
        %4758 = vmatpush2.bf16.msra.mxu0 %v4534
        %4759 = vmatprep.mubr.bf16.mxu0 %v4189
        %4760 = vmatmul.mubr.bf16.gmra.mxu0 %v4188
        %v4761 = vpop.f32.mrf.mxu0
        %v4762 = vadd.f32 %v4649, %v4761
        %v4763 = vpop.f32.mrf.mxu0
        %v4764 = vadd.f32 %v4651, %v4763
        %v4765 = vpop.f32.mrf.mxu0
        %v4766 = vadd.f32 %v4653, %v4765
        %v4767 = vpop.f32.mrf.mxu0
        %v4768 = vadd.f32 %v4655, %v4767
        %4769 = vmatprep.mubr.bf16.mxu0 %v4193
        %4770 = vmatmul.mubr.bf16.gmra.mxu0 %v4192
        %v4771 = vpop.f32.mrf.mxu0
        %v4772 = vadd.f32 %v4659, %v4771
        %v4773 = vpop.f32.mrf.mxu0
        %v4774 = vadd.f32 %v4661, %v4773
        %v4775 = vpop.f32.mrf.mxu0
        %v4776 = vadd.f32 %v4663, %v4775
        %v4777 = vpop.f32.mrf.mxu0
        %v4778 = vadd.f32 %v4665, %v4777
        %4779 = vmatprep.mubr.bf16.mxu0 %v4197
        %4780 = vmatmul.mubr.bf16.gmra.mxu0 %v4196
        %v4781 = vpop.f32.mrf.mxu0
        %v4782 = vadd.f32 %v4669, %v4781
        %v4783 = vpop.f32.mrf.mxu0
        %v4784 = vadd.f32 %v4671, %v4783
        %v4785 = vpop.f32.mrf.mxu0
        %v4786 = vadd.f32 %v4673, %v4785
        %v4787 = vpop.f32.mrf.mxu0
        %v4788 = vadd.f32 %v4675, %v4787
        %4789 = vmatprep.mubr.bf16.mxu0 %v4201
        %4790 = vmatmul.mubr.bf16.gmra.mxu0 %v4200
        %v4791 = vpop.f32.mrf.mxu0
        %v4792 = vadd.f32 %v4679, %v4791
        %v4793 = vpop.f32.mrf.mxu0
        %v4794 = vadd.f32 %v4681, %v4793
        %v4795 = vpop.f32.mrf.mxu0
        %v4796 = vadd.f32 %v4683, %v4795
        %v4797 = vpop.f32.mrf.mxu0
        %v4798 = vadd.f32 %v4685, %v4797
        %4799 = vmatprep.mubr.bf16.mxu0 %v4205
        %4800 = vmatmul.mubr.bf16.gmra.mxu0 %v4204
        %v4801 = vpop.f32.mrf.mxu0
        %v4802 = vadd.f32 %v4689, %v4801
        %v4803 = vpop.f32.mrf.mxu0
        %v4804 = vadd.f32 %v4691, %v4803
        %v4805 = vpop.f32.mrf.mxu0
        %v4806 = vadd.f32 %v4693, %v4805
        %v4807 = vpop.f32.mrf.mxu0
        %v4808 = vadd.f32 %v4695, %v4807
        %4809 = vmatprep.mubr.bf16.mxu0 %v4209
        %4810 = vmatmul.mubr.bf16.gmra.mxu0 %v4208
        %v4811 = vpop.f32.mrf.mxu0
        %v4812 = vadd.f32 %v4699, %v4811
        %v4813 = vpop.f32.mrf.mxu0
        %v4814 = vadd.f32 %v4701, %v4813
        %v4815 = vpop.f32.mrf.mxu0
        %v4816 = vadd.f32 %v4703, %v4815
        %v4817 = vpop.f32.mrf.mxu0
        %v4818 = vadd.f32 %v4705, %v4817
        %4819 = vmatprep.mubr.bf16.mxu0 %v4213
        %4820 = vmatmul.mubr.bf16.gmra.mxu0 %v4212
        %v4821 = vpop.f32.mrf.mxu0
        %v4822 = vadd.f32 %v4709, %v4821
        %v4823 = vpop.f32.mrf.mxu0
        %v4824 = vadd.f32 %v4711, %v4823
        %v4825 = vpop.f32.mrf.mxu0
        %v4826 = vadd.f32 %v4713, %v4825
        %v4827 = vpop.f32.mrf.mxu0
        %v4828 = vadd.f32 %v4715, %v4827
        %4829 = vmatprep.mubr.bf16.mxu0 %v4217
        %4830 = vmatmul.mubr.bf16.gmra.mxu0 %v4216
        %v4831 = vpop.f32.mrf.mxu0
        %v4832 = vadd.f32 %v4719, %v4831
        %v4833 = vpop.f32.mrf.mxu0
        %v4834 = vadd.f32 %v4721, %v4833
        %v4835 = vpop.f32.mrf.mxu0
        %v4836 = vadd.f32 %v4723, %v4835
        %v4837 = vpop.f32.mrf.mxu0
        %v4838 = vadd.f32 %v4725, %v4837
        %4839 = vdwg.mxu0
        %v4840 = vadd.f32 %v4762, %v3442
        %v4841 = vadd.f32 %v4764, %v3443
        %v4842 = vadd.f32 %v4766, %v3444
        %v4843 = vadd.f32 %v4768, %v3445
        %v4844 = vadd.f32 %v4772, %v3446
        %v4845 = vadd.f32 %v4774, %v3447
        %v4846 = vadd.f32 %v4776, %v3448
        %v4847 = vadd.f32 %v4778, %v3449
        %v4848 = vadd.f32 %v4782, %v3450
        %v4849 = vadd.f32 %v4784, %v3451
        %v4850 = vadd.f32 %v4786, %v3452
        %v4851 = vadd.f32 %v4788, %v3453
        %v4852 = vadd.f32 %v4792, %v3454
        %v4853 = vadd.f32 %v4794, %v3455
        %v4854 = vadd.f32 %v4796, %v3456
        %v4855 = vadd.f32 %v4798, %v3457
        %v4856 = vadd.f32 %v4802, %v3458
        %v4857 = vadd.f32 %v4804, %v3459
        %v4858 = vadd.f32 %v4806, %v3460
        %v4859 = vadd.f32 %v4808, %v3461
        %v4860 = vadd.f32 %v4812, %v3462
        %v4861 = vadd.f32 %v4814, %v3463
        %v4862 = vadd.f32 %v4816, %v3464
        %v4863 = vadd.f32 %v4818, %v3465
        %v4864 = vadd.f32 %v4822, %v3466
        %v4865 = vadd.f32 %v4824, %v3467
        %v4866 = vadd.f32 %v4826, %v3468
        %v4867 = vadd.f32 %v4828, %v3469
        %v4868 = vadd.f32 %v4832, %v3470
        %v4869 = vadd.f32 %v4834, %v3471
        %v4870 = vadd.f32 %v4836, %v3472
        %v4871 = vadd.f32 %v4838, %v3473
        %4872 = vst [vmem:[%s372] sm:$0xff] %v4840
        %4873 = vst [vmem:[%s372 + $0x8] sm:$0xff] %v4841
        %4874 = vst [vmem:[%s372 + $0x10] sm:$0xff] %v4842
        %4875 = vst [vmem:[%s372 + $0x18] sm:$0xff] %v4843
        %4876 = vst [vmem:[%s372 + $0x20] sm:$0xff] %v4844
        %4877 = vst [vmem:[%s372 + $0x28] sm:$0xff] %v4845
        %4878 = vst [vmem:[%s372 + $0x30] sm:$0xff] %v4846
        %4879 = vst [vmem:[%s372 + $0x38] sm:$0xff] %v4847
        %4880 = vst [vmem:[%s372 + $0x40] sm:$0xff] %v4848
        %4881 = vst [vmem:[%s372 + $0x48] sm:$0xff] %v4849
        %4882 = vst [vmem:[%s372 + $0x50] sm:$0xff] %v4850
        %4883 = vst [vmem:[%s372 + $0x58] sm:$0xff] %v4851
        %4884 = vst [vmem:[%s372 + $0x60] sm:$0xff] %v4852
        %4885 = vst [vmem:[%s372 + $0x68] sm:$0xff] %v4853
        %4886 = vst [vmem:[%s372 + $0x70] sm:$0xff] %v4854
        %4887 = vst [vmem:[%s372 + $0x78] sm:$0xff] %v4855
        %4888 = vst [vmem:[%s372 + $0x80] sm:$0xff] %v4856
        %4889 = vst [vmem:[%s372 + $0x88] sm:$0xff] %v4857
        %4890 = vst [vmem:[%s372 + $0x90] sm:$0xff] %v4858
        %4891 = vst [vmem:[%s372 + $0x98] sm:$0xff] %v4859
        %4892 = vst [vmem:[%s372 + $0xa0] sm:$0xff] %v4860
        %4893 = vst [vmem:[%s372 + $0xa8] sm:$0xff] %v4861
        %4894 = vst [vmem:[%s372 + $0xb0] sm:$0xff] %v4862
        %4895 = vst [vmem:[%s372 + $0xb8] sm:$0xff] %v4863
        %4896 = vst [vmem:[%s372 + $0xc0] sm:$0xff] %v4864
        %4897 = vst [vmem:[%s372 + $0xc8] sm:$0xff] %v4865
        %4898 = vst [vmem:[%s372 + $0xd0] sm:$0xff] %v4866
        %4899 = vst [vmem:[%s372 + $0xd8] sm:$0xff] %v4867
        %4900 = vst [vmem:[%s372 + $0xe0] sm:$0xff] %v4868
        %4901 = vst [vmem:[%s372 + $0xe8] sm:$0xff] %v4869
        %4902 = vst [vmem:[%s372 + $0xf0] sm:$0xff] %v4870
        %4903 = vst [vmem:[%s372 + $0xf8] sm:$0xff] %v4871
        %s4904 = sand.u32 %s227, 1
        %s4905 = scalar_lea.sflag [#allocation6], %s4904
        %s4906 = sand.u32 %s227, 1
        %s4907 = smul.addr %s4906, 256
        %s4908 = scalar_lea.vmem [#allocation10], %s4907
        // Predicated region
        $region69: #{encoder_forward.1} parent=55 // pred_check
          %p4909 = pneg %p237
        $region70: #{encoder_forward.1} parent=55 // pred_check_branch
          %4911 = sbr.rel (%p4909) target = $region72
        $region71: #{encoder_forward.1} parent=55 // pred_region
          %s4912 = smul.u32 16, %s25
          %s4914 = ssub.s32 4096, 4096
          %4915 = vsyncadd %s4905, %s4914
          %s4916 = smul.addr %s4912, 2
          %s4917 = smul.addr %s4916, 128
          %s4918 = scalar_lea.hbm %s9, %s4917
          %s4919 = sshll.u32 %s4908, 4
          %s4920 = int_to_ptr.vmem [resolvable:$true] %s4919
          %4925 = dma.vmem_to_hbm [thread:$0]  %s4920, 4096, %s4918, %s4905, 256, 256, 16
        $region72: #{encoder_forward.1} parent=55 // pred_fallthru
          _
      $region56: #{encoder_forward.1} parent=5 // pred_fallthru
        _
      %p4926 = scmp.le.s32.totalorder 2, %s20
      // Predicated region
      $region73: #{encoder_forward.1} parent=5 // pred_check
        %p4927 = pneg %p4926
      $region74: #{encoder_forward.1} parent=5 // pred_check_branch
        %4929 = sbr.rel (%p4927) target = $region76
      $region75: #{encoder_forward.1} parent=5 // pred_region
        %s4930 = ssub.s32 %s20, 2
        // Predicated region
        $region77: #{encoder_forward.1} parent=75 // pred_check
          %p4931 = pneg %p243
        $region78: #{encoder_forward.1} parent=75 // pred_check_branch
          %4933 = sbr.rel (%p4931) target = $region80
        $region79: #{encoder_forward.1} parent=75 // pred_region
          %s4934 = sand.u32 %s228, 1
          %s4935 = scalar_lea.sflag [#allocation6], %s4934
          %s4936 = sand.u32 %s228, 1
          %s4937 = smul.addr %s4936, 256
          %s4938 = scalar_lea.vmem [#allocation10], %s4937
          %4939 = dma.done %s4935, 4096
        $region80: #{encoder_forward.1} parent=75 // pred_fallthru
          _
      $region76: #{encoder_forward.1} parent=5 // pred_fallthru
        _
    $region6: #{encoder_forward.1} parent=1 // loop_footer
      %s24 = sadd.s32 1, %s20
    $region7: #{encoder_forward.1} parent=1 // loop_footer_branch
      %19 = sbr.rel target = $region3
    $region8: #{encoder_forward.1} parent=1 // loop_exit
      _
    %4940 = vsyncpa [#allocation5], 1
    %s4941 = scalar_lea.sflag [#allocation5], 1
    %4942 = vsyncpa %s4941, 1
    %4943 = vsyncpa [#allocation8], 1
    %4944 = vsyncpa [#allocation6], 1
    %s4945 = scalar_lea.sflag [#allocation6], 1
    %4946 = vsyncpa %s4945, 1

</llo_original>
